<compile_context>
chip_gen: v7x
topology: tpu7x:2x2x1
jax: 0.10.0
libtpu: 0.0.40
codegen_flags: <defaults>
</compile_context>

<pallas_src>
import functools
import math

import jax
import jax.numpy as jnp
from jax import lax
from jax.experimental import pallas as pl
from jax.experimental.pallas import tpu as pltpu


# ---------------------------------------------------------------------------
# In-kernel helpers (traced inside the single pallas_call)
# ---------------------------------------------------------------------------
def _conv(x, ea_t, w, vec, heads, out_ch):
    """PyG TransformerConv (concat=True, root_weight=True, beta=False, eval)
    on the dense all-pairs graph; returns the [N, heads*out_ch] value.

    w   : [F_in, 4*hc + heads]  packed  Wq*s | Wk | Wv | Wskip | (Wq @ we_h)*s
    vec : [9, hc]   rows: bq*s, bk, bv, bskip, we, gn_w, gn_b, gn_mean_scale,
                          (bq . we_h)*s in the first `heads` lanes
    with s = 1/sqrt(out_ch) folded into the q side at pack time.
    """
    hc = heads * out_ch

    # One lane-dense MXU matmul for q | k | v | skip | q.we.
    proj = jnp.dot(x, w, preferred_element_type=jnp.float32)        # [N, 4*hc + H]
    q    = proj[:, 0 * hc:1 * hc] + vec[0:1]                        # pre-scaled by 1/sqrt(C)
    k    = proj[:, 1 * hc:2 * hc] + vec[1:2]
    v    = proj[:, 2 * hc:3 * hc] + vec[2:3]
    skip = proj[:, 3 * hc:4 * hc] + vec[3:4]
    qe   = proj[:, 4 * hc:4 * hc + heads] + vec[8:9, :heads]        # [N, H], pre-scaled
    we   = vec[4:5]                                                 # [1, hc] lin_edge weight

    # Head-major [H, N, C] operands from static lane slices (no 3-D transpose).
    def split_heads(a):
        return jnp.stack([a[:, h * out_ch:(h + 1) * out_ch] for h in range(heads)], axis=0)

    q3, k3, v3 = split_heads(q), split_heads(k), split_heads(v)
    we3 = jnp.stack([we[:, h * out_ch:(h + 1) * out_ch] for h in range(heads)], axis=0)  # [H,1,C]
    qe3 = jnp.stack([qe[:, h:h + 1] for h in range(heads)], axis=0)                      # [H,N,1]

    # logits[h,t,s] = (q_h[t].k_h[s] + (q_h[t].we_h) * ea[s,t]) / sqrt(C)  (scale pre-folded)
    qk = jnp.einsum('hqc,hkc->hqk', q3, k3, preferred_element_type=jnp.float32)
    logits = qk + qe3 * ea_t[None, :, :]

    # softmax over source nodes (all-pairs graph => every source attends)
    m = jnp.max(logits, axis=-1, keepdims=True)
    p = jnp.exp(logits - m)
    alpha = p * pl.reciprocal(jnp.sum(p, axis=-1, keepdims=True), approx=True)
    # TODO(synk): attention dropout (p=0.5) is training-only; eval-mode identity here.

    # out[h,t] = sum_s alpha[h,t,s] * (v_h[s] + ea[s,t] * we_h)
    out3 = jnp.einsum('hqk,hkc->hqc', alpha, v3, preferred_element_type=jnp.float32)
    out3 = out3 + jnp.sum(alpha * ea_t[None, :, :], axis=-1, keepdims=True) * we3
    out = jnp.concatenate([out3[h] for h in range(heads)], axis=1)   # [N, hc] lane concat
    return out + skip


def _graph_norm(h, vec, eps):
    """PyG GraphNorm over a single graph (batch=None); params are slab rows 5..7."""
    gamma, beta, mean_scale = vec[5:6], vec[6:7], vec[7:8]
    mean = jnp.mean(h, axis=0, keepdims=True)
    out = h - mean_scale * mean
    var = jnp.mean(out * out, axis=0, keepdims=True)
    return gamma * out * lax.rsqrt(var + eps) + beta                # rsqrt -> EUP slot


def _fused_kernel(x_ref, w1_ref, vec1_ref, w2_ref, vec2_ref, o_ref, *,
                  heads1, c1, heads2, c2, eps):
    x = x_ref[0]                         # [N, F] node features (= this graph's lr)
    ea_t = jnp.transpose(x)              # ea_t[t, s] = lr[s, t] (edge s -> t attribute)

    # ---- layer 1: TransformerConv -> GraphNorm (stays in registers) ----
    h1 = _conv(x, ea_t, w1_ref[...], vec1_ref[...], heads1, c1)
    h1 = _graph_norm(h1, vec1_ref[...], eps)

    # ---- layer 2: TransformerConv -> GraphNorm -> per-row L2 norm ----
    h2 = _conv(h1, ea_t, w2_ref[...], vec2_ref[...], heads2, c2)
    h2 = _graph_norm(h2, vec2_ref[...], eps)
    h2 = h2 * lax.rsqrt(jnp.sum(h2 * h2, axis=1, keepdims=True) + 1e-12)
    o_ref[0] = h2                        # single unmasked full-width store


# ---------------------------------------------------------------------------
# Wrapper: host-side parameter packing + one pallas_call over a batch grid
# ---------------------------------------------------------------------------
def pack_params(params, num_heads):
    """Pack per layer: [F_in, 4*hc + heads] projection weight (q side pre-scaled
    by 1/sqrt(C), plus folded q.we columns) and a [9, hc] vector slab."""
    def pack(conv_p, gn_p, heads, out_ch):
        s = 1.0 / math.sqrt(out_ch)
        hc = heads * out_ch
        wq, we, bq = conv_p["wq"], conv_p["we"], conv_p["bq"]
        qe_cols = jnp.stack(
            [wq[:, h * out_ch:(h + 1) * out_ch] @ we[0, h * out_ch:(h + 1) * out_ch]
             for h in range(heads)], axis=1) * s                    # [F_in, heads]
        w = jnp.concatenate([wq * s, conv_p["wk"], conv_p["wv"], conv_p["wskip"], qe_cols],
                            axis=1)                                  # [F_in, 4*hc + heads]
        qe_bias = jnp.stack(
            [jnp.sum(bq[0, h * out_ch:(h + 1) * out_ch] * we[0, h * out_ch:(h + 1) * out_ch])
             for h in range(heads)]) * s                             # [heads]
        qe_row = jnp.zeros((1, hc), jnp.float32).at[0, :heads].set(qe_bias)
        vec = jnp.concatenate([bq * s, conv_p["bk"], conv_p["bv"], conv_p["bskip"],
                               we, gn_p["weight"], gn_p["bias"], gn_p["mean_scale"],
                               qe_row], axis=0)                      # [9, hc]
        return w, vec

    w1, vec1 = pack(params["conv1"], params["bn1"], num_heads, params["c1_out"])
    w2, vec2 = pack(params["conv2"], params["bn2"], 2 * num_heads, params["c2_out"])
    return dict(w1=w1, vec1=vec1, w2=w2, vec2=vec2,
                heads1=num_heads, c1=params["c1_out"],
                heads2=2 * num_heads, c2=params["c2_out"])


def lr_feature_upscaler_forward(packed, lr_x):
    """lr_x: [N, N] (single graph) or [B, N, N] (batch of graphs, one grid step each)."""
    single = lr_x.ndim == 2
    if single:
        lr_x = lr_x[None]
    b, n, f = lr_x.shape
    heads1, c1 = packed["heads1"], packed["c1"]
    heads2, c2 = packed["heads2"], packed["c2"]
    hc2 = heads2 * c2
    w1, vec1, w2, vec2 = packed["w1"], packed["vec1"], packed["w2"], packed["vec2"]

    kernel = functools.partial(_fused_kernel, heads1=heads1, c1=c1,
                               heads2=heads2, c2=c2, eps=1e-5)

    def whole(arr):  # weights stay resident across the batch grid (constant index_map)
        return pl.BlockSpec(arr.shape, lambda i: (0,) * arr.ndim)

    out = pl.pallas_call(
        kernel,
        out_shape=jax.ShapeDtypeStruct((b, n, hc2), jnp.float32),
        grid=(b,),
        in_specs=[pl.BlockSpec((1, n, f), lambda i: (i, 0, 0)),
                  whole(w1), whole(vec1), whole(w2), whole(vec2)],
        out_specs=pl.BlockSpec((1, n, hc2), lambda i: (i, 0, 0)),
        compiler_params=pltpu.CompilerParams(
            dimension_semantics=("parallel",)),   # v7x: shard graphs across both TCs
    )(lr_x, w1, vec1, w2, vec2)
    return out[0] if single else out


# ---------------------------------------------------------------------------
# Deterministic parameter init (shapes from the module __init__)
# ---------------------------------------------------------------------------
def _init_linear(key, fan_in, fan_out, bias=True):
    kw, kb = jax.random.split(key)
    w = jax.random.normal(kw, (fan_in, fan_out), jnp.float32) / math.sqrt(fan_in)
    b = (0.1 * jax.random.normal(kb, (1, fan_out), jnp.float32)) if bias else None
    return w, b


def _init_conv(key, f_in, heads, out_ch):
    ks = jax.random.split(key, 5)
    wq, bq = _init_linear(ks[0], f_in, heads * out_ch)
    wk, bk = _init_linear(ks[1], f_in, heads * out_ch)
    wv, bv = _init_linear(ks[2], f_in, heads * out_ch)
    we, _ = _init_linear(ks[3], 1, heads * out_ch, bias=False)   # lin_edge has no bias
    wsk, bsk = _init_linear(ks[4], f_in, heads * out_ch)
    return dict(wq=wq, bq=bq, wk=wk, bk=bk, wv=wv, bv=bv,
                we=we, wskip=wsk, bskip=bsk)


def _init_graph_norm(key, dim):
    kw, kb, km = jax.random.split(key, 3)
    return dict(
        weight=1.0 + 0.1 * jax.random.normal(kw, (1, dim), jnp.float32),
        bias=0.1 * jax.random.normal(kb, (1, dim), jnp.float32),
        mean_scale=1.0 + 0.1 * jax.random.normal(km, (1, dim), jnp.float32),
    )


def init_params(key, lr_dim, hr, num_heads):
    c1_out = hr // num_heads
    c2_out = (2 * hr) // (2 * num_heads)
    k1, k2, k3, k4 = jax.random.split(key, 4)
    return dict(
        conv1=_init_conv(k1, lr_dim, num_heads, c1_out),
        bn1=_init_graph_norm(k2, hr),
        conv2=_init_conv(k3, hr, 2 * num_heads, c2_out),
        bn2=_init_graph_norm(k4, 2 * hr),
        c1_out=c1_out, c2_out=c2_out,
    )


# ---------------------------------------------------------------------------
# Pure-JAX reference (same math, exact softmax, unpacked params)
# ---------------------------------------------------------------------------
def _ref_conv(x, ea_t, p, heads, out_ch):
    q = x @ p["wq"] + p["bq"]
    k = x @ p["wk"] + p["bk"]
    v = x @ p["wv"] + p["bv"]
    skip = x @ p["wskip"] + p["bskip"]
    outs = []
    for h in range(heads):
        sl = slice(h * out_ch, (h + 1) * out_ch)
        qh, kh, vh, weh = q[:, sl], k[:, sl], v[:, sl], p["we"][:, sl]
        logits = (qh @ kh.T + (qh * weh).sum(axis=1, keepdims=True) * ea_t) / math.sqrt(out_ch)
        logits = logits - logits.max(axis=1, keepdims=True)
        pexp = jnp.exp(logits)
        alpha = pexp / pexp.sum(axis=1, keepdims=True)
        out_h = alpha @ vh + (alpha * ea_t).sum(axis=1, keepdims=True) * weh
        outs.append(out_h)
    return jnp.concatenate(outs, axis=1) + skip


def _ref_gn(x, p, l2_rows, eps=1e-5):
    mean = x.mean(axis=0, keepdims=True)
    out = x - p["mean_scale"] * mean
    var = (out * out).mean(axis=0, keepdims=True)
    out = p["weight"] * out * lax.rsqrt(var + eps) + p["bias"]
    if l2_rows:
        out = out * lax.rsqrt((out * out).sum(axis=1, keepdims=True) + 1e-12)
    return out


def reference_forward(params, lr_x, num_heads):
    ea_t = lr_x.T
    h1 = _ref_conv(lr_x, ea_t, params["conv1"], num_heads, params["c1_out"])
    h1 = _ref_gn(h1, params["bn1"], False)
    h2 = _ref_conv(h1, ea_t, params["conv2"], 2 * num_heads, params["c2_out"])
    return _ref_gn(h2, params["bn2"], True)


# ---------------------------------------------------------------------------
if __name__ == "__main__":
    LR, HR, HEADS, BATCH = 16, 32, 4, 3        # N = 16 graph nodes, 16 features each
    key = jax.random.PRNGKey(0)
    kp, kx = jax.random.split(key)
    params = init_params(kp, LR, HR, HEADS)
    x = jax.random.normal(kx, (BATCH, LR, LR), jnp.float32)   # batch of `lr` matrices

    packed = pack_params(params, HEADS)        # host-side packing, once
    out = lr_feature_upscaler_forward(packed, x)
    out = jax.block_until_ready(out)

    assert out.shape == (BATCH, LR, 2 * HR), out.shape
    for b in range(BATCH):
        ref = reference_forward(params, x[b], HEADS)
        err = float(jnp.max(jnp.abs(out[b] - ref)))
        assert err < 5e-3, f"mismatch vs JAX reference (graph {b}): {err}"
    print("KERNEL_OK")
</pallas_src>

<mosaic_0001>
module attributes {stable_mosaic.version = 11 : i64} {
  func.func @_fused_kernel(%arg0: i32, %arg1: memref<1x16x16xf32, #tpu.memory_space<vmem>>, %arg2: memref<16x132xf32, #tpu.memory_space<vmem>>, %arg3: memref<9x32xf32, #tpu.memory_space<vmem>>, %arg4: memref<32x264xf32, #tpu.memory_space<vmem>>, %arg5: memref<9x64xf32, #tpu.memory_space<vmem>>, %arg6: memref<1x16x64xf32, #tpu.memory_space<vmem>>) attributes {dimension_semantics = [#tpu.dimension_semantics<parallel>], iteration_bounds = array<i64: 3>, scalar_prefetch = 0 : i64, scratch_operands = 0 : i64, tpu.core_type = #tpu.core_type<tc>, window_params = [{transform_indices = @transform_0, window_bounds = array<i64: 1, 16, 16>}, {pipeline_mode = #tpu.pipeline_mode<synchronous>, transform_indices = @transform_1, window_bounds = array<i64: 16, 132>}, {pipeline_mode = #tpu.pipeline_mode<synchronous>, transform_indices = @transform_2, window_bounds = array<i64: 9, 32>}, {pipeline_mode = #tpu.pipeline_mode<synchronous>, transform_indices = @transform_3, window_bounds = array<i64: 32, 264>}, {pipeline_mode = #tpu.pipeline_mode<synchronous>, transform_indices = @transform_4, window_bounds = array<i64: 9, 64>}, {transform_indices = @transform_5, window_bounds = array<i64: 1, 16, 64>}]} {
    %c0 = arith.constant 0 : index
    %c0_0 = arith.constant 0 : index
    %c0_1 = arith.constant 0 : index
    %0 = vector.load %arg1[%c0, %c0_0, %c0_1] : memref<1x16x16xf32, #tpu.memory_space<vmem>>, vector<1x16x16xf32>
    %1 = vector.shape_cast %0 : vector<1x16x16xf32> to vector<16x16xf32>
    %2 = tpu.transpose %1, [1, 0] : vector<16x16xf32> -> vector<16x16xf32>
    %c0_2 = arith.constant 0 : index
    %c0_3 = arith.constant 0 : index
    %3 = vector.load %arg2[%c0_2, %c0_3] : memref<16x132xf32, #tpu.memory_space<vmem>>, vector<16x132xf32>
    %c0_4 = arith.constant 0 : index
    %c0_5 = arith.constant 0 : index
    %4 = vector.load %arg3[%c0_4, %c0_5] : memref<9x32xf32, #tpu.memory_space<vmem>>, vector<9x32xf32>
    %cst = arith.constant dense<0.000000e+00> : vector<16x132xf32>
    %5 = tpu.matmul %1, %3, %cst {dimension_numbers = #tpu.dot_dimension_numbers<[1], [0], [0], [1], [0, 0, 1, 1], [], []>} : vector<16x16xf32>, vector<16x132xf32>, vector<16x132xf32> -> vector<16x132xf32>
    %6 = vector.extract_strided_slice %5 {offsets = [0, 0], sizes = [16, 32], strides = [1, 1]} : vector<16x132xf32> to vector<16x32xf32>
    %7 = vector.extract_strided_slice %4 {offsets = [0, 0], sizes = [1, 32], strides = [1, 1]} : vector<9x32xf32> to vector<1x32xf32>
    %8 = vector.broadcast %7 : vector<1x32xf32> to vector<16x32xf32>
    %9 = arith.addf %6, %8 : vector<16x32xf32>
    %10 = vector.extract_strided_slice %5 {offsets = [0, 32], sizes = [16, 32], strides = [1, 1]} : vector<16x132xf32> to vector<16x32xf32>
    %11 = vector.extract_strided_slice %4 {offsets = [1, 0], sizes = [1, 32], strides = [1, 1]} : vector<9x32xf32> to vector<1x32xf32>
    %12 = vector.broadcast %11 : vector<1x32xf32> to vector<16x32xf32>
    %13 = arith.addf %10, %12 : vector<16x32xf32>
    %14 = vector.extract_strided_slice %5 {offsets = [0, 64], sizes = [16, 32], strides = [1, 1]} : vector<16x132xf32> to vector<16x32xf32>
    %15 = vector.extract_strided_slice %4 {offsets = [2, 0], sizes = [1, 32], strides = [1, 1]} : vector<9x32xf32> to vector<1x32xf32>
    %16 = vector.broadcast %15 : vector<1x32xf32> to vector<16x32xf32>
    %17 = arith.addf %14, %16 : vector<16x32xf32>
    %18 = vector.extract_strided_slice %5 {offsets = [0, 96], sizes = [16, 32], strides = [1, 1]} : vector<16x132xf32> to vector<16x32xf32>
    %19 = vector.extract_strided_slice %4 {offsets = [3, 0], sizes = [1, 32], strides = [1, 1]} : vector<9x32xf32> to vector<1x32xf32>
    %20 = vector.broadcast %19 : vector<1x32xf32> to vector<16x32xf32>
    %21 = arith.addf %18, %20 : vector<16x32xf32>
    %22 = vector.extract_strided_slice %5 {offsets = [0, 128], sizes = [16, 4], strides = [1, 1]} : vector<16x132xf32> to vector<16x4xf32>
    %23 = vector.extract_strided_slice %4 {offsets = [8, 0], sizes = [1, 4], strides = [1, 1]} : vector<9x32xf32> to vector<1x4xf32>
    %24 = vector.broadcast %23 : vector<1x4xf32> to vector<16x4xf32>
    %25 = arith.addf %22, %24 : vector<16x4xf32>
    %26 = vector.extract_strided_slice %4 {offsets = [4, 0], sizes = [1, 32], strides = [1, 1]} : vector<9x32xf32> to vector<1x32xf32>
    %27 = vector.extract_strided_slice %9 {offsets = [0, 0], sizes = [16, 8], strides = [1, 1]} : vector<16x32xf32> to vector<16x8xf32>
    %28 = vector.extract_strided_slice %9 {offsets = [0, 8], sizes = [16, 8], strides = [1, 1]} : vector<16x32xf32> to vector<16x8xf32>
    %29 = vector.extract_strided_slice %9 {offsets = [0, 16], sizes = [16, 8], strides = [1, 1]} : vector<16x32xf32> to vector<16x8xf32>
    %30 = vector.extract_strided_slice %9 {offsets = [0, 24], sizes = [16, 8], strides = [1, 1]} : vector<16x32xf32> to vector<16x8xf32>
    %31 = vector.shape_cast %27 : vector<16x8xf32> to vector<1x16x8xf32>
    %32 = vector.shape_cast %28 : vector<16x8xf32> to vector<1x16x8xf32>
    %33 = vector.shape_cast %29 : vector<16x8xf32> to vector<1x16x8xf32>
    %34 = vector.shape_cast %30 : vector<16x8xf32> to vector<1x16x8xf32>
    %35 = tpu.concatenate %31, %32, %33, %34 in 0 : vector<1x16x8xf32>, vector<1x16x8xf32>, vector<1x16x8xf32>, vector<1x16x8xf32> -> vector<4x16x8xf32>
    %36 = vector.extract_strided_slice %13 {offsets = [0, 0], sizes = [16, 8], strides = [1, 1]} : vector<16x32xf32> to vector<16x8xf32>
    %37 = vector.extract_strided_slice %13 {offsets = [0, 8], sizes = [16, 8], strides = [1, 1]} : vector<16x32xf32> to vector<16x8xf32>
    %38 = vector.extract_strided_slice %13 {offsets = [0, 16], sizes = [16, 8], strides = [1, 1]} : vector<16x32xf32> to vector<16x8xf32>
    %39 = vector.extract_strided_slice %13 {offsets = [0, 24], sizes = [16, 8], strides = [1, 1]} : vector<16x32xf32> to vector<16x8xf32>
    %40 = vector.shape_cast %36 : vector<16x8xf32> to vector<1x16x8xf32>
    %41 = vector.shape_cast %37 : vector<16x8xf32> to vector<1x16x8xf32>
    %42 = vector.shape_cast %38 : vector<16x8xf32> to vector<1x16x8xf32>
    %43 = vector.shape_cast %39 : vector<16x8xf32> to vector<1x16x8xf32>
    %44 = tpu.concatenate %40, %41, %42, %43 in 0 : vector<1x16x8xf32>, vector<1x16x8xf32>, vector<1x16x8xf32>, vector<1x16x8xf32> -> vector<4x16x8xf32>
    %45 = vector.extract_strided_slice %17 {offsets = [0, 0], sizes = [16, 8], strides = [1, 1]} : vector<16x32xf32> to vector<16x8xf32>
    %46 = vector.extract_strided_slice %17 {offsets = [0, 8], sizes = [16, 8], strides = [1, 1]} : vector<16x32xf32> to vector<16x8xf32>
    %47 = vector.extract_strided_slice %17 {offsets = [0, 16], sizes = [16, 8], strides = [1, 1]} : vector<16x32xf32> to vector<16x8xf32>
    %48 = vector.extract_strided_slice %17 {offsets = [0, 24], sizes = [16, 8], strides = [1, 1]} : vector<16x32xf32> to vector<16x8xf32>
    %49 = vector.shape_cast %45 : vector<16x8xf32> to vector<1x16x8xf32>
    %50 = vector.shape_cast %46 : vector<16x8xf32> to vector<1x16x8xf32>
    %51 = vector.shape_cast %47 : vector<16x8xf32> to vector<1x16x8xf32>
    %52 = vector.shape_cast %48 : vector<16x8xf32> to vector<1x16x8xf32>
    %53 = tpu.concatenate %49, %50, %51, %52 in 0 : vector<1x16x8xf32>, vector<1x16x8xf32>, vector<1x16x8xf32>, vector<1x16x8xf32> -> vector<4x16x8xf32>
    %54 = vector.extract_strided_slice %26 {offsets = [0, 0], sizes = [1, 8], strides = [1, 1]} : vector<1x32xf32> to vector<1x8xf32>
    %55 = vector.extract_strided_slice %26 {offsets = [0, 8], sizes = [1, 8], strides = [1, 1]} : vector<1x32xf32> to vector<1x8xf32>
    %56 = vector.extract_strided_slice %26 {offsets = [0, 16], sizes = [1, 8], strides = [1, 1]} : vector<1x32xf32> to vector<1x8xf32>
    %57 = vector.extract_strided_slice %26 {offsets = [0, 24], sizes = [1, 8], strides = [1, 1]} : vector<1x32xf32> to vector<1x8xf32>
    %58 = vector.shape_cast %54 : vector<1x8xf32> to vector<1x1x8xf32>
    %59 = vector.shape_cast %55 : vector<1x8xf32> to vector<1x1x8xf32>
    %60 = vector.shape_cast %56 : vector<1x8xf32> to vector<1x1x8xf32>
    %61 = vector.shape_cast %57 : vector<1x8xf32> to vector<1x1x8xf32>
    %62 = tpu.concatenate %58, %59, %60, %61 in 0 : vector<1x1x8xf32>, vector<1x1x8xf32>, vector<1x1x8xf32>, vector<1x1x8xf32> -> vector<4x1x8xf32>
    %63 = vector.extract_strided_slice %25 {offsets = [0, 0], sizes = [16, 1], strides = [1, 1]} : vector<16x4xf32> to vector<16x1xf32>
    %64 = vector.extract_strided_slice %25 {offsets = [0, 1], sizes = [16, 1], strides = [1, 1]} : vector<16x4xf32> to vector<16x1xf32>
    %65 = vector.extract_strided_slice %25 {offsets = [0, 2], sizes = [16, 1], strides = [1, 1]} : vector<16x4xf32> to vector<16x1xf32>
    %66 = vector.extract_strided_slice %25 {offsets = [0, 3], sizes = [16, 1], strides = [1, 1]} : vector<16x4xf32> to vector<16x1xf32>
    %67 = vector.shape_cast %63 : vector<16x1xf32> to vector<1x16x1xf32>
    %68 = vector.shape_cast %64 : vector<16x1xf32> to vector<1x16x1xf32>
    %69 = vector.shape_cast %65 : vector<16x1xf32> to vector<1x16x1xf32>
    %70 = vector.shape_cast %66 : vector<16x1xf32> to vector<1x16x1xf32>
    %71 = tpu.concatenate %67, %68, %69, %70 in 0 : vector<1x16x1xf32>, vector<1x16x1xf32>, vector<1x16x1xf32>, vector<1x16x1xf32> -> vector<4x16x1xf32>
    "tpu.trace_start"() <{level = 10 : i32, message = "hqc,hkc->hqk"}> : () -> ()
    %cst_6 = arith.constant dense<0.000000e+00> : vector<4x16x16xf32>
    %72 = tpu.matmul %35, %44, %cst_6 {dimension_numbers = #tpu.dot_dimension_numbers<[2], [2], [1], [1], [0, 0, 0, 1, 1, 1], [0], [0]>} : vector<4x16x8xf32>, vector<4x16x8xf32>, vector<4x16x16xf32> -> vector<4x16x16xf32>
    "tpu.trace_stop"() : () -> ()
    %73 = vector.shape_cast %2 : vector<16x16xf32> to vector<1x16x16xf32>
    %74 = vector.broadcast %71 : vector<4x16x1xf32> to vector<4x16x16xf32>
    %75 = vector.broadcast %73 : vector<1x16x16xf32> to vector<4x16x16xf32>
    %76 = arith.mulf %74, %75 : vector<4x16x16xf32>
    %77 = arith.addf %72, %76 : vector<4x16x16xf32>
    %cst_7 = arith.constant dense<0xFF800000> : vector<4x16xf32>
    %78 = vector.multi_reduction <maximumf>, %77, %cst_7 [2] : vector<4x16x16xf32> to vector<4x16xf32>
    %79 = vector.shape_cast %78 : vector<4x16xf32> to vector<4x16x1xf32>
    %80 = vector.broadcast %79 : vector<4x16x1xf32> to vector<4x16x16xf32>
    %81 = arith.subf %77, %80 : vector<4x16x16xf32>
    %82 = math.exp %81 : vector<4x16x16xf32>
    %cst_8 = arith.constant dense<0.000000e+00> : vector<4x16xf32>
    %83 = vector.multi_reduction <add>, %82, %cst_8 [2] : vector<4x16x16xf32> to vector<4x16xf32>
    %84 = vector.shape_cast %83 : vector<4x16xf32> to vector<4x16x1xf32>
    %85 = tpu.reciprocal %84 {approx = true} : vector<4x16x1xf32> -> vector<4x16x1xf32>
    %86 = vector.broadcast %85 : vector<4x16x1xf32> to vector<4x16x16xf32>
    %87 = arith.mulf %82, %86 : vector<4x16x16xf32>
    "tpu.trace_start"() <{level = 10 : i32, message = "hqk,hkc->hqc"}> : () -> ()
    %cst_9 = arith.constant dense<0.000000e+00> : vector<4x16x8xf32>
    %88 = tpu.matmul %87, %53, %cst_9 {dimension_numbers = #tpu.dot_dimension_numbers<[2], [1], [1], [2], [0, 0, 0, 1, 1, 2], [0], [0]>} : vector<4x16x16xf32>, vector<4x16x8xf32>, vector<4x16x8xf32> -> vector<4x16x8xf32>
    "tpu.trace_stop"() : () -> ()
    %89 = vector.shape_cast %2 : vector<16x16xf32> to vector<1x16x16xf32>
    %90 = vector.broadcast %89 : vector<1x16x16xf32> to vector<4x16x16xf32>
    %91 = arith.mulf %87, %90 : vector<4x16x16xf32>
    %cst_10 = arith.constant dense<0.000000e+00> : vector<4x16xf32>
    %92 = vector.multi_reduction <add>, %91, %cst_10 [2] : vector<4x16x16xf32> to vector<4x16xf32>
    %93 = vector.shape_cast %92 : vector<4x16xf32> to vector<4x16x1xf32>
    %94 = vector.broadcast %93 : vector<4x16x1xf32> to vector<4x16x8xf32>
    %95 = vector.broadcast %62 : vector<4x1x8xf32> to vector<4x16x8xf32>
    %96 = arith.mulf %94, %95 : vector<4x16x8xf32>
    %97 = arith.addf %88, %96 : vector<4x16x8xf32>
    %98 = vector.extract_strided_slice %97 {offsets = [0, 0, 0], sizes = [1, 16, 8], strides = [1, 1, 1]} : vector<4x16x8xf32> to vector<1x16x8xf32>
    %99 = vector.shape_cast %98 : vector<1x16x8xf32> to vector<16x8xf32>
    %100 = vector.extract_strided_slice %97 {offsets = [1, 0, 0], sizes = [1, 16, 8], strides = [1, 1, 1]} : vector<4x16x8xf32> to vector<1x16x8xf32>
    %101 = vector.shape_cast %100 : vector<1x16x8xf32> to vector<16x8xf32>
    %102 = vector.extract_strided_slice %97 {offsets = [2, 0, 0], sizes = [1, 16, 8], strides = [1, 1, 1]} : vector<4x16x8xf32> to vector<1x16x8xf32>
    %103 = vector.shape_cast %102 : vector<1x16x8xf32> to vector<16x8xf32>
    %104 = vector.extract_strided_slice %97 {offsets = [3, 0, 0], sizes = [1, 16, 8], strides = [1, 1, 1]} : vector<4x16x8xf32> to vector<1x16x8xf32>
    %105 = vector.shape_cast %104 : vector<1x16x8xf32> to vector<16x8xf32>
    %106 = tpu.concatenate %99, %101, %103, %105 in 1 : vector<16x8xf32>, vector<16x8xf32>, vector<16x8xf32>, vector<16x8xf32> -> vector<16x32xf32>
    %107 = arith.addf %106, %21 : vector<16x32xf32>
    %c0_11 = arith.constant 0 : index
    %c0_12 = arith.constant 0 : index
    %108 = vector.load %arg3[%c0_11, %c0_12] : memref<9x32xf32, #tpu.memory_space<vmem>>, vector<9x32xf32>
    %109 = vector.extract_strided_slice %108 {offsets = [5, 0], sizes = [1, 32], strides = [1, 1]} : vector<9x32xf32> to vector<1x32xf32>
    %110 = vector.extract_strided_slice %108 {offsets = [6, 0], sizes = [1, 32], strides = [1, 1]} : vector<9x32xf32> to vector<1x32xf32>
    %111 = vector.extract_strided_slice %108 {offsets = [7, 0], sizes = [1, 32], strides = [1, 1]} : vector<9x32xf32> to vector<1x32xf32>
    %cst_13 = arith.constant dense<0.000000e+00> : vector<32xf32>
    %112 = vector.multi_reduction <add>, %107, %cst_13 [0] : vector<16x32xf32> to vector<32xf32>
    %113 = vector.shape_cast %112 : vector<32xf32> to vector<1x32xf32>
    %cst_14 = arith.constant 1.600000e+01 : f32
    %114 = vector.broadcast %cst_14 : f32 to vector<1x32xf32>
    %115 = arith.divf %113, %114 : vector<1x32xf32>
    %116 = arith.mulf %111, %115 : vector<1x32xf32>
    %117 = vector.broadcast %116 : vector<1x32xf32> to vector<16x32xf32>
    %118 = arith.subf %107, %117 : vector<16x32xf32>
    %119 = arith.mulf %118, %118 : vector<16x32xf32>
    %cst_15 = arith.constant dense<0.000000e+00> : vector<32xf32>
    %120 = vector.multi_reduction <add>, %119, %cst_15 [0] : vector<16x32xf32> to vector<32xf32>
    %121 = vector.shape_cast %120 : vector<32xf32> to vector<1x32xf32>
    %cst_16 = arith.constant 1.600000e+01 : f32
    %122 = vector.broadcast %cst_16 : f32 to vector<1x32xf32>
    %123 = arith.divf %121, %122 : vector<1x32xf32>
    %124 = vector.broadcast %109 : vector<1x32xf32> to vector<16x32xf32>
    %125 = arith.mulf %124, %118 : vector<16x32xf32>
    %cst_17 = arith.constant 9.99999974E-6 : f32
    %126 = vector.broadcast %cst_17 : f32 to vector<1x32xf32>
    %127 = arith.addf %123, %126 : vector<1x32xf32>
    %128 = math.rsqrt %127 : vector<1x32xf32>
    %129 = vector.broadcast %128 : vector<1x32xf32> to vector<16x32xf32>
    %130 = arith.mulf %125, %129 : vector<16x32xf32>
    %131 = vector.broadcast %110 : vector<1x32xf32> to vector<16x32xf32>
    %132 = arith.addf %130, %131 : vector<16x32xf32>
    %c0_18 = arith.constant 0 : index
    %c0_19 = arith.constant 0 : index
    %133 = vector.load %arg4[%c0_18, %c0_19] : memref<32x264xf32, #tpu.memory_space<vmem>>, vector<32x264xf32>
    %c0_20 = arith.constant 0 : index
    %c0_21 = arith.constant 0 : index
    %134 = vector.load %arg5[%c0_20, %c0_21] : memref<9x64xf32, #tpu.memory_space<vmem>>, vector<9x64xf32>
    %cst_22 = arith.constant dense<0.000000e+00> : vector<16x264xf32>
    %135 = tpu.matmul %132, %133, %cst_22 {dimension_numbers = #tpu.dot_dimension_numbers<[1], [0], [0], [1], [0, 0, 1, 1], [], []>} : vector<16x32xf32>, vector<32x264xf32>, vector<16x264xf32> -> vector<16x264xf32>
    %136 = vector.extract_strided_slice %135 {offsets = [0, 0], sizes = [16, 64], strides = [1, 1]} : vector<16x264xf32> to vector<16x64xf32>
    %137 = vector.extract_strided_slice %134 {offsets = [0, 0], sizes = [1, 64], strides = [1, 1]} : vector<9x64xf32> to vector<1x64xf32>
    %138 = vector.broadcast %137 : vector<1x64xf32> to vector<16x64xf32>
    %139 = arith.addf %136, %138 : vector<16x64xf32>
    %140 = vector.extract_strided_slice %135 {offsets = [0, 64], sizes = [16, 64], strides = [1, 1]} : vector<16x264xf32> to vector<16x64xf32>
    %141 = vector.extract_strided_slice %134 {offsets = [1, 0], sizes = [1, 64], strides = [1, 1]} : vector<9x64xf32> to vector<1x64xf32>
    %142 = vector.broadcast %141 : vector<1x64xf32> to vector<16x64xf32>
    %143 = arith.addf %140, %142 : vector<16x64xf32>
    %144 = vector.extract_strided_slice %135 {offsets = [0, 128], sizes = [16, 64], strides = [1, 1]} : vector<16x264xf32> to vector<16x64xf32>
    %145 = vector.extract_strided_slice %134 {offsets = [2, 0], sizes = [1, 64], strides = [1, 1]} : vector<9x64xf32> to vector<1x64xf32>
    %146 = vector.broadcast %145 : vector<1x64xf32> to vector<16x64xf32>
    %147 = arith.addf %144, %146 : vector<16x64xf32>
    %148 = vector.extract_strided_slice %135 {offsets = [0, 192], sizes = [16, 64], strides = [1, 1]} : vector<16x264xf32> to vector<16x64xf32>
    %149 = vector.extract_strided_slice %134 {offsets = [3, 0], sizes = [1, 64], strides = [1, 1]} : vector<9x64xf32> to vector<1x64xf32>
    %150 = vector.broadcast %149 : vector<1x64xf32> to vector<16x64xf32>
    %151 = arith.addf %148, %150 : vector<16x64xf32>
    %152 = vector.extract_strided_slice %135 {offsets = [0, 256], sizes = [16, 8], strides = [1, 1]} : vector<16x264xf32> to vector<16x8xf32>
    %153 = vector.extract_strided_slice %134 {offsets = [8, 0], sizes = [1, 8], strides = [1, 1]} : vector<9x64xf32> to vector<1x8xf32>
    %154 = vector.broadcast %153 : vector<1x8xf32> to vector<16x8xf32>
    %155 = arith.addf %152, %154 : vector<16x8xf32>
    %156 = vector.extract_strided_slice %134 {offsets = [4, 0], sizes = [1, 64], strides = [1, 1]} : vector<9x64xf32> to vector<1x64xf32>
    %157 = vector.extract_strided_slice %139 {offsets = [0, 0], sizes = [16, 8], strides = [1, 1]} : vector<16x64xf32> to vector<16x8xf32>
    %158 = vector.extract_strided_slice %139 {offsets = [0, 8], sizes = [16, 8], strides = [1, 1]} : vector<16x64xf32> to vector<16x8xf32>
    %159 = vector.extract_strided_slice %139 {offsets = [0, 16], sizes = [16, 8], strides = [1, 1]} : vector<16x64xf32> to vector<16x8xf32>
    %160 = vector.extract_strided_slice %139 {offsets = [0, 24], sizes = [16, 8], strides = [1, 1]} : vector<16x64xf32> to vector<16x8xf32>
    %161 = vector.extract_strided_slice %139 {offsets = [0, 32], sizes = [16, 8], strides = [1, 1]} : vector<16x64xf32> to vector<16x8xf32>
    %162 = vector.extract_strided_slice %139 {offsets = [0, 40], sizes = [16, 8], strides = [1, 1]} : vector<16x64xf32> to vector<16x8xf32>
    %163 = vector.extract_strided_slice %139 {offsets = [0, 48], sizes = [16, 8], strides = [1, 1]} : vector<16x64xf32> to vector<16x8xf32>
    %164 = vector.extract_strided_slice %139 {offsets = [0, 56], sizes = [16, 8], strides = [1, 1]} : vector<16x64xf32> to vector<16x8xf32>
    %165 = vector.shape_cast %157 : vector<16x8xf32> to vector<1x16x8xf32>
    %166 = vector.shape_cast %158 : vector<16x8xf32> to vector<1x16x8xf32>
    %167 = vector.shape_cast %159 : vector<16x8xf32> to vector<1x16x8xf32>
    %168 = vector.shape_cast %160 : vector<16x8xf32> to vector<1x16x8xf32>
    %169 = vector.shape_cast %161 : vector<16x8xf32> to vector<1x16x8xf32>
    %170 = vector.shape_cast %162 : vector<16x8xf32> to vector<1x16x8xf32>
    %171 = vector.shape_cast %163 : vector<16x8xf32> to vector<1x16x8xf32>
    %172 = vector.shape_cast %164 : vector<16x8xf32> to vector<1x16x8xf32>
    %173 = tpu.concatenate %165, %166, %167, %168, %169, %170, %171, %172 in 0 : vector<1x16x8xf32>, vector<1x16x8xf32>, vector<1x16x8xf32>, vector<1x16x8xf32>, vector<1x16x8xf32>, vector<1x16x8xf32>, vector<1x16x8xf32>, vector<1x16x8xf32> -> vector<8x16x8xf32>
    %174 = vector.extract_strided_slice %143 {offsets = [0, 0], sizes = [16, 8], strides = [1, 1]} : vector<16x64xf32> to vector<16x8xf32>
    %175 = vector.extract_strided_slice %143 {offsets = [0, 8], sizes = [16, 8], strides = [1, 1]} : vector<16x64xf32> to vector<16x8xf32>
    %176 = vector.extract_strided_slice %143 {offsets = [0, 16], sizes = [16, 8], strides = [1, 1]} : vector<16x64xf32> to vector<16x8xf32>
    %177 = vector.extract_strided_slice %143 {offsets = [0, 24], sizes = [16, 8], strides = [1, 1]} : vector<16x64xf32> to vector<16x8xf32>
    %178 = vector.extract_strided_slice %143 {offsets = [0, 32], sizes = [16, 8], strides = [1, 1]} : vector<16x64xf32> to vector<16x8xf32>
    %179 = vector.extract_strided_slice %143 {offsets = [0, 40], sizes = [16, 8], strides = [1, 1]} : vector<16x64xf32> to vector<16x8xf32>
    %180 = vector.extract_strided_slice %143 {offsets = [0, 48], sizes = [16, 8], strides = [1, 1]} : vector<16x64xf32> to vector<16x8xf32>
    %181 = vector.extract_strided_slice %143 {offsets = [0, 56], sizes = [16, 8], strides = [1, 1]} : vector<16x64xf32> to vector<16x8xf32>
    %182 = vector.shape_cast %174 : vector<16x8xf32> to vector<1x16x8xf32>
    %183 = vector.shape_cast %175 : vector<16x8xf32> to vector<1x16x8xf32>
    %184 = vector.shape_cast %176 : vector<16x8xf32> to vector<1x16x8xf32>
    %185 = vector.shape_cast %177 : vector<16x8xf32> to vector<1x16x8xf32>
    %186 = vector.shape_cast %178 : vector<16x8xf32> to vector<1x16x8xf32>
    %187 = vector.shape_cast %179 : vector<16x8xf32> to vector<1x16x8xf32>
    %188 = vector.shape_cast %180 : vector<16x8xf32> to vector<1x16x8xf32>
    %189 = vector.shape_cast %181 : vector<16x8xf32> to vector<1x16x8xf32>
    %190 = tpu.concatenate %182, %183, %184, %185, %186, %187, %188, %189 in 0 : vector<1x16x8xf32>, vector<1x16x8xf32>, vector<1x16x8xf32>, vector<1x16x8xf32>, vector<1x16x8xf32>, vector<1x16x8xf32>, vector<1x16x8xf32>, vector<1x16x8xf32> -> vector<8x16x8xf32>
    %191 = vector.extract_strided_slice %147 {offsets = [0, 0], sizes = [16, 8], strides = [1, 1]} : vector<16x64xf32> to vector<16x8xf32>
    %192 = vector.extract_strided_slice %147 {offsets = [0, 8], sizes = [16, 8], strides = [1, 1]} : vector<16x64xf32> to vector<16x8xf32>
    %193 = vector.extract_strided_slice %147 {offsets = [0, 16], sizes = [16, 8], strides = [1, 1]} : vector<16x64xf32> to vector<16x8xf32>
    %194 = vector.extract_strided_slice %147 {offsets = [0, 24], sizes = [16, 8], strides = [1, 1]} : vector<16x64xf32> to vector<16x8xf32>
    %195 = vector.extract_strided_slice %147 {offsets = [0, 32], sizes = [16, 8], strides = [1, 1]} : vector<16x64xf32> to vector<16x8xf32>
    %196 = vector.extract_strided_slice %147 {offsets = [0, 40], sizes = [16, 8], strides = [1, 1]} : vector<16x64xf32> to vector<16x8xf32>
    %197 = vector.extract_strided_slice %147 {offsets = [0, 48], sizes = [16, 8], strides = [1, 1]} : vector<16x64xf32> to vector<16x8xf32>
    %198 = vector.extract_strided_slice %147 {offsets = [0, 56], sizes = [16, 8], strides = [1, 1]} : vector<16x64xf32> to vector<16x8xf32>
    %199 = vector.shape_cast %191 : vector<16x8xf32> to vector<1x16x8xf32>
    %200 = vector.shape_cast %192 : vector<16x8xf32> to vector<1x16x8xf32>
    %201 = vector.shape_cast %193 : vector<16x8xf32> to vector<1x16x8xf32>
    %202 = vector.shape_cast %194 : vector<16x8xf32> to vector<1x16x8xf32>
    %203 = vector.shape_cast %195 : vector<16x8xf32> to vector<1x16x8xf32>
    %204 = vector.shape_cast %196 : vector<16x8xf32> to vector<1x16x8xf32>
    %205 = vector.shape_cast %197 : vector<16x8xf32> to vector<1x16x8xf32>
    %206 = vector.shape_cast %198 : vector<16x8xf32> to vector<1x16x8xf32>
    %207 = tpu.concatenate %199, %200, %201, %202, %203, %204, %205, %206 in 0 : vector<1x16x8xf32>, vector<1x16x8xf32>, vector<1x16x8xf32>, vector<1x16x8xf32>, vector<1x16x8xf32>, vector<1x16x8xf32>, vector<1x16x8xf32>, vector<1x16x8xf32> -> vector<8x16x8xf32>
    %208 = vector.extract_strided_slice %156 {offsets = [0, 0], sizes = [1, 8], strides = [1, 1]} : vector<1x64xf32> to vector<1x8xf32>
    %209 = vector.extract_strided_slice %156 {offsets = [0, 8], sizes = [1, 8], strides = [1, 1]} : vector<1x64xf32> to vector<1x8xf32>
    %210 = vector.extract_strided_slice %156 {offsets = [0, 16], sizes = [1, 8], strides = [1, 1]} : vector<1x64xf32> to vector<1x8xf32>
    %211 = vector.extract_strided_slice %156 {offsets = [0, 24], sizes = [1, 8], strides = [1, 1]} : vector<1x64xf32> to vector<1x8xf32>
    %212 = vector.extract_strided_slice %156 {offsets = [0, 32], sizes = [1, 8], strides = [1, 1]} : vector<1x64xf32> to vector<1x8xf32>
    %213 = vector.extract_strided_slice %156 {offsets = [0, 40], sizes = [1, 8], strides = [1, 1]} : vector<1x64xf32> to vector<1x8xf32>
    %214 = vector.extract_strided_slice %156 {offsets = [0, 48], sizes = [1, 8], strides = [1, 1]} : vector<1x64xf32> to vector<1x8xf32>
    %215 = vector.extract_strided_slice %156 {offsets = [0, 56], sizes = [1, 8], strides = [1, 1]} : vector<1x64xf32> to vector<1x8xf32>
    %216 = vector.shape_cast %208 : vector<1x8xf32> to vector<1x1x8xf32>
    %217 = vector.shape_cast %209 : vector<1x8xf32> to vector<1x1x8xf32>
    %218 = vector.shape_cast %210 : vector<1x8xf32> to vector<1x1x8xf32>
    %219 = vector.shape_cast %211 : vector<1x8xf32> to vector<1x1x8xf32>
    %220 = vector.shape_cast %212 : vector<1x8xf32> to vector<1x1x8xf32>
    %221 = vector.shape_cast %213 : vector<1x8xf32> to vector<1x1x8xf32>
    %222 = vector.shape_cast %214 : vector<1x8xf32> to vector<1x1x8xf32>
    %223 = vector.shape_cast %215 : vector<1x8xf32> to vector<1x1x8xf32>
    %224 = tpu.concatenate %216, %217, %218, %219, %220, %221, %222, %223 in 0 : vector<1x1x8xf32>, vector<1x1x8xf32>, vector<1x1x8xf32>, vector<1x1x8xf32>, vector<1x1x8xf32>, vector<1x1x8xf32>, vector<1x1x8xf32>, vector<1x1x8xf32> -> vector<8x1x8xf32>
    %225 = vector.extract_strided_slice %155 {offsets = [0, 0], sizes = [16, 1], strides = [1, 1]} : vector<16x8xf32> to vector<16x1xf32>
    %226 = vector.extract_strided_slice %155 {offsets = [0, 1], sizes = [16, 1], strides = [1, 1]} : vector<16x8xf32> to vector<16x1xf32>
    %227 = vector.extract_strided_slice %155 {offsets = [0, 2], sizes = [16, 1], strides = [1, 1]} : vector<16x8xf32> to vector<16x1xf32>
    %228 = vector.extract_strided_slice %155 {offsets = [0, 3], sizes = [16, 1], strides = [1, 1]} : vector<16x8xf32> to vector<16x1xf32>
    %229 = vector.extract_strided_slice %155 {offsets = [0, 4], sizes = [16, 1], strides = [1, 1]} : vector<16x8xf32> to vector<16x1xf32>
    %230 = vector.extract_strided_slice %155 {offsets = [0, 5], sizes = [16, 1], strides = [1, 1]} : vector<16x8xf32> to vector<16x1xf32>
    %231 = vector.extract_strided_slice %155 {offsets = [0, 6], sizes = [16, 1], strides = [1, 1]} : vector<16x8xf32> to vector<16x1xf32>
    %232 = vector.extract_strided_slice %155 {offsets = [0, 7], sizes = [16, 1], strides = [1, 1]} : vector<16x8xf32> to vector<16x1xf32>
    %233 = vector.shape_cast %225 : vector<16x1xf32> to vector<1x16x1xf32>
    %234 = vector.shape_cast %226 : vector<16x1xf32> to vector<1x16x1xf32>
    %235 = vector.shape_cast %227 : vector<16x1xf32> to vector<1x16x1xf32>
    %236 = vector.shape_cast %228 : vector<16x1xf32> to vector<1x16x1xf32>
    %237 = vector.shape_cast %229 : vector<16x1xf32> to vector<1x16x1xf32>
    %238 = vector.shape_cast %230 : vector<16x1xf32> to vector<1x16x1xf32>
    %239 = vector.shape_cast %231 : vector<16x1xf32> to vector<1x16x1xf32>
    %240 = vector.shape_cast %232 : vector<16x1xf32> to vector<1x16x1xf32>
    %241 = tpu.concatenate %233, %234, %235, %236, %237, %238, %239, %240 in 0 : vector<1x16x1xf32>, vector<1x16x1xf32>, vector<1x16x1xf32>, vector<1x16x1xf32>, vector<1x16x1xf32>, vector<1x16x1xf32>, vector<1x16x1xf32>, vector<1x16x1xf32> -> vector<8x16x1xf32>
    "tpu.trace_start"() <{level = 10 : i32, message = "hqc,hkc->hqk"}> : () -> ()
    %cst_23 = arith.constant dense<0.000000e+00> : vector<8x16x16xf32>
    %242 = tpu.matmul %173, %190, %cst_23 {dimension_numbers = #tpu.dot_dimension_numbers<[2], [2], [1], [1], [0, 0, 0, 1, 1, 1], [0], [0]>} : vector<8x16x8xf32>, vector<8x16x8xf32>, vector<8x16x16xf32> -> vector<8x16x16xf32>
    "tpu.trace_stop"() : () -> ()
    %243 = vector.shape_cast %2 : vector<16x16xf32> to vector<1x16x16xf32>
    %244 = vector.broadcast %241 : vector<8x16x1xf32> to vector<8x16x16xf32>
    %245 = vector.broadcast %243 : vector<1x16x16xf32> to vector<8x16x16xf32>
    %246 = arith.mulf %244, %245 : vector<8x16x16xf32>
    %247 = arith.addf %242, %246 : vector<8x16x16xf32>
    %cst_24 = arith.constant dense<0xFF800000> : vector<8x16xf32>
    %248 = vector.multi_reduction <maximumf>, %247, %cst_24 [2] : vector<8x16x16xf32> to vector<8x16xf32>
    %249 = vector.shape_cast %248 : vector<8x16xf32> to vector<8x16x1xf32>
    %250 = vector.broadcast %249 : vector<8x16x1xf32> to vector<8x16x16xf32>
    %251 = arith.subf %247, %250 : vector<8x16x16xf32>
    %252 = math.exp %251 : vector<8x16x16xf32>
    %cst_25 = arith.constant dense<0.000000e+00> : vector<8x16xf32>
    %253 = vector.multi_reduction <add>, %252, %cst_25 [2] : vector<8x16x16xf32> to vector<8x16xf32>
    %254 = vector.shape_cast %253 : vector<8x16xf32> to vector<8x16x1xf32>
    %255 = tpu.reciprocal %254 {approx = true} : vector<8x16x1xf32> -> vector<8x16x1xf32>
    %256 = vector.broadcast %255 : vector<8x16x1xf32> to vector<8x16x16xf32>
    %257 = arith.mulf %252, %256 : vector<8x16x16xf32>
    "tpu.trace_start"() <{level = 10 : i32, message = "hqk,hkc->hqc"}> : () -> ()
    %cst_26 = arith.constant dense<0.000000e+00> : vector<8x16x8xf32>
    %258 = tpu.matmul %257, %207, %cst_26 {dimension_numbers = #tpu.dot_dimension_numbers<[2], [1], [1], [2], [0, 0, 0, 1, 1, 2], [0], [0]>} : vector<8x16x16xf32>, vector<8x16x8xf32>, vector<8x16x8xf32> -> vector<8x16x8xf32>
    "tpu.trace_stop"() : () -> ()
    %259 = vector.shape_cast %2 : vector<16x16xf32> to vector<1x16x16xf32>
    %260 = vector.broadcast %259 : vector<1x16x16xf32> to vector<8x16x16xf32>
    %261 = arith.mulf %257, %260 : vector<8x16x16xf32>
    %cst_27 = arith.constant dense<0.000000e+00> : vector<8x16xf32>
    %262 = vector.multi_reduction <add>, %261, %cst_27 [2] : vector<8x16x16xf32> to vector<8x16xf32>
    %263 = vector.shape_cast %262 : vector<8x16xf32> to vector<8x16x1xf32>
    %264 = vector.broadcast %263 : vector<8x16x1xf32> to vector<8x16x8xf32>
    %265 = vector.broadcast %224 : vector<8x1x8xf32> to vector<8x16x8xf32>
    %266 = arith.mulf %264, %265 : vector<8x16x8xf32>
    %267 = arith.addf %258, %266 : vector<8x16x8xf32>
    %268 = vector.extract_strided_slice %267 {offsets = [0, 0, 0], sizes = [1, 16, 8], strides = [1, 1, 1]} : vector<8x16x8xf32> to vector<1x16x8xf32>
    %269 = vector.shape_cast %268 : vector<1x16x8xf32> to vector<16x8xf32>
    %270 = vector.extract_strided_slice %267 {offsets = [1, 0, 0], sizes = [1, 16, 8], strides = [1, 1, 1]} : vector<8x16x8xf32> to vector<1x16x8xf32>
    %271 = vector.shape_cast %270 : vector<1x16x8xf32> to vector<16x8xf32>
    %272 = vector.extract_strided_slice %267 {offsets = [2, 0, 0], sizes = [1, 16, 8], strides = [1, 1, 1]} : vector<8x16x8xf32> to vector<1x16x8xf32>
    %273 = vector.shape_cast %272 : vector<1x16x8xf32> to vector<16x8xf32>
    %274 = vector.extract_strided_slice %267 {offsets = [3, 0, 0], sizes = [1, 16, 8], strides = [1, 1, 1]} : vector<8x16x8xf32> to vector<1x16x8xf32>
    %275 = vector.shape_cast %274 : vector<1x16x8xf32> to vector<16x8xf32>
    %276 = vector.extract_strided_slice %267 {offsets = [4, 0, 0], sizes = [1, 16, 8], strides = [1, 1, 1]} : vector<8x16x8xf32> to vector<1x16x8xf32>
    %277 = vector.shape_cast %276 : vector<1x16x8xf32> to vector<16x8xf32>
    %278 = vector.extract_strided_slice %267 {offsets = [5, 0, 0], sizes = [1, 16, 8], strides = [1, 1, 1]} : vector<8x16x8xf32> to vector<1x16x8xf32>
    %279 = vector.shape_cast %278 : vector<1x16x8xf32> to vector<16x8xf32>
    %280 = vector.extract_strided_slice %267 {offsets = [6, 0, 0], sizes = [1, 16, 8], strides = [1, 1, 1]} : vector<8x16x8xf32> to vector<1x16x8xf32>
    %281 = vector.shape_cast %280 : vector<1x16x8xf32> to vector<16x8xf32>
    %282 = vector.extract_strided_slice %267 {offsets = [7, 0, 0], sizes = [1, 16, 8], strides = [1, 1, 1]} : vector<8x16x8xf32> to vector<1x16x8xf32>
    %283 = vector.shape_cast %282 : vector<1x16x8xf32> to vector<16x8xf32>
    %284 = tpu.concatenate %269, %271, %273, %275, %277, %279, %281, %283 in 1 : vector<16x8xf32>, vector<16x8xf32>, vector<16x8xf32>, vector<16x8xf32>, vector<16x8xf32>, vector<16x8xf32>, vector<16x8xf32>, vector<16x8xf32> -> vector<16x64xf32>
    %285 = arith.addf %284, %151 : vector<16x64xf32>
    %c0_28 = arith.constant 0 : index
    %c0_29 = arith.constant 0 : index
    %286 = vector.load %arg5[%c0_28, %c0_29] : memref<9x64xf32, #tpu.memory_space<vmem>>, vector<9x64xf32>
    %287 = vector.extract_strided_slice %286 {offsets = [5, 0], sizes = [1, 64], strides = [1, 1]} : vector<9x64xf32> to vector<1x64xf32>
    %288 = vector.extract_strided_slice %286 {offsets = [6, 0], sizes = [1, 64], strides = [1, 1]} : vector<9x64xf32> to vector<1x64xf32>
    %289 = vector.extract_strided_slice %286 {offsets = [7, 0], sizes = [1, 64], strides = [1, 1]} : vector<9x64xf32> to vector<1x64xf32>
    %cst_30 = arith.constant dense<0.000000e+00> : vector<64xf32>
    %290 = vector.multi_reduction <add>, %285, %cst_30 [0] : vector<16x64xf32> to vector<64xf32>
    %291 = vector.shape_cast %290 : vector<64xf32> to vector<1x64xf32>
    %cst_31 = arith.constant 1.600000e+01 : f32
    %292 = vector.broadcast %cst_31 : f32 to vector<1x64xf32>
    %293 = arith.divf %291, %292 : vector<1x64xf32>
    %294 = arith.mulf %289, %293 : vector<1x64xf32>
    %295 = vector.broadcast %294 : vector<1x64xf32> to vector<16x64xf32>
    %296 = arith.subf %285, %295 : vector<16x64xf32>
    %297 = arith.mulf %296, %296 : vector<16x64xf32>
    %cst_32 = arith.constant dense<0.000000e+00> : vector<64xf32>
    %298 = vector.multi_reduction <add>, %297, %cst_32 [0] : vector<16x64xf32> to vector<64xf32>
    %299 = vector.shape_cast %298 : vector<64xf32> to vector<1x64xf32>
    %cst_33 = arith.constant 1.600000e+01 : f32
    %300 = vector.broadcast %cst_33 : f32 to vector<1x64xf32>
    %301 = arith.divf %299, %300 : vector<1x64xf32>
    %302 = vector.broadcast %287 : vector<1x64xf32> to vector<16x64xf32>
    %303 = arith.mulf %302, %296 : vector<16x64xf32>
    %cst_34 = arith.constant 9.99999974E-6 : f32
    %304 = vector.broadcast %cst_34 : f32 to vector<1x64xf32>
    %305 = arith.addf %301, %304 : vector<1x64xf32>
    %306 = math.rsqrt %305 : vector<1x64xf32>
    %307 = vector.broadcast %306 : vector<1x64xf32> to vector<16x64xf32>
    %308 = arith.mulf %303, %307 : vector<16x64xf32>
    %309 = vector.broadcast %288 : vector<1x64xf32> to vector<16x64xf32>
    %310 = arith.addf %308, %309 : vector<16x64xf32>
    %311 = arith.mulf %310, %310 : vector<16x64xf32>
    %cst_35 = arith.constant dense<0.000000e+00> : vector<16xf32>
    %312 = vector.multi_reduction <add>, %311, %cst_35 [1] : vector<16x64xf32> to vector<16xf32>
    %313 = vector.shape_cast %312 : vector<16xf32> to vector<16x1xf32>
    %cst_36 = arith.constant 9.99999996E-13 : f32
    %314 = vector.broadcast %cst_36 : f32 to vector<16x1xf32>
    %315 = arith.addf %313, %314 : vector<16x1xf32>
    %316 = math.rsqrt %315 : vector<16x1xf32>
    %317 = vector.broadcast %316 : vector<16x1xf32> to vector<16x64xf32>
    %318 = arith.mulf %310, %317 : vector<16x64xf32>
    %c0_37 = arith.constant 0 : index
    %c0_38 = arith.constant 0 : index
    %c0_39 = arith.constant 0 : index
    %319 = vector.load %arg6[%c0_37, %c0_38, %c0_39] : memref<1x16x64xf32, #tpu.memory_space<vmem>>, vector<1x16x64xf32>
    %320 = vector.shape_cast %319 : vector<1x16x64xf32> to vector<16x64xf32>
    %321 = vector.shape_cast %318 : vector<16x64xf32> to vector<1x16x64xf32>
    tpu.vector_store %arg6[%c0_37, %c0_38, %c0_39], %321 {strides = array<i32>} : memref<1x16x64xf32, #tpu.memory_space<vmem>>, vector<1x16x64xf32>,
    return
  }
  func.func @transform_0(%arg0: i32) -> (i32, i32, i32) {
    %c0_i32 = arith.constant 0 : i32
    %c0_i32_0 = arith.constant 0 : i32
    %c0_i32_1 = arith.constant 0 : i32
    return %arg0, %c0_i32, %c0_i32_0 : i32, i32, i32
  }
  func.func @transform_1(%arg0: i32) -> (i32, i32) {
    %c0_i32 = arith.constant 0 : i32
    %c0_i32_0 = arith.constant 0 : i32
    %c0_i32_1 = arith.constant 0 : i32
    return %c0_i32, %c0_i32_0 : i32, i32
  }
  func.func @transform_2(%arg0: i32) -> (i32, i32) {
    %c0_i32 = arith.constant 0 : i32
    %c0_i32_0 = arith.constant 0 : i32
    %c0_i32_1 = arith.constant 0 : i32
    return %c0_i32, %c0_i32_0 : i32, i32
  }
  func.func @transform_3(%arg0: i32) -> (i32, i32) {
    %c0_i32 = arith.constant 0 : i32
    %c0_i32_0 = arith.constant 0 : i32
    %c0_i32_1 = arith.constant 0 : i32
    return %c0_i32, %c0_i32_0 : i32, i32
  }
  func.func @transform_4(%arg0: i32) -> (i32, i32) {
    %c0_i32 = arith.constant 0 : i32
    %c0_i32_0 = arith.constant 0 : i32
    %c0_i32_1 = arith.constant 0 : i32
    return %c0_i32, %c0_i32_0 : i32, i32
  }
  func.func @transform_5(%arg0: i32) -> (i32, i32, i32) {
    %c0_i32 = arith.constant 0 : i32
    %c0_i32_0 = arith.constant 0 : i32
    %c0_i32_1 = arith.constant 0 : i32
    return %arg0, %c0_i32, %c0_i32_0 : i32, i32, i32
  }
}

</mosaic_0001>

<llo_original>
// kernel: tpu_custom_call.1
$region0: #{tpu_custom_call.1}
  #allocation0 [shape = 'u32[]', space=smem, size = 0x4, offset = 0x4, fixed_abs, tag = 'smem constant byte address 0x4 - core index']
  #allocation1 [shape = 'u32[144,128]{1,0:T(1,128)}', space=vmem, size = 0x12000, scoped, tag = 'internal scratch']
  %s0 = inlined_call_operand.hbm [shape: f32[3,16,16], index: 0, kind: input, shape index: {}]
  %s1 = inlined_call_operand.hbm [shape: f32[16,132], index: 1, kind: input, shape index: {}]
  %s2 = inlined_call_operand.hbm [shape: f32[9,32], index: 2, kind: input, shape index: {}]
  %s3 = inlined_call_operand.hbm [shape: f32[32,264], index: 3, kind: input, shape index: {}]
  %s4 = inlined_call_operand.hbm [shape: f32[9,64], index: 4, kind: input, shape index: {}]
  %s5 = inlined_call_operand.hbm [shape: f32[3,16,64], index: 5, kind: output, shape index: {}]
  %s6 = sld [smem:[#allocation0]]
  $region73: #{tpu_custom_call.1} parent=0
    _
  %s8 = ssub.s32 1, %s6
  %s9 = scalar_select 0, %s8, %s6
  $region1: #{tpu_custom_call.1} parent=0
    #allocation2 [shape = 'u8[16384]{0}', space=vmem, size = 0x4000, scoped, tag = 'input window, operand 0']
    #allocation3 [shape = 's32[2]{0}', space=sflag, size = 0x8, scoped, tag = 'scoped memory for tpu_custom_call.1']
    #allocation4 [shape = 's32[2]{0}', space=sflag, size = 0x8, scoped, tag = 'scoped memory for tpu_custom_call.1']
    #allocation5 [shape = 'u8[16384]{0}', space=vmem, size = 0x4000, scoped, tag = 'input window, operand 1, single buffered']
    #allocation6 [shape = 's32[1]{0}', space=sflag, size = 0x4, scoped, tag = 'scoped memory for tpu_custom_call.1']
    #allocation7 [shape = 'u8[8192]{0}', space=vmem, size = 0x2000, scoped, tag = 'input window, operand 2, single buffered']
    #allocation8 [shape = 'u8[49152]{0}', space=vmem, size = 0xc000, scoped, tag = 'input window, operand 3, single buffered']
    #allocation9 [shape = 's32[1]{0}', space=sflag, size = 0x4, scoped, tag = 'scoped memory for tpu_custom_call.1']
    #allocation10 [shape = 'u8[8192]{0}', space=vmem, size = 0x2000, scoped, tag = 'input window, operand 4, single buffered']
    #allocation11 [shape = 'u8[16384]{0}', space=vmem, size = 0x4000, scoped, tag = 'output window, operand 0']
    %10 = vsyncpa [#allocation3], 0
    %s11 = scalar_lea.sflag [#allocation3], 1
    %12 = vsyncpa %s11, 0
    %13 = vsyncpa [#allocation6], 0
    %14 = vsyncpa [#allocation9], 0
    %15 = vsyncpa [#allocation4], 0
    %s16 = scalar_lea.sflag [#allocation4], 1
    %17 = vsyncpa %s16, 0
    loop: start=0, step=1, limit=5
    $region2: #{tpu_custom_call.1} parent=1 // loop_pre_header
      _
    $region3: #{tpu_custom_call.1} parent=1 // loop_header
      %s19 = sphi 0, %s23
      %p20 = scmp.ge.s32.totalorder %s19, 5
      %s29 = sphi 0, %s31
      %s32 = sphi 0, %s29
      %s33 = sphi 0, %s32
      %s49 = sphi 0, %s33
      %s53 = sphi 0, %s53
      %s55 = sphi 0, %s53
      %s56 = sphi 0, %s55
      %s70 = sphi 0, %s56
      %s74 = sphi 0, %s74
      %s76 = sphi 0, %s74
      %s77 = sphi 0, %s76
      %s91 = sphi 0, %s77
      %s95 = sphi 0, %s95
      %s97 = sphi 0, %s95
      %s98 = sphi 0, %s97
      %s112 = sphi 0, %s98
      %s116 = sphi 0, %s116
      %s118 = sphi 0, %s116
      %s119 = sphi 0, %s118
      %s133 = sphi 0, %s119
      %s139 = sphi 0, %s141
      %s142 = sphi 0, %s139
      %s143 = sphi 0, %s142
      %s159 = sphi 0, %s143
    $region4: #{tpu_custom_call.1} parent=1 // loop_header_branch
      %22 = sbr.rel (%p20) target = $region8
    $region5: #{tpu_custom_call.1} parent=1 // loop_body
      %s24 = ssub.s32 %s19, 1
      %s25 = ssub.s32 %s19, 2
      %s26 = sadd.s32 %s19, 1
      %s27 = ssub.s32 %s19, %s26
      %p28 = scmp.eq.s32.totalorder %s27, 0
      %s30 = sadd.s32 %s29, 1
      %s31 = scalar_select %p28, %s29, %s30
      %p34 = pneg %p28
      %p35 = scmp.eq.s32.totalorder %s19, 2
      %p36 = por %p34, %p35
      %p37 = scmp.ne.s32.totalorder %s29, %s32
      %p38 = scmp.eq.s32.totalorder %s19, 0
      %p39 = por %p37, %p38
      %p40 = scmp.ne.s32.totalorder %s29, %s32
      %p41 = scmp.eq.s32.totalorder %s24, 2
      %p42 = por %p40, %p41
      %p43 = scmp.ne.s32.totalorder %s32, %s33
      %p44 = scmp.eq.s32.totalorder %s24, 0
      %p45 = por %p43, %p44
      %p46 = scmp.ne.s32.totalorder %s32, %s33
      %p47 = scmp.eq.s32.totalorder %s25, 2
      %p48 = por %p46, %p47
      %p50 = scmp.ne.s32.totalorder %s33, %s49
      %p51 = scmp.eq.s32.totalorder %s25, 0
      %p52 = por %p50, %p51
      %s54 = sadd.s32 %s53, 1
      %p57 = scmp.eq.s32.totalorder %s19, 2
      %p58 = scmp.ne.s32.totalorder %s53, %s55
      %p59 = scmp.eq.s32.totalorder %s19, 0
      %p60 = por %p58, %p59
      %p61 = scmp.ne.s32.totalorder %s53, %s55
      %p62 = scmp.eq.s32.totalorder %s24, 2
      %p63 = por %p61, %p62
      %p64 = scmp.ne.s32.totalorder %s55, %s56
      %p65 = scmp.eq.s32.totalorder %s24, 0
      %p66 = por %p64, %p65
      %p67 = scmp.ne.s32.totalorder %s55, %s56
      %p68 = scmp.eq.s32.totalorder %s25, 2
      %p69 = por %p67, %p68
      %p71 = scmp.ne.s32.totalorder %s56, %s70
      %p72 = scmp.eq.s32.totalorder %s25, 0
      %p73 = por %p71, %p72
      %s75 = sadd.s32 %s74, 1
      %p78 = scmp.eq.s32.totalorder %s19, 2
      %p79 = scmp.ne.s32.totalorder %s74, %s76
      %p80 = scmp.eq.s32.totalorder %s19, 0
      %p81 = por %p79, %p80
      %p82 = scmp.ne.s32.totalorder %s74, %s76
      %p83 = scmp.eq.s32.totalorder %s24, 2
      %p84 = por %p82, %p83
      %p85 = scmp.ne.s32.totalorder %s76, %s77
      %p86 = scmp.eq.s32.totalorder %s24, 0
      %p87 = por %p85, %p86
      %p88 = scmp.ne.s32.totalorder %s76, %s77
      %p89 = scmp.eq.s32.totalorder %s25, 2
      %p90 = por %p88, %p89
      %p92 = scmp.ne.s32.totalorder %s77, %s91
      %p93 = scmp.eq.s32.totalorder %s25, 0
      %p94 = por %p92, %p93
      %s96 = sadd.s32 %s95, 1
      %p99 = scmp.eq.s32.totalorder %s19, 2
      %p100 = scmp.ne.s32.totalorder %s95, %s97
      %p101 = scmp.eq.s32.totalorder %s19, 0
      %p102 = por %p100, %p101
      %p103 = scmp.ne.s32.totalorder %s95, %s97
      %p104 = scmp.eq.s32.totalorder %s24, 2
      %p105 = por %p103, %p104
      %p106 = scmp.ne.s32.totalorder %s97, %s98
      %p107 = scmp.eq.s32.totalorder %s24, 0
      %p108 = por %p106, %p107
      %p109 = scmp.ne.s32.totalorder %s97, %s98
      %p110 = scmp.eq.s32.totalorder %s25, 2
      %p111 = por %p109, %p110
      %p113 = scmp.ne.s32.totalorder %s98, %s112
      %p114 = scmp.eq.s32.totalorder %s25, 0
      %p115 = por %p113, %p114
      %s117 = sadd.s32 %s116, 1
      %p120 = scmp.eq.s32.totalorder %s19, 2
      %p121 = scmp.ne.s32.totalorder %s116, %s118
      %p122 = scmp.eq.s32.totalorder %s19, 0
      %p123 = por %p121, %p122
      %p124 = scmp.ne.s32.totalorder %s116, %s118
      %p125 = scmp.eq.s32.totalorder %s24, 2
      %p126 = por %p124, %p125
      %p127 = scmp.ne.s32.totalorder %s118, %s119
      %p128 = scmp.eq.s32.totalorder %s24, 0
      %p129 = por %p127, %p128
      %p130 = scmp.ne.s32.totalorder %s118, %s119
      %p131 = scmp.eq.s32.totalorder %s25, 2
      %p132 = por %p130, %p131
      %p134 = scmp.ne.s32.totalorder %s119, %s133
      %p135 = scmp.eq.s32.totalorder %s25, 0
      %p136 = por %p134, %p135
      %s137 = ssub.s32 %s19, %s26
      %p138 = scmp.eq.s32.totalorder %s137, 0
      %s140 = sadd.s32 %s139, 1
      %s141 = scalar_select %p138, %s139, %s140
      %p144 = pneg %p138
      %p145 = scmp.eq.s32.totalorder %s19, 2
      %p146 = por %p144, %p145
      %p147 = scmp.ne.s32.totalorder %s139, %s142
      %p148 = scmp.eq.s32.totalorder %s19, 0
      %p149 = por %p147, %p148
      %p150 = scmp.ne.s32.totalorder %s139, %s142
      %p151 = scmp.eq.s32.totalorder %s24, 2
      %p152 = por %p150, %p151
      %p153 = scmp.ne.s32.totalorder %s142, %s143
      %p154 = scmp.eq.s32.totalorder %s24, 0
      %p155 = por %p153, %p154
      %p156 = scmp.ne.s32.totalorder %s142, %s143
      %p157 = scmp.eq.s32.totalorder %s25, 2
      %p158 = por %p156, %p157
      %p160 = scmp.ne.s32.totalorder %s143, %s159
      %p161 = scmp.eq.s32.totalorder %s25, 0
      %p162 = por %p160, %p161
      %p163 = scmp.le.s32.totalorder 1, %s19
      %p164 = scmp.lt.s32.totalorder %s19, 4
      %p165 = pnand %p163, %p164
      %p166 = pneg %p165
      // Predicated region
      $region9: #{tpu_custom_call.1} parent=5 // pred_check
        _
      $region10: #{tpu_custom_call.1} parent=5 // pred_check_branch
        %168 = sbr.rel (%p165) target = $region12
      $region11: #{tpu_custom_call.1} parent=5 // pred_region
        %s169 = ssub.s32 %s19, 1
        // Predicated region
        $region13: #{tpu_custom_call.1} parent=11 // pred_check
          %p170 = pneg %p66
        $region14: #{tpu_custom_call.1} parent=11 // pred_check_branch
          %172 = sbr.rel (%p170) target = $region16
        $region15: #{tpu_custom_call.1} parent=11 // pred_region
          %s174 = ssub.s32 512, 512
          %175 = vsyncadd [#allocation6], %s174
          %s176 = sshll.u32 [#allocation5], 4
          %s177 = int_to_ptr.vmem [resolvable:$true] %s176
          %182 = dma.hbm_to_vmem [thread:$0]  %s1, 512, %s177, [#allocation6], 256, 256, 16
        $region16: #{tpu_custom_call.1} parent=11 // pred_fallthru
          _
        // Predicated region
        $region17: #{tpu_custom_call.1} parent=11 // pred_check
          %p183 = pneg %p87
        $region18: #{tpu_custom_call.1} parent=11 // pred_check_branch
          %185 = sbr.rel (%p183) target = $region20
        $region19: #{tpu_custom_call.1} parent=11 // pred_region
          %s187 = ssub.s32 256, 256
          %188 = vsyncadd [#allocation6], %s187
          %s189 = sshll.u32 [#allocation7], 4
          %s190 = int_to_ptr.vmem [resolvable:$true] %s189
          %195 = dma.hbm_to_vmem [thread:$0]  %s2, 256, %s190, [#allocation6], 128, 128, 8
        $region20: #{tpu_custom_call.1} parent=11 // pred_fallthru
          _
        // Predicated region
        $region21: #{tpu_custom_call.1} parent=11 // pred_check
          %p196 = pneg %p108
        $region22: #{tpu_custom_call.1} parent=11 // pred_check_branch
          %198 = sbr.rel (%p196) target = $region24
        $region23: #{tpu_custom_call.1} parent=11 // pred_region
          %s200 = ssub.s32 1536, 1536
          %201 = vsyncadd [#allocation9], %s200
          %s202 = sshll.u32 [#allocation8], 4
          %s203 = int_to_ptr.vmem [resolvable:$true] %s202
          %208 = dma.hbm_to_vmem [thread:$0]  %s3, 1536, %s203, [#allocation9], 384, 384, 24
        $region24: #{tpu_custom_call.1} parent=11 // pred_fallthru
          _
        // Predicated region
        $region25: #{tpu_custom_call.1} parent=11 // pred_check
          %p209 = pneg %p129
        $region26: #{tpu_custom_call.1} parent=11 // pred_check_branch
          %211 = sbr.rel (%p209) target = $region28
        $region27: #{tpu_custom_call.1} parent=11 // pred_region
          %s213 = ssub.s32 256, 256
          %214 = vsyncadd [#allocation9], %s213
          %s215 = sshll.u32 [#allocation10], 4
          %s216 = int_to_ptr.vmem [resolvable:$true] %s215
          %221 = dma.hbm_to_vmem [thread:$0]  %s4, 256, %s216, [#allocation9], 128, 128, 8
        $region28: #{tpu_custom_call.1} parent=11 // pred_fallthru
          _
      $region12: #{tpu_custom_call.1} parent=5 // pred_fallthru
        _
      %p222 = scmp.lt.s32.totalorder %s19, 3
      // Predicated region
      $region29: #{tpu_custom_call.1} parent=5 // pred_check
        %p223 = pneg %p222
      $region30: #{tpu_custom_call.1} parent=5 // pred_check_branch
        %225 = sbr.rel (%p223) target = $region32
      $region31: #{tpu_custom_call.1} parent=5 // pred_region
        // Predicated region
        $region33: #{tpu_custom_call.1} parent=31 // pred_check
          %p226 = pneg %p39
        $region34: #{tpu_custom_call.1} parent=31 // pred_check_branch
          %228 = sbr.rel (%p226) target = $region36
        $region35: #{tpu_custom_call.1} parent=31 // pred_region
          %s229 = sand.u32 %s29, 1
          %s230 = scalar_lea.sflag [#allocation3], %s229
          %s231 = sand.u32 %s29, 1
          %s232 = smul.addr %s231, 16
          %s233 = scalar_lea.vmem [#allocation2], %s232
          %s235 = ssub.s32 256, 256
          %236 = vsyncadd %s230, %s235
          %s237 = smul.addr %s19, 2
          %s238 = smul.addr %s237, 128
          %s239 = scalar_lea.hbm %s0, %s238
          %s240 = sshll.u32 %s233, 4
          %s241 = int_to_ptr.vmem [resolvable:$true] %s240
          %246 = dma.hbm_to_vmem [thread:$0]  %s239, 256, %s241, %s230, 128, 128, 8
        $region36: #{tpu_custom_call.1} parent=31 // pred_fallthru
          _
      $region32: #{tpu_custom_call.1} parent=5 // pred_fallthru
        _
      %p247 = scmp.le.s32.totalorder 1, %s19
      %p248 = scmp.lt.s32.totalorder %s19, 4
      %p249 = pnand %p247, %p248
      %p250 = pneg %p249
      // Predicated region
      $region37: #{tpu_custom_call.1} parent=5 // pred_check
        _
      $region38: #{tpu_custom_call.1} parent=5 // pred_check_branch
        %252 = sbr.rel (%p249) target = $region40
      $region39: #{tpu_custom_call.1} parent=5 // pred_region
        %s253 = ssub.s32 %s19, 1
        %s254 = sand.u32 %s32, 1
        %s255 = scalar_lea.sflag [#allocation3], %s254
        %s256 = sand.u32 %s32, 1
        %s257 = smul.addr %s256, 16
        %s258 = scalar_lea.vmem [#allocation2], %s257
        // Predicated region
        $region41: #{tpu_custom_call.1} parent=39 // pred_check
          %p259 = pneg %p45
        $region42: #{tpu_custom_call.1} parent=39 // pred_check_branch
          %261 = sbr.rel (%p259) target = $region44
        $region43: #{tpu_custom_call.1} parent=39 // pred_region
          %262 = dma.done %s255, 256
        $region44: #{tpu_custom_call.1} parent=39 // pred_fallthru
          _
        // Predicated region
        $region45: #{tpu_custom_call.1} parent=39 // pred_check
          %p263 = pneg %p66
        $region46: #{tpu_custom_call.1} parent=39 // pred_check_branch
          %265 = sbr.rel (%p263) target = $region48
        $region47: #{tpu_custom_call.1} parent=39 // pred_region
          %266 = dma.done [#allocation6], 512
        $region48: #{tpu_custom_call.1} parent=39 // pred_fallthru
          _
        // Predicated region
        $region49: #{tpu_custom_call.1} parent=39 // pred_check
          %p267 = pneg %p87
        $region50: #{tpu_custom_call.1} parent=39 // pred_check_branch
          %269 = sbr.rel (%p267) target = $region52
        $region51: #{tpu_custom_call.1} parent=39 // pred_region
          %270 = dma.done [#allocation6], 256
        $region52: #{tpu_custom_call.1} parent=39 // pred_fallthru
          _
        // Predicated region
        $region53: #{tpu_custom_call.1} parent=39 // pred_check
          %p271 = pneg %p108
        $region54: #{tpu_custom_call.1} parent=39 // pred_check_branch
          %273 = sbr.rel (%p271) target = $region56
        $region55: #{tpu_custom_call.1} parent=39 // pred_region
          %274 = dma.done [#allocation9], 1536
        $region56: #{tpu_custom_call.1} parent=39 // pred_fallthru
          _
        // Predicated region
        $region57: #{tpu_custom_call.1} parent=39 // pred_check
          %p275 = pneg %p129
        $region58: #{tpu_custom_call.1} parent=39 // pred_check_branch
          %277 = sbr.rel (%p275) target = $region60
        $region59: #{tpu_custom_call.1} parent=39 // pred_region
          %278 = dma.done [#allocation9], 256
        $region60: #{tpu_custom_call.1} parent=39 // pred_fallthru
          _
        %s279 = sand.u32 %s32, 1
        %s280 = scalar_lea.sflag [#allocation3], %s279
        %s281 = sand.u32 %s32, 1
        %s282 = smul.addr %s281, 16
        %s283 = scalar_lea.vmem [#allocation2], %s282
        %p284 = pneg %p45
        %p285 = pneg %p42
        %p286 = pneg %p66
        %p287 = pneg %p63
        %p288 = pneg %p87
        %p289 = pneg %p84
        %p290 = pneg %p108
        %p291 = pneg %p105
        %p292 = pneg %p129
        %p293 = pneg %p126
        %p294 = pneg %p155
        %p295 = pneg %p152
        %s296 = sand.u32 %s142, 1
        %s297 = scalar_lea.sflag [#allocation4], %s296
        %s298 = sand.u32 %s142, 1
        %s299 = smul.addr %s298, 16
        %s300 = scalar_lea.vmem [#allocation11], %s299
        %v301 = vld [vmem:[%s258] sm:$0xff]
        %v302 = vld [vmem:[%s258 + $0x8] sm:$0xff]
        %303 = vxpose.xlu0.b32.start [1/16] %v301, 128
        %304 = vxpose.xlu0.b32.cont [2/16] %v302, 128
        %305 = vxpose.xlu0.b32.cont [3/16] 0.0, 128
        %306 = vxpose.xlu0.b32.cont [4/16] 0.0, 128
        %307 = vxpose.xlu0.b32.cont [5/16] 0.0, 128
        %308 = vxpose.xlu0.b32.cont [6/16] 0.0, 128
        %309 = vxpose.xlu0.b32.cont [7/16] 0.0, 128
        %310 = vxpose.xlu0.b32.cont [8/16] 0.0, 128
        %311 = vxpose.xlu0.b32.cont [9/16] 0.0, 128
        %312 = vxpose.xlu0.b32.cont [10/16] 0.0, 128
        %313 = vxpose.xlu0.b32.cont [11/16] 0.0, 128
        %314 = vxpose.xlu0.b32.cont [12/16] 0.0, 128
        %315 = vxpose.xlu0.b32.cont [13/16] 0.0, 128
        %316 = vxpose.xlu0.b32.cont [14/16] 0.0, 128
        %317 = vxpose.xlu0.b32.cont [15/16] 0.0, 128
        %318 = vxpose.xlu0.b32.end [16/16] 0.0, 128
        %v319 = vpop.trf.xlu0
        %v320 = vpop.trf.xlu0
        %v321 = vpop.trf.xlu0
        %v322 = vpop.trf.xlu0
        %v323 = vpop.trf.xlu0
        %v324 = vpop.trf.xlu0
        %v325 = vpop.trf.xlu0
        %v326 = vpop.trf.xlu0
        %v327 = vpop.trf.xlu0
        %v328 = vpop.trf.xlu0
        %v329 = vpop.trf.xlu0
        %v330 = vpop.trf.xlu0
        %v331 = vpop.trf.xlu0
        %v332 = vpop.trf.xlu0
        %v333 = vpop.trf.xlu0
        %v334 = vpop.trf.xlu0
        %v335 = vld [vmem:[#allocation5] sm:$0xff]
        %v336 = vld [vmem:[#allocation5 + $0x8] sm:$0xff]
        %v337 = vld [vmem:[#allocation5 + $0x10] sm:$0xff]
        %v338 = vld [vmem:[#allocation5 + $0x18] sm:$0xff]
        %v339 = vld [vmem:[#allocation7] sm:$0xff]
        %v340 = vld [vmem:[#allocation7 + $0x8] sm:$0x1]
        %vm341 = vcmask 130048
        %v343 = vsel %vm341, %v301, 0
        %v346 = vsel %vm341, %v302, 0
        %348 = vmatprep.subr.mxu0 %v336
        %349 = vmatpush1.msra.mxu0 %v335
        %350 = vmatprep.subr.mxu0 %v338
        %351 = vmatpush1.msra.mxu0 %v337
        %352 = vmatprep.subr.mxu0 0.0
        %353 = vmatpush1.msra.mxu0 0.0
        %354 = vmatprep.subr.mxu0 0.0
        %355 = vmatpush1.msra.mxu0 0.0
        %356 = vmatprep.subr.mxu0 0.0
        %357 = vmatpush1.msra.mxu0 0.0
        %358 = vmatprep.subr.mxu0 0.0
        %359 = vmatpush1.msra.mxu0 0.0
        %360 = vmatprep.subr.mxu0 0.0
        %361 = vmatpush1.msra.mxu0 0.0
        %362 = vmatprep.subr.mxu0 0.0
        %363 = vmatpush1.msra.mxu0 0.0
        %364 = vmatprep.subr.mxu0 0.0
        %365 = vmatpush1.msra.mxu0 0.0
        %366 = vmatprep.subr.mxu0 0.0
        %367 = vmatpush1.msra.mxu0 0.0
        %368 = vmatprep.subr.mxu0 0.0
        %369 = vmatpush1.msra.mxu0 0.0
        %370 = vmatprep.subr.mxu0 0.0
        %371 = vmatpush1.msra.mxu0 0.0
        %372 = vmatprep.subr.mxu0 0.0
        %373 = vmatpush1.msra.mxu0 0.0
        %374 = vmatprep.subr.mxu0 0.0
        %375 = vmatpush1.msra.mxu0 0.0
        %376 = vmatprep.subr.mxu0 0.0
        %377 = vmatpush1.msra.mxu0 0.0
        %378 = vmatprep.subr.mxu0 0.0
        %379 = vmatpush1.msra.mxu0 0.0
        %380 = vmatprep.subr.mxu0 0.0
        %381 = vmatpush1.msra.mxu0 0.0
        %382 = vmatprep.subr.mxu0 0.0
        %383 = vmatpush1.msra.mxu0 0.0
        %384 = vmatprep.subr.mxu0 0.0
        %385 = vmatpush1.msra.mxu0 0.0
        %386 = vmatprep.subr.mxu0 0.0
        %387 = vmatpush1.msra.mxu0 0.0
        %388 = vmatprep.subr.mxu0 0.0
        %389 = vmatpush1.msra.mxu0 0.0
        %390 = vmatprep.subr.mxu0 0.0
        %391 = vmatpush1.msra.mxu0 0.0
        %392 = vmatprep.subr.mxu0 0.0
        %393 = vmatpush1.msra.mxu0 0.0
        %394 = vmatprep.subr.mxu0 0.0
        %395 = vmatpush1.msra.mxu0 0.0
        %396 = vmatprep.subr.mxu0 0.0
        %397 = vmatpush1.msra.mxu0 0.0
        %398 = vmatprep.subr.mxu0 0.0
        %399 = vmatpush1.msra.mxu0 0.0
        %400 = vmatprep.subr.mxu0 0.0
        %401 = vmatpush1.msra.mxu0 0.0
        %402 = vmatprep.subr.mxu0 0.0
        %403 = vmatpush1.msra.mxu0 0.0
        %404 = vmatprep.subr.mxu0 0.0
        %405 = vmatpush1.msra.mxu0 0.0
        %406 = vmatprep.subr.mxu0 0.0
        %407 = vmatpush1.msra.mxu0 0.0
        %408 = vmatprep.subr.mxu0 0.0
        %409 = vmatpush1.msra.mxu0 0.0
        %410 = vmatprep.subr.mxu0 0.0
        %411 = vmatpush1.msra.mxu0 0.0
        %412 = vmatprep.mubr.f32.mxu0 0.0
        %413 = vmatmul.mubr.f32.gmra.mrb[0].mxu0 %v343
        %v414 = vpop.f32.mrb[0].mxu0
        %v415 = vadd.f32 0.0, %v414
        %v416 = vpop.f32.mrb[0].mxu0
        %v417 = vadd.f32 0.0, %v416
        %418 = vmatprep.mubr.f32.mxu0 0.0
        %419 = vmatmul.mubr.f32.gmra.mrb[0].mxu0 %v346
        %v420 = vpop.f32.mrb[0].mxu0
        %v421 = vadd.f32 0.0, %v420
        %v422 = vpop.f32.mrb[0].mxu0
        %v423 = vadd.f32 0.0, %v422
        %424 = vdwg.mxu0
        %v425 = vlaneseq
        %v426 = vshrl.u32 %v425, 7
        %v427 = vsub.s32 0, %v426
        %v428 = vrot.slane %v339, %v427
        %v429 = vadd.f32 %v415, %v428
        %v430 = vadd.f32 %v421, %v428
        %v431 = vlaneseq
        %v432 = vshrl.u32 %v431, 7
        %v433 = vsub.s32 1, %v432
        %v434 = vrot.slane %v339, %v433
        %436 = vrot.lane.b32.xlu0 %v434, 32
        %v437 = vpop.permute.xlu0 %436
        %v439 = vadd.f32 %v415, %v437
        %v440 = vadd.f32 %v421, %v437
        %v441 = vlaneseq
        %v442 = vshrl.u32 %v441, 7
        %v443 = vsub.s32 2, %v442
        %v444 = vrot.slane %v339, %v443
        %446 = vrot.lane.b32.xlu0 %v444, 64
        %v447 = vpop.permute.xlu0 %446
        %v449 = vadd.f32 %v415, %v447
        %v450 = vadd.f32 %v421, %v447
        %v451 = vlaneseq
        %v452 = vshrl.u32 %v451, 7
        %v453 = vsub.s32 3, %v452
        %v454 = vrot.slane %v339, %v453
        %456 = vrot.lane.b32.xlu0 %v454, 96
        %v457 = vpop.permute.xlu0 %456
        %v459 = vadd.f32 %v415, %v457
        %v460 = vadd.f32 %v421, %v457
        %v461 = vlaneseq
        %v462 = vshrl.u32 %v461, 7
        %v463 = vsub.s32 0, %v462
        %v464 = vrot.slane %v340, %v463
        %v465 = vadd.f32 %v417, %v464
        %v466 = vadd.f32 %v423, %v464
        %469 = vrot.lane.b32.xlu0 %v429, 120
        %v470 = vpop.permute.xlu0 %469
        %471 = vrot.lane.b32.xlu0 %v430, 120
        %v472 = vpop.permute.xlu0 %471
        %473 = vrot.lane.b32.xlu0 %v429, 112
        %v474 = vpop.permute.xlu0 %473
        %475 = vrot.lane.b32.xlu0 %v430, 112
        %v476 = vpop.permute.xlu0 %475
        %477 = vrot.lane.b32.xlu0 %v429, 104
        %v478 = vpop.permute.xlu0 %477
        %479 = vrot.lane.b32.xlu0 %v430, 104
        %v480 = vpop.permute.xlu0 %479
        %483 = vrot.lane.b32.xlu0 %v439, 120
        %v484 = vpop.permute.xlu0 %483
        %485 = vrot.lane.b32.xlu0 %v440, 120
        %v486 = vpop.permute.xlu0 %485
        %487 = vrot.lane.b32.xlu0 %v439, 112
        %v488 = vpop.permute.xlu0 %487
        %489 = vrot.lane.b32.xlu0 %v440, 112
        %v490 = vpop.permute.xlu0 %489
        %491 = vrot.lane.b32.xlu0 %v439, 104
        %v492 = vpop.permute.xlu0 %491
        %493 = vrot.lane.b32.xlu0 %v440, 104
        %v494 = vpop.permute.xlu0 %493
        %497 = vrot.lane.b32.xlu0 %v449, 120
        %v498 = vpop.permute.xlu0 %497
        %499 = vrot.lane.b32.xlu0 %v450, 120
        %v500 = vpop.permute.xlu0 %499
        %501 = vrot.lane.b32.xlu0 %v449, 112
        %v502 = vpop.permute.xlu0 %501
        %503 = vrot.lane.b32.xlu0 %v450, 112
        %v504 = vpop.permute.xlu0 %503
        %505 = vrot.lane.b32.xlu0 %v449, 104
        %v506 = vpop.permute.xlu0 %505
        %507 = vrot.lane.b32.xlu0 %v450, 104
        %v508 = vpop.permute.xlu0 %507
        %510 = vrot.lane.b32.xlu0 %v339, 120
        %v511 = vpop.permute.xlu0 %510
        %513 = vrot.lane.b32.xlu0 %v339, 112
        %v514 = vpop.permute.xlu0 %513
        %516 = vrot.lane.b32.xlu0 %v339, 104
        %v517 = vpop.permute.xlu0 %516
        %521 = vrot.lane.b32.xlu0 %v465, 127
        %v522 = vpop.permute.xlu0 %521
        %523 = vrot.lane.b32.xlu0 %v466, 127
        %v524 = vpop.permute.xlu0 %523
        %525 = vrot.lane.b32.xlu0 %v465, 126
        %v526 = vpop.permute.xlu0 %525
        %527 = vrot.lane.b32.xlu0 %v466, 126
        %v528 = vpop.permute.xlu0 %527
        %529 = vrot.lane.b32.xlu0 %v465, 125
        %v530 = vpop.permute.xlu0 %529
        %531 = vrot.lane.b32.xlu0 %v466, 125
        %v532 = vpop.permute.xlu0 %531
        %533 = vset.pattern.permute.xlu0 0
        %534 = vperm.xlu0 %533, %v465
        %v535 = vpop.permute.xlu0 %534
        %537 = vset.pattern.permute.xlu0 0
        %538 = vperm.xlu0 %537, %v466
        %v539 = vpop.permute.xlu0 %538
        %541 = vset.pattern.permute.xlu0 0
        %542 = vperm.xlu0 %541, %v522
        %v543 = vpop.permute.xlu0 %542
        %545 = vset.pattern.permute.xlu0 0
        %546 = vperm.xlu0 %545, %v524
        %v547 = vpop.permute.xlu0 %546
        %549 = vset.pattern.permute.xlu0 0
        %550 = vperm.xlu0 %549, %v526
        %v551 = vpop.permute.xlu0 %550
        %553 = vset.pattern.permute.xlu0 0
        %554 = vperm.xlu0 %553, %v528
        %v555 = vpop.permute.xlu0 %554
        %557 = vset.pattern.permute.xlu0 0
        %558 = vperm.xlu0 %557, %v530
        %v559 = vpop.permute.xlu0 %558
        %561 = vset.pattern.permute.xlu0 0
        %562 = vperm.xlu0 %561, %v532
        %v563 = vpop.permute.xlu0 %562
        %v565 = vmul.f32 %v535, %v319
        %v566 = vmul.f32 %v539, %v320
        %v567 = vmul.f32 %v543, %v319
        %v568 = vmul.f32 %v547, %v320
        %v569 = vmul.f32 %v551, %v319
        %v570 = vmul.f32 %v555, %v320
        %v571 = vmul.f32 %v559, %v319
        %v572 = vmul.f32 %v563, %v320
        %573 = vrot.lane.b32.xlu0 %v439, 96
        %v574 = vpop.permute.xlu0 %573
        %575 = vrot.lane.b32.xlu0 %v440, 96
        %v576 = vpop.permute.xlu0 %575
        %vm577 = vcmask 64512
        %v578 = vsel %vm577, %v429, 0
        %v580 = vsel %vm577, %v430, 0
        %v582 = vsel %vm577, %v574, 0
        %v584 = vsel %vm577, %v576, 0
        %586 = vmatprep.subr.mxu0 0.0
        %587 = vmatpush1.xpose.msra.mxu0 %v582
        %588 = vmatprep.subr.mxu0 0.0
        %589 = vmatpush1.xpose.msra.mxu0 %v584
        %590 = vmatprep.subr.mxu0 0.0
        %591 = vmatpush1.xpose.msra.mxu0 0.0
        %592 = vmatprep.subr.mxu0 0.0
        %593 = vmatpush1.xpose.msra.mxu0 0.0
        %594 = vmatprep.subr.mxu0 0.0
        %595 = vmatpush1.xpose.msra.mxu0 0.0
        %596 = vmatprep.subr.mxu0 0.0
        %597 = vmatpush1.xpose.msra.mxu0 0.0
        %598 = vmatprep.subr.mxu0 0.0
        %599 = vmatpush1.xpose.msra.mxu0 0.0
        %600 = vmatprep.subr.mxu0 0.0
        %601 = vmatpush1.xpose.msra.mxu0 0.0
        %602 = vmatprep.subr.mxu0 0.0
        %603 = vmatpush1.xpose.msra.mxu0 0.0
        %604 = vmatprep.subr.mxu0 0.0
        %605 = vmatpush1.xpose.msra.mxu0 0.0
        %606 = vmatprep.subr.mxu0 0.0
        %607 = vmatpush1.xpose.msra.mxu0 0.0
        %608 = vmatprep.subr.mxu0 0.0
        %609 = vmatpush1.xpose.msra.mxu0 0.0
        %610 = vmatprep.subr.mxu0 0.0
        %611 = vmatpush1.xpose.msra.mxu0 0.0
        %612 = vmatprep.subr.mxu0 0.0
        %613 = vmatpush1.xpose.msra.mxu0 0.0
        %614 = vmatprep.subr.mxu0 0.0
        %615 = vmatpush1.xpose.msra.mxu0 0.0
        %616 = vmatprep.subr.mxu0 0.0
        %617 = vmatpush1.xpose.msra.mxu0 0.0
        %618 = vmatprep.subr.mxu0 0.0
        %619 = vmatpush1.xpose.msra.mxu0 0.0
        %620 = vmatprep.subr.mxu0 0.0
        %621 = vmatpush1.xpose.msra.mxu0 0.0
        %622 = vmatprep.subr.mxu0 0.0
        %623 = vmatpush1.xpose.msra.mxu0 0.0
        %624 = vmatprep.subr.mxu0 0.0
        %625 = vmatpush1.xpose.msra.mxu0 0.0
        %626 = vmatprep.subr.mxu0 0.0
        %627 = vmatpush1.xpose.msra.mxu0 0.0
        %628 = vmatprep.subr.mxu0 0.0
        %629 = vmatpush1.xpose.msra.mxu0 0.0
        %630 = vmatprep.subr.mxu0 0.0
        %631 = vmatpush1.xpose.msra.mxu0 0.0
        %632 = vmatprep.subr.mxu0 0.0
        %633 = vmatpush1.xpose.msra.mxu0 0.0
        %634 = vmatprep.subr.mxu0 0.0
        %635 = vmatpush1.xpose.msra.mxu0 0.0
        %636 = vmatprep.subr.mxu0 0.0
        %637 = vmatpush1.xpose.msra.mxu0 0.0
        %638 = vmatprep.subr.mxu0 0.0
        %639 = vmatpush1.xpose.msra.mxu0 0.0
        %640 = vmatprep.subr.mxu0 0.0
        %641 = vmatpush1.xpose.msra.mxu0 0.0
        %642 = vmatprep.subr.mxu0 0.0
        %643 = vmatpush1.xpose.msra.mxu0 0.0
        %644 = vmatprep.subr.mxu0 0.0
        %645 = vmatpush1.xpose.msra.mxu0 0.0
        %646 = vmatprep.subr.mxu0 0.0
        %647 = vmatpush1.xpose.msra.mxu0 0.0
        %648 = vmatprep.subr.mxu0 0.0
        %649 = vmatpush1.xpose.msra.mxu0 0.0
        %650 = vmatprep.mubr.f32.mxu0 0.0
        %651 = vmatmul.mubr.f32.gmra.mrb[0].mxu0 %v578
        %v652 = vpop.f32.mrb[0].mxu0
        %v653 = vadd.f32 %v565, %v652
        %v654 = vpop.f32.mrb[0].mxu0
        %655 = vmatprep.mubr.f32.mxu0 0.0
        %656 = vmatmul.mubr.f32.gmra.mrb[0].mxu0 %v580
        %v657 = vpop.f32.mrb[0].mxu0
        %v658 = vadd.f32 %v566, %v657
        %v659 = vpop.f32.mrb[0].mxu0
        %660 = vdwg.mxu0
        %661 = vrot.lane.b32.xlu0 %v484, 96
        %v662 = vpop.permute.xlu0 %661
        %663 = vrot.lane.b32.xlu0 %v486, 96
        %v664 = vpop.permute.xlu0 %663
        %v665 = vsel %vm577, %v470, 0
        %v667 = vsel %vm577, %v472, 0
        %v669 = vsel %vm577, %v662, 0
        %v671 = vsel %vm577, %v664, 0
        %673 = vmatprep.subr.mxu0 0.0
        %674 = vmatpush1.xpose.msra.mxu0 %v669
        %675 = vmatprep.subr.mxu0 0.0
        %676 = vmatpush1.xpose.msra.mxu0 %v671
        %677 = vmatprep.subr.mxu0 0.0
        %678 = vmatpush1.xpose.msra.mxu0 0.0
        %679 = vmatprep.subr.mxu0 0.0
        %680 = vmatpush1.xpose.msra.mxu0 0.0
        %681 = vmatprep.subr.mxu0 0.0
        %682 = vmatpush1.xpose.msra.mxu0 0.0
        %683 = vmatprep.subr.mxu0 0.0
        %684 = vmatpush1.xpose.msra.mxu0 0.0
        %685 = vmatprep.subr.mxu0 0.0
        %686 = vmatpush1.xpose.msra.mxu0 0.0
        %687 = vmatprep.subr.mxu0 0.0
        %688 = vmatpush1.xpose.msra.mxu0 0.0
        %689 = vmatprep.subr.mxu0 0.0
        %690 = vmatpush1.xpose.msra.mxu0 0.0
        %691 = vmatprep.subr.mxu0 0.0
        %692 = vmatpush1.xpose.msra.mxu0 0.0
        %693 = vmatprep.subr.mxu0 0.0
        %694 = vmatpush1.xpose.msra.mxu0 0.0
        %695 = vmatprep.subr.mxu0 0.0
        %696 = vmatpush1.xpose.msra.mxu0 0.0
        %697 = vmatprep.subr.mxu0 0.0
        %698 = vmatpush1.xpose.msra.mxu0 0.0
        %699 = vmatprep.subr.mxu0 0.0
        %700 = vmatpush1.xpose.msra.mxu0 0.0
        %701 = vmatprep.subr.mxu0 0.0
        %702 = vmatpush1.xpose.msra.mxu0 0.0
        %703 = vmatprep.subr.mxu0 0.0
        %704 = vmatpush1.xpose.msra.mxu0 0.0
        %705 = vmatprep.subr.mxu0 0.0
        %706 = vmatpush1.xpose.msra.mxu0 0.0
        %707 = vmatprep.subr.mxu0 0.0
        %708 = vmatpush1.xpose.msra.mxu0 0.0
        %709 = vmatprep.subr.mxu0 0.0
        %710 = vmatpush1.xpose.msra.mxu0 0.0
        %711 = vmatprep.subr.mxu0 0.0
        %712 = vmatpush1.xpose.msra.mxu0 0.0
        %713 = vmatprep.subr.mxu0 0.0
        %714 = vmatpush1.xpose.msra.mxu0 0.0
        %715 = vmatprep.subr.mxu0 0.0
        %716 = vmatpush1.xpose.msra.mxu0 0.0
        %717 = vmatprep.subr.mxu0 0.0
        %718 = vmatpush1.xpose.msra.mxu0 0.0
        %719 = vmatprep.subr.mxu0 0.0
        %720 = vmatpush1.xpose.msra.mxu0 0.0
        %721 = vmatprep.subr.mxu0 0.0
        %722 = vmatpush1.xpose.msra.mxu0 0.0
        %723 = vmatprep.subr.mxu0 0.0
        %724 = vmatpush1.xpose.msra.mxu0 0.0
        %725 = vmatprep.subr.mxu0 0.0
        %726 = vmatpush1.xpose.msra.mxu0 0.0
        %727 = vmatprep.subr.mxu0 0.0
        %728 = vmatpush1.xpose.msra.mxu0 0.0
        %729 = vmatprep.subr.mxu0 0.0
        %730 = vmatpush1.xpose.msra.mxu0 0.0
        %731 = vmatprep.subr.mxu0 0.0
        %732 = vmatpush1.xpose.msra.mxu0 0.0
        %733 = vmatprep.subr.mxu0 0.0
        %734 = vmatpush1.xpose.msra.mxu0 0.0
        %735 = vmatprep.subr.mxu0 0.0
        %736 = vmatpush1.xpose.msra.mxu0 0.0
        %737 = vmatprep.mubr.f32.mxu0 0.0
        %738 = vmatmul.mubr.f32.gmra.mrb[0].mxu0 %v665
        %v739 = vpop.f32.mrb[0].mxu0
        %v740 = vadd.f32 %v567, %v739
        %v741 = vpop.f32.mrb[0].mxu0
        %742 = vmatprep.mubr.f32.mxu0 0.0
        %743 = vmatmul.mubr.f32.gmra.mrb[0].mxu0 %v667
        %v744 = vpop.f32.mrb[0].mxu0
        %v745 = vadd.f32 %v568, %v744
        %v746 = vpop.f32.mrb[0].mxu0
        %747 = vdwg.mxu0
        %748 = vrot.lane.b32.xlu0 %v488, 96
        %v749 = vpop.permute.xlu0 %748
        %750 = vrot.lane.b32.xlu0 %v490, 96
        %v751 = vpop.permute.xlu0 %750
        %v752 = vsel %vm577, %v474, 0
        %v754 = vsel %vm577, %v476, 0
        %v756 = vsel %vm577, %v749, 0
        %v758 = vsel %vm577, %v751, 0
        %760 = vmatprep.subr.mxu0 0.0
        %761 = vmatpush1.xpose.msra.mxu0 %v756
        %762 = vmatprep.subr.mxu0 0.0
        %763 = vmatpush1.xpose.msra.mxu0 %v758
        %764 = vmatprep.subr.mxu0 0.0
        %765 = vmatpush1.xpose.msra.mxu0 0.0
        %766 = vmatprep.subr.mxu0 0.0
        %767 = vmatpush1.xpose.msra.mxu0 0.0
        %768 = vmatprep.subr.mxu0 0.0
        %769 = vmatpush1.xpose.msra.mxu0 0.0
        %770 = vmatprep.subr.mxu0 0.0
        %771 = vmatpush1.xpose.msra.mxu0 0.0
        %772 = vmatprep.subr.mxu0 0.0
        %773 = vmatpush1.xpose.msra.mxu0 0.0
        %774 = vmatprep.subr.mxu0 0.0
        %775 = vmatpush1.xpose.msra.mxu0 0.0
        %776 = vmatprep.subr.mxu0 0.0
        %777 = vmatpush1.xpose.msra.mxu0 0.0
        %778 = vmatprep.subr.mxu0 0.0
        %779 = vmatpush1.xpose.msra.mxu0 0.0
        %780 = vmatprep.subr.mxu0 0.0
        %781 = vmatpush1.xpose.msra.mxu0 0.0
        %782 = vmatprep.subr.mxu0 0.0
        %783 = vmatpush1.xpose.msra.mxu0 0.0
        %784 = vmatprep.subr.mxu0 0.0
        %785 = vmatpush1.xpose.msra.mxu0 0.0
        %786 = vmatprep.subr.mxu0 0.0
        %787 = vmatpush1.xpose.msra.mxu0 0.0
        %788 = vmatprep.subr.mxu0 0.0
        %789 = vmatpush1.xpose.msra.mxu0 0.0
        %790 = vmatprep.subr.mxu0 0.0
        %791 = vmatpush1.xpose.msra.mxu0 0.0
        %792 = vmatprep.subr.mxu0 0.0
        %793 = vmatpush1.xpose.msra.mxu0 0.0
        %794 = vmatprep.subr.mxu0 0.0
        %795 = vmatpush1.xpose.msra.mxu0 0.0
        %796 = vmatprep.subr.mxu0 0.0
        %797 = vmatpush1.xpose.msra.mxu0 0.0
        %798 = vmatprep.subr.mxu0 0.0
        %799 = vmatpush1.xpose.msra.mxu0 0.0
        %800 = vmatprep.subr.mxu0 0.0
        %801 = vmatpush1.xpose.msra.mxu0 0.0
        %802 = vmatprep.subr.mxu0 0.0
        %803 = vmatpush1.xpose.msra.mxu0 0.0
        %804 = vmatprep.subr.mxu0 0.0
        %805 = vmatpush1.xpose.msra.mxu0 0.0
        %806 = vmatprep.subr.mxu0 0.0
        %807 = vmatpush1.xpose.msra.mxu0 0.0
        %808 = vmatprep.subr.mxu0 0.0
        %809 = vmatpush1.xpose.msra.mxu0 0.0
        %810 = vmatprep.subr.mxu0 0.0
        %811 = vmatpush1.xpose.msra.mxu0 0.0
        %812 = vmatprep.subr.mxu0 0.0
        %813 = vmatpush1.xpose.msra.mxu0 0.0
        %814 = vmatprep.subr.mxu0 0.0
        %815 = vmatpush1.xpose.msra.mxu0 0.0
        %816 = vmatprep.subr.mxu0 0.0
        %817 = vmatpush1.xpose.msra.mxu0 0.0
        %818 = vmatprep.subr.mxu0 0.0
        %819 = vmatpush1.xpose.msra.mxu0 0.0
        %820 = vmatprep.subr.mxu0 0.0
        %821 = vmatpush1.xpose.msra.mxu0 0.0
        %822 = vmatprep.subr.mxu0 0.0
        %823 = vmatpush1.xpose.msra.mxu0 0.0
        %824 = vmatprep.mubr.f32.mxu0 0.0
        %825 = vmatmul.mubr.f32.gmra.mrb[0].mxu0 %v752
        %v826 = vpop.f32.mrb[0].mxu0
        %v827 = vadd.f32 %v569, %v826
        %v828 = vpop.f32.mrb[0].mxu0
        %829 = vmatprep.mubr.f32.mxu0 0.0
        %830 = vmatmul.mubr.f32.gmra.mrb[0].mxu0 %v754
        %v831 = vpop.f32.mrb[0].mxu0
        %v832 = vadd.f32 %v570, %v831
        %v833 = vpop.f32.mrb[0].mxu0
        %834 = vdwg.mxu0
        %835 = vrot.lane.b32.xlu0 %v492, 96
        %v836 = vpop.permute.xlu0 %835
        %837 = vrot.lane.b32.xlu0 %v494, 96
        %v838 = vpop.permute.xlu0 %837
        %v839 = vsel %vm577, %v478, 0
        %v841 = vsel %vm577, %v480, 0
        %v843 = vsel %vm577, %v836, 0
        %v845 = vsel %vm577, %v838, 0
        %847 = vmatprep.subr.mxu0 0.0
        %848 = vmatpush1.xpose.msra.mxu0 %v843
        %849 = vmatprep.subr.mxu0 0.0
        %850 = vmatpush1.xpose.msra.mxu0 %v845
        %851 = vmatprep.subr.mxu0 0.0
        %852 = vmatpush1.xpose.msra.mxu0 0.0
        %853 = vmatprep.subr.mxu0 0.0
        %854 = vmatpush1.xpose.msra.mxu0 0.0
        %855 = vmatprep.subr.mxu0 0.0
        %856 = vmatpush1.xpose.msra.mxu0 0.0
        %857 = vmatprep.subr.mxu0 0.0
        %858 = vmatpush1.xpose.msra.mxu0 0.0
        %859 = vmatprep.subr.mxu0 0.0
        %860 = vmatpush1.xpose.msra.mxu0 0.0
        %861 = vmatprep.subr.mxu0 0.0
        %862 = vmatpush1.xpose.msra.mxu0 0.0
        %863 = vmatprep.subr.mxu0 0.0
        %864 = vmatpush1.xpose.msra.mxu0 0.0
        %865 = vmatprep.subr.mxu0 0.0
        %866 = vmatpush1.xpose.msra.mxu0 0.0
        %867 = vmatprep.subr.mxu0 0.0
        %868 = vmatpush1.xpose.msra.mxu0 0.0
        %869 = vmatprep.subr.mxu0 0.0
        %870 = vmatpush1.xpose.msra.mxu0 0.0
        %871 = vmatprep.subr.mxu0 0.0
        %872 = vmatpush1.xpose.msra.mxu0 0.0
        %873 = vmatprep.subr.mxu0 0.0
        %874 = vmatpush1.xpose.msra.mxu0 0.0
        %875 = vmatprep.subr.mxu0 0.0
        %876 = vmatpush1.xpose.msra.mxu0 0.0
        %877 = vmatprep.subr.mxu0 0.0
        %878 = vmatpush1.xpose.msra.mxu0 0.0
        %879 = vmatprep.subr.mxu0 0.0
        %880 = vmatpush1.xpose.msra.mxu0 0.0
        %881 = vmatprep.subr.mxu0 0.0
        %882 = vmatpush1.xpose.msra.mxu0 0.0
        %883 = vmatprep.subr.mxu0 0.0
        %884 = vmatpush1.xpose.msra.mxu0 0.0
        %885 = vmatprep.subr.mxu0 0.0
        %886 = vmatpush1.xpose.msra.mxu0 0.0
        %887 = vmatprep.subr.mxu0 0.0
        %888 = vmatpush1.xpose.msra.mxu0 0.0
        %889 = vmatprep.subr.mxu0 0.0
        %890 = vmatpush1.xpose.msra.mxu0 0.0
        %891 = vmatprep.subr.mxu0 0.0
        %892 = vmatpush1.xpose.msra.mxu0 0.0
        %893 = vmatprep.subr.mxu0 0.0
        %894 = vmatpush1.xpose.msra.mxu0 0.0
        %895 = vmatprep.subr.mxu0 0.0
        %896 = vmatpush1.xpose.msra.mxu0 0.0
        %897 = vmatprep.subr.mxu0 0.0
        %898 = vmatpush1.xpose.msra.mxu0 0.0
        %899 = vmatprep.subr.mxu0 0.0
        %900 = vmatpush1.xpose.msra.mxu0 0.0
        %901 = vmatprep.subr.mxu0 0.0
        %902 = vmatpush1.xpose.msra.mxu0 0.0
        %903 = vmatprep.subr.mxu0 0.0
        %904 = vmatpush1.xpose.msra.mxu0 0.0
        %905 = vmatprep.subr.mxu0 0.0
        %906 = vmatpush1.xpose.msra.mxu0 0.0
        %907 = vmatprep.subr.mxu0 0.0
        %908 = vmatpush1.xpose.msra.mxu0 0.0
        %909 = vmatprep.subr.mxu0 0.0
        %910 = vmatpush1.xpose.msra.mxu0 0.0
        %911 = vmatprep.mubr.f32.mxu0 0.0
        %912 = vmatmul.mubr.f32.gmra.mrb[0].mxu0 %v839
        %v913 = vpop.f32.mrb[0].mxu0
        %v914 = vadd.f32 %v571, %v913
        %v915 = vpop.f32.mrb[0].mxu0
        %916 = vmatprep.mubr.f32.mxu0 0.0
        %917 = vmatmul.mubr.f32.gmra.mrb[0].mxu0 %v841
        %v918 = vpop.f32.mrb[0].mxu0
        %v919 = vadd.f32 %v572, %v918
        %v920 = vpop.f32.mrb[0].mxu0
        %921 = vdwg.mxu0
        %v922 = vsel %vm341, %v653, -inf
        %923 = vmax.xlane.f32.xlu0 %v922
        %v924 = vpop.xlane.xlu0 %923
        %v925 = vsel %vm341, %v658, -inf
        %926 = vmax.xlane.f32.xlu0 %v925
        %v927 = vpop.xlane.xlu0 %926
        %v928 = vsel %vm341, %v740, -inf
        %929 = vmax.xlane.f32.xlu0 %v928
        %v930 = vpop.xlane.xlu0 %929
        %v931 = vsel %vm341, %v745, -inf
        %932 = vmax.xlane.f32.xlu0 %v931
        %v933 = vpop.xlane.xlu0 %932
        %v934 = vsel %vm341, %v827, -inf
        %935 = vmax.xlane.f32.xlu0 %v934
        %v936 = vpop.xlane.xlu0 %935
        %v937 = vsel %vm341, %v832, -inf
        %938 = vmax.xlane.f32.xlu0 %v937
        %v939 = vpop.xlane.xlu0 %938
        %v940 = vsel %vm341, %v914, -inf
        %941 = vmax.xlane.f32.xlu0 %v940
        %v942 = vpop.xlane.xlu0 %941
        %v943 = vsel %vm341, %v919, -inf
        %944 = vmax.xlane.f32.xlu0 %v943
        %v945 = vpop.xlane.xlu0 %944
        %v946 = vsub.f32 %v653, %v924
        %v947 = vsub.f32 %v658, %v927
        %v948 = vsub.f32 %v740, %v930
        %v949 = vsub.f32 %v745, %v933
        %v950 = vsub.f32 %v827, %v936
        %v951 = vsub.f32 %v832, %v939
        %v952 = vsub.f32 %v914, %v942
        %v953 = vsub.f32 %v919, %v945
        %v954 = vmul.f32 %v946, 1.442695
        %v955 = vpow.pop %v954
        %v956 = vmul.f32 %v947, 1.442695
        %v957 = vpow.pop %v956
        %v958 = vmul.f32 %v948, 1.442695
        %v959 = vpow.pop %v958
        %v960 = vmul.f32 %v949, 1.442695
        %v961 = vpow.pop %v960
        %v962 = vmul.f32 %v950, 1.442695
        %v963 = vpow.pop %v962
        %v964 = vmul.f32 %v951, 1.442695
        %v965 = vpow.pop %v964
        %v966 = vmul.f32 %v952, 1.442695
        %v967 = vpow.pop %v966
        %v968 = vmul.f32 %v953, 1.442695
        %v969 = vpow.pop %v968
        %v970 = vsel %vm341, %v955, 0.0
        %971 = vadd.xlane.f32.xlu0 %v970
        %v972 = vpop.xlane.xlu0 %971
        %v973 = vsel %vm341, %v957, 0.0
        %974 = vadd.xlane.f32.xlu0 %v973
        %v975 = vpop.xlane.xlu0 %974
        %v976 = vsel %vm341, %v959, 0.0
        %977 = vadd.xlane.f32.xlu0 %v976
        %v978 = vpop.xlane.xlu0 %977
        %v979 = vsel %vm341, %v961, 0.0
        %980 = vadd.xlane.f32.xlu0 %v979
        %v981 = vpop.xlane.xlu0 %980
        %v982 = vsel %vm341, %v963, 0.0
        %983 = vadd.xlane.f32.xlu0 %v982
        %v984 = vpop.xlane.xlu0 %983
        %v985 = vsel %vm341, %v965, 0.0
        %986 = vadd.xlane.f32.xlu0 %v985
        %v987 = vpop.xlane.xlu0 %986
        %v988 = vsel %vm341, %v967, 0.0
        %989 = vadd.xlane.f32.xlu0 %v988
        %v990 = vpop.xlane.xlu0 %989
        %v991 = vsel %vm341, %v969, 0.0
        %992 = vadd.xlane.f32.xlu0 %v991
        %v993 = vpop.xlane.xlu0 %992
        %v994 = vrcp.pop %v972
        %v995 = vrcp.pop %v975
        %v996 = vrcp.pop %v978
        %v997 = vrcp.pop %v981
        %v998 = vrcp.pop %v984
        %v999 = vrcp.pop %v987
        %v1000 = vrcp.pop %v990
        %v1001 = vrcp.pop %v993
        %v1002 = vmul.f32 %v955, %v994
        %v1003 = vmul.f32 %v957, %v995
        %v1004 = vmul.f32 %v959, %v996
        %v1005 = vmul.f32 %v961, %v997
        %v1006 = vmul.f32 %v963, %v998
        %v1007 = vmul.f32 %v965, %v999
        %v1008 = vmul.f32 %v967, %v1000
        %v1009 = vmul.f32 %v969, %v1001
        %v1010 = vmul.f32 %v1002, %v319
        %v1011 = vmul.f32 %v1003, %v320
        %v1012 = vmul.f32 %v1004, %v319
        %v1013 = vmul.f32 %v1005, %v320
        %v1014 = vmul.f32 %v1006, %v319
        %v1015 = vmul.f32 %v1007, %v320
        %v1016 = vmul.f32 %v1008, %v319
        %v1017 = vmul.f32 %v1009, %v320
        %v1018 = vsel %vm341, %v1010, 0.0
        %1019 = vadd.xlane.f32.xlu0 %v1018
        %v1020 = vpop.xlane.xlu0 %1019
        %v1021 = vsel %vm341, %v1011, 0.0
        %1022 = vadd.xlane.f32.xlu0 %v1021
        %v1023 = vpop.xlane.xlu0 %1022
        %v1024 = vsel %vm341, %v1012, 0.0
        %1025 = vadd.xlane.f32.xlu0 %v1024
        %v1026 = vpop.xlane.xlu0 %1025
        %v1027 = vsel %vm341, %v1013, 0.0
        %1028 = vadd.xlane.f32.xlu0 %v1027
        %v1029 = vpop.xlane.xlu0 %1028
        %v1030 = vsel %vm341, %v1014, 0.0
        %1031 = vadd.xlane.f32.xlu0 %v1030
        %v1032 = vpop.xlane.xlu0 %1031
        %v1033 = vsel %vm341, %v1015, 0.0
        %1034 = vadd.xlane.f32.xlu0 %v1033
        %v1035 = vpop.xlane.xlu0 %1034
        %v1036 = vsel %vm341, %v1016, 0.0
        %1037 = vadd.xlane.f32.xlu0 %v1036
        %v1038 = vpop.xlane.xlu0 %1037
        %v1039 = vsel %vm341, %v1017, 0.0
        %1040 = vadd.xlane.f32.xlu0 %v1039
        %v1041 = vpop.xlane.xlu0 %1040
        %v1042 = vlaneseq
        %v1043 = vshrl.u32 %v1042, 7
        %v1044 = vsub.s32 4, %v1043
        %v1045 = vrot.slane %v339, %v1044
        %v1046 = vlaneseq
        %v1047 = vshrl.u32 %v1046, 7
        %v1048 = vsub.s32 4, %v1047
        %v1049 = vrot.slane %v511, %v1048
        %v1050 = vlaneseq
        %v1051 = vshrl.u32 %v1050, 7
        %v1052 = vsub.s32 4, %v1051
        %v1053 = vrot.slane %v514, %v1052
        %v1054 = vlaneseq
        %v1055 = vshrl.u32 %v1054, 7
        %v1056 = vsub.s32 4, %v1055
        %v1057 = vrot.slane %v517, %v1056
        %v1058 = vmul.f32 %v1020, %v1045
        %v1059 = vmul.f32 %v1023, %v1045
        %v1060 = vmul.f32 %v1026, %v1049
        %v1061 = vmul.f32 %v1029, %v1049
        %v1062 = vmul.f32 %v1032, %v1053
        %v1063 = vmul.f32 %v1035, %v1053
        %v1064 = vmul.f32 %v1038, %v1057
        %v1065 = vmul.f32 %v1041, %v1057
        %1066 = vrot.lane.b32.xlu0 %v449, 64
        %v1067 = vpop.permute.xlu0 %1066
        %1068 = vrot.lane.b32.xlu0 %v450, 64
        %v1069 = vpop.permute.xlu0 %1068
        %v1073 = vsel %vm341, %v1002, 0
        %v1076 = vsel %vm341, %v1003, 0
        %1078 = vmatprep.subr.mxu0 0.0
        %1079 = vmatpush1.msra.mxu0 %v1067
        %1080 = vmatprep.subr.mxu0 0.0
        %1081 = vmatpush1.msra.mxu0 %v1069
        %1082 = vmatprep.subr.mxu0 0.0
        %1083 = vmatpush1.msra.mxu0 0.0
        %1084 = vmatprep.subr.mxu0 0.0
        %1085 = vmatpush1.msra.mxu0 0.0
        %1086 = vmatprep.subr.mxu0 0.0
        %1087 = vmatpush1.msra.mxu0 0.0
        %1088 = vmatprep.subr.mxu0 0.0
        %1089 = vmatpush1.msra.mxu0 0.0
        %1090 = vmatprep.subr.mxu0 0.0
        %1091 = vmatpush1.msra.mxu0 0.0
        %1092 = vmatprep.subr.mxu0 0.0
        %1093 = vmatpush1.msra.mxu0 0.0
        %1094 = vmatprep.subr.mxu0 0.0
        %1095 = vmatpush1.msra.mxu0 0.0
        %1096 = vmatprep.subr.mxu0 0.0
        %1097 = vmatpush1.msra.mxu0 0.0
        %1098 = vmatprep.subr.mxu0 0.0
        %1099 = vmatpush1.msra.mxu0 0.0
        %1100 = vmatprep.subr.mxu0 0.0
        %1101 = vmatpush1.msra.mxu0 0.0
        %1102 = vmatprep.subr.mxu0 0.0
        %1103 = vmatpush1.msra.mxu0 0.0
        %1104 = vmatprep.subr.mxu0 0.0
        %1105 = vmatpush1.msra.mxu0 0.0
        %1106 = vmatprep.subr.mxu0 0.0
        %1107 = vmatpush1.msra.mxu0 0.0
        %1108 = vmatprep.subr.mxu0 0.0
        %1109 = vmatpush1.msra.mxu0 0.0
        %1110 = vmatprep.subr.mxu0 0.0
        %1111 = vmatpush1.msra.mxu0 0.0
        %1112 = vmatprep.subr.mxu0 0.0
        %1113 = vmatpush1.msra.mxu0 0.0
        %1114 = vmatprep.subr.mxu0 0.0
        %1115 = vmatpush1.msra.mxu0 0.0
        %1116 = vmatprep.subr.mxu0 0.0
        %1117 = vmatpush1.msra.mxu0 0.0
        %1118 = vmatprep.subr.mxu0 0.0
        %1119 = vmatpush1.msra.mxu0 0.0
        %1120 = vmatprep.subr.mxu0 0.0
        %1121 = vmatpush1.msra.mxu0 0.0
        %1122 = vmatprep.subr.mxu0 0.0
        %1123 = vmatpush1.msra.mxu0 0.0
        %1124 = vmatprep.subr.mxu0 0.0
        %1125 = vmatpush1.msra.mxu0 0.0
        %1126 = vmatprep.subr.mxu0 0.0
        %1127 = vmatpush1.msra.mxu0 0.0
        %1128 = vmatprep.subr.mxu0 0.0
        %1129 = vmatpush1.msra.mxu0 0.0
        %1130 = vmatprep.subr.mxu0 0.0
        %1131 = vmatpush1.msra.mxu0 0.0
        %1132 = vmatprep.subr.mxu0 0.0
        %1133 = vmatpush1.msra.mxu0 0.0
        %1134 = vmatprep.subr.mxu0 0.0
        %1135 = vmatpush1.msra.mxu0 0.0
        %1136 = vmatprep.subr.mxu0 0.0
        %1137 = vmatpush1.msra.mxu0 0.0
        %1138 = vmatprep.subr.mxu0 0.0
        %1139 = vmatpush1.msra.mxu0 0.0
        %1140 = vmatprep.subr.mxu0 0.0
        %1141 = vmatpush1.msra.mxu0 0.0
        %1142 = vmatprep.mubr.f32.mxu0 0.0
        %1143 = vmatmul.mubr.f32.gmra.mrb[0].mxu0 %v1073
        %v1144 = vpop.f32.mrb[0].mxu0
        %v1145 = vadd.f32 %v1058, %v1144
        %v1146 = vpop.f32.mrb[0].mxu0
        %1147 = vmatprep.mubr.f32.mxu0 0.0
        %1148 = vmatmul.mubr.f32.gmra.mrb[0].mxu0 %v1076
        %v1149 = vpop.f32.mrb[0].mxu0
        %v1150 = vadd.f32 %v1059, %v1149
        %v1151 = vpop.f32.mrb[0].mxu0
        %1152 = vdwg.mxu0
        %1153 = vrot.lane.b32.xlu0 %v498, 64
        %v1154 = vpop.permute.xlu0 %1153
        %1155 = vrot.lane.b32.xlu0 %v500, 64
        %v1156 = vpop.permute.xlu0 %1155
        %v1160 = vsel %vm341, %v1004, 0
        %v1163 = vsel %vm341, %v1005, 0
        %1165 = vmatprep.subr.mxu0 0.0
        %1166 = vmatpush1.msra.mxu0 %v1154
        %1167 = vmatprep.subr.mxu0 0.0
        %1168 = vmatpush1.msra.mxu0 %v1156
        %1169 = vmatprep.subr.mxu0 0.0
        %1170 = vmatpush1.msra.mxu0 0.0
        %1171 = vmatprep.subr.mxu0 0.0
        %1172 = vmatpush1.msra.mxu0 0.0
        %1173 = vmatprep.subr.mxu0 0.0
        %1174 = vmatpush1.msra.mxu0 0.0
        %1175 = vmatprep.subr.mxu0 0.0
        %1176 = vmatpush1.msra.mxu0 0.0
        %1177 = vmatprep.subr.mxu0 0.0
        %1178 = vmatpush1.msra.mxu0 0.0
        %1179 = vmatprep.subr.mxu0 0.0
        %1180 = vmatpush1.msra.mxu0 0.0
        %1181 = vmatprep.subr.mxu0 0.0
        %1182 = vmatpush1.msra.mxu0 0.0
        %1183 = vmatprep.subr.mxu0 0.0
        %1184 = vmatpush1.msra.mxu0 0.0
        %1185 = vmatprep.subr.mxu0 0.0
        %1186 = vmatpush1.msra.mxu0 0.0
        %1187 = vmatprep.subr.mxu0 0.0
        %1188 = vmatpush1.msra.mxu0 0.0
        %1189 = vmatprep.subr.mxu0 0.0
        %1190 = vmatpush1.msra.mxu0 0.0
        %1191 = vmatprep.subr.mxu0 0.0
        %1192 = vmatpush1.msra.mxu0 0.0
        %1193 = vmatprep.subr.mxu0 0.0
        %1194 = vmatpush1.msra.mxu0 0.0
        %1195 = vmatprep.subr.mxu0 0.0
        %1196 = vmatpush1.msra.mxu0 0.0
        %1197 = vmatprep.subr.mxu0 0.0
        %1198 = vmatpush1.msra.mxu0 0.0
        %1199 = vmatprep.subr.mxu0 0.0
        %1200 = vmatpush1.msra.mxu0 0.0
        %1201 = vmatprep.subr.mxu0 0.0
        %1202 = vmatpush1.msra.mxu0 0.0
        %1203 = vmatprep.subr.mxu0 0.0
        %1204 = vmatpush1.msra.mxu0 0.0
        %1205 = vmatprep.subr.mxu0 0.0
        %1206 = vmatpush1.msra.mxu0 0.0
        %1207 = vmatprep.subr.mxu0 0.0
        %1208 = vmatpush1.msra.mxu0 0.0
        %1209 = vmatprep.subr.mxu0 0.0
        %1210 = vmatpush1.msra.mxu0 0.0
        %1211 = vmatprep.subr.mxu0 0.0
        %1212 = vmatpush1.msra.mxu0 0.0
        %1213 = vmatprep.subr.mxu0 0.0
        %1214 = vmatpush1.msra.mxu0 0.0
        %1215 = vmatprep.subr.mxu0 0.0
        %1216 = vmatpush1.msra.mxu0 0.0
        %1217 = vmatprep.subr.mxu0 0.0
        %1218 = vmatpush1.msra.mxu0 0.0
        %1219 = vmatprep.subr.mxu0 0.0
        %1220 = vmatpush1.msra.mxu0 0.0
        %1221 = vmatprep.subr.mxu0 0.0
        %1222 = vmatpush1.msra.mxu0 0.0
        %1223 = vmatprep.subr.mxu0 0.0
        %1224 = vmatpush1.msra.mxu0 0.0
        %1225 = vmatprep.subr.mxu0 0.0
        %1226 = vmatpush1.msra.mxu0 0.0
        %1227 = vmatprep.subr.mxu0 0.0
        %1228 = vmatpush1.msra.mxu0 0.0
        %1229 = vmatprep.mubr.f32.mxu0 0.0
        %1230 = vmatmul.mubr.f32.gmra.mrb[0].mxu0 %v1160
        %v1231 = vpop.f32.mrb[0].mxu0
        %v1232 = vadd.f32 %v1060, %v1231
        %v1233 = vpop.f32.mrb[0].mxu0
        %1234 = vmatprep.mubr.f32.mxu0 0.0
        %1235 = vmatmul.mubr.f32.gmra.mrb[0].mxu0 %v1163
        %v1236 = vpop.f32.mrb[0].mxu0
        %v1237 = vadd.f32 %v1061, %v1236
        %v1238 = vpop.f32.mrb[0].mxu0
        %1239 = vdwg.mxu0
        %1240 = vrot.lane.b32.xlu0 %v502, 64
        %v1241 = vpop.permute.xlu0 %1240
        %1242 = vrot.lane.b32.xlu0 %v504, 64
        %v1243 = vpop.permute.xlu0 %1242
        %v1247 = vsel %vm341, %v1006, 0
        %v1250 = vsel %vm341, %v1007, 0
        %1252 = vmatprep.subr.mxu0 0.0
        %1253 = vmatpush1.msra.mxu0 %v1241
        %1254 = vmatprep.subr.mxu0 0.0
        %1255 = vmatpush1.msra.mxu0 %v1243
        %1256 = vmatprep.subr.mxu0 0.0
        %1257 = vmatpush1.msra.mxu0 0.0
        %1258 = vmatprep.subr.mxu0 0.0
        %1259 = vmatpush1.msra.mxu0 0.0
        %1260 = vmatprep.subr.mxu0 0.0
        %1261 = vmatpush1.msra.mxu0 0.0
        %1262 = vmatprep.subr.mxu0 0.0
        %1263 = vmatpush1.msra.mxu0 0.0
        %1264 = vmatprep.subr.mxu0 0.0
        %1265 = vmatpush1.msra.mxu0 0.0
        %1266 = vmatprep.subr.mxu0 0.0
        %1267 = vmatpush1.msra.mxu0 0.0
        %1268 = vmatprep.subr.mxu0 0.0
        %1269 = vmatpush1.msra.mxu0 0.0
        %1270 = vmatprep.subr.mxu0 0.0
        %1271 = vmatpush1.msra.mxu0 0.0
        %1272 = vmatprep.subr.mxu0 0.0
        %1273 = vmatpush1.msra.mxu0 0.0
        %1274 = vmatprep.subr.mxu0 0.0
        %1275 = vmatpush1.msra.mxu0 0.0
        %1276 = vmatprep.subr.mxu0 0.0
        %1277 = vmatpush1.msra.mxu0 0.0
        %1278 = vmatprep.subr.mxu0 0.0
        %1279 = vmatpush1.msra.mxu0 0.0
        %1280 = vmatprep.subr.mxu0 0.0
        %1281 = vmatpush1.msra.mxu0 0.0
        %1282 = vmatprep.subr.mxu0 0.0
        %1283 = vmatpush1.msra.mxu0 0.0
        %1284 = vmatprep.subr.mxu0 0.0
        %1285 = vmatpush1.msra.mxu0 0.0
        %1286 = vmatprep.subr.mxu0 0.0
        %1287 = vmatpush1.msra.mxu0 0.0
        %1288 = vmatprep.subr.mxu0 0.0
        %1289 = vmatpush1.msra.mxu0 0.0
        %1290 = vmatprep.subr.mxu0 0.0
        %1291 = vmatpush1.msra.mxu0 0.0
        %1292 = vmatprep.subr.mxu0 0.0
        %1293 = vmatpush1.msra.mxu0 0.0
        %1294 = vmatprep.subr.mxu0 0.0
        %1295 = vmatpush1.msra.mxu0 0.0
        %1296 = vmatprep.subr.mxu0 0.0
        %1297 = vmatpush1.msra.mxu0 0.0
        %1298 = vmatprep.subr.mxu0 0.0
        %1299 = vmatpush1.msra.mxu0 0.0
        %1300 = vmatprep.subr.mxu0 0.0
        %1301 = vmatpush1.msra.mxu0 0.0
        %1302 = vmatprep.subr.mxu0 0.0
        %1303 = vmatpush1.msra.mxu0 0.0
        %1304 = vmatprep.subr.mxu0 0.0
        %1305 = vmatpush1.msra.mxu0 0.0
        %1306 = vmatprep.subr.mxu0 0.0
        %1307 = vmatpush1.msra.mxu0 0.0
        %1308 = vmatprep.subr.mxu0 0.0
        %1309 = vmatpush1.msra.mxu0 0.0
        %1310 = vmatprep.subr.mxu0 0.0
        %1311 = vmatpush1.msra.mxu0 0.0
        %1312 = vmatprep.subr.mxu0 0.0
        %1313 = vmatpush1.msra.mxu0 0.0
        %1314 = vmatprep.subr.mxu0 0.0
        %1315 = vmatpush1.msra.mxu0 0.0
        %1316 = vmatprep.mubr.f32.mxu0 0.0
        %1317 = vmatmul.mubr.f32.gmra.mrb[0].mxu0 %v1247
        %v1318 = vpop.f32.mrb[0].mxu0
        %v1319 = vadd.f32 %v1062, %v1318
        %v1320 = vpop.f32.mrb[0].mxu0
        %1321 = vmatprep.mubr.f32.mxu0 0.0
        %1322 = vmatmul.mubr.f32.gmra.mrb[0].mxu0 %v1250
        %v1323 = vpop.f32.mrb[0].mxu0
        %v1324 = vadd.f32 %v1063, %v1323
        %v1325 = vpop.f32.mrb[0].mxu0
        %1326 = vdwg.mxu0
        %1327 = vrot.lane.b32.xlu0 %v506, 64
        %v1328 = vpop.permute.xlu0 %1327
        %1329 = vrot.lane.b32.xlu0 %v508, 64
        %v1330 = vpop.permute.xlu0 %1329
        %v1334 = vsel %vm341, %v1008, 0
        %v1337 = vsel %vm341, %v1009, 0
        %1339 = vmatprep.subr.mxu0 0.0
        %1340 = vmatpush1.msra.mxu0 %v1328
        %1341 = vmatprep.subr.mxu0 0.0
        %1342 = vmatpush1.msra.mxu0 %v1330
        %1343 = vmatprep.subr.mxu0 0.0
        %1344 = vmatpush1.msra.mxu0 0.0
        %1345 = vmatprep.subr.mxu0 0.0
        %1346 = vmatpush1.msra.mxu0 0.0
        %1347 = vmatprep.subr.mxu0 0.0
        %1348 = vmatpush1.msra.mxu0 0.0
        %1349 = vmatprep.subr.mxu0 0.0
        %1350 = vmatpush1.msra.mxu0 0.0
        %1351 = vmatprep.subr.mxu0 0.0
        %1352 = vmatpush1.msra.mxu0 0.0
        %1353 = vmatprep.subr.mxu0 0.0
        %1354 = vmatpush1.msra.mxu0 0.0
        %1355 = vmatprep.subr.mxu0 0.0
        %1356 = vmatpush1.msra.mxu0 0.0
        %1357 = vmatprep.subr.mxu0 0.0
        %1358 = vmatpush1.msra.mxu0 0.0
        %1359 = vmatprep.subr.mxu0 0.0
        %1360 = vmatpush1.msra.mxu0 0.0
        %1361 = vmatprep.subr.mxu0 0.0
        %1362 = vmatpush1.msra.mxu0 0.0
        %1363 = vmatprep.subr.mxu0 0.0
        %1364 = vmatpush1.msra.mxu0 0.0
        %1365 = vmatprep.subr.mxu0 0.0
        %1366 = vmatpush1.msra.mxu0 0.0
        %1367 = vmatprep.subr.mxu0 0.0
        %1368 = vmatpush1.msra.mxu0 0.0
        %1369 = vmatprep.subr.mxu0 0.0
        %1370 = vmatpush1.msra.mxu0 0.0
        %1371 = vmatprep.subr.mxu0 0.0
        %1372 = vmatpush1.msra.mxu0 0.0
        %1373 = vmatprep.subr.mxu0 0.0
        %1374 = vmatpush1.msra.mxu0 0.0
        %1375 = vmatprep.subr.mxu0 0.0
        %1376 = vmatpush1.msra.mxu0 0.0
        %1377 = vmatprep.subr.mxu0 0.0
        %1378 = vmatpush1.msra.mxu0 0.0
        %1379 = vmatprep.subr.mxu0 0.0
        %1380 = vmatpush1.msra.mxu0 0.0
        %1381 = vmatprep.subr.mxu0 0.0
        %1382 = vmatpush1.msra.mxu0 0.0
        %1383 = vmatprep.subr.mxu0 0.0
        %1384 = vmatpush1.msra.mxu0 0.0
        %1385 = vmatprep.subr.mxu0 0.0
        %1386 = vmatpush1.msra.mxu0 0.0
        %1387 = vmatprep.subr.mxu0 0.0
        %1388 = vmatpush1.msra.mxu0 0.0
        %1389 = vmatprep.subr.mxu0 0.0
        %1390 = vmatpush1.msra.mxu0 0.0
        %1391 = vmatprep.subr.mxu0 0.0
        %1392 = vmatpush1.msra.mxu0 0.0
        %1393 = vmatprep.subr.mxu0 0.0
        %1394 = vmatpush1.msra.mxu0 0.0
        %1395 = vmatprep.subr.mxu0 0.0
        %1396 = vmatpush1.msra.mxu0 0.0
        %1397 = vmatprep.subr.mxu0 0.0
        %1398 = vmatpush1.msra.mxu0 0.0
        %1399 = vmatprep.subr.mxu0 0.0
        %1400 = vmatpush1.msra.mxu0 0.0
        %1401 = vmatprep.subr.mxu0 0.0
        %1402 = vmatpush1.msra.mxu0 0.0
        %1403 = vmatprep.mubr.f32.mxu0 0.0
        %1404 = vmatmul.mubr.f32.gmra.mrb[0].mxu0 %v1334
        %v1405 = vpop.f32.mrb[0].mxu0
        %v1406 = vadd.f32 %v1064, %v1405
        %v1407 = vpop.f32.mrb[0].mxu0
        %1408 = vmatprep.mubr.f32.mxu0 0.0
        %1409 = vmatmul.mubr.f32.gmra.mrb[0].mxu0 %v1337
        %v1410 = vpop.f32.mrb[0].mxu0
        %v1411 = vadd.f32 %v1065, %v1410
        %v1412 = vpop.f32.mrb[0].mxu0
        %1413 = vdwg.mxu0
        %1416 = vrot.lane.b32.xlu0 %v1232, 8
        %v1417 = vpop.permute.xlu0 %1416
        %1418 = vrot.lane.b32.xlu0 %v1237, 8
        %v1419 = vpop.permute.xlu0 %1418
        %1424 = vrot.lane.b32.xlu0 %v1319, 16
        %v1425 = vpop.permute.xlu0 %1424
        %1426 = vrot.lane.b32.xlu0 %v1324, 16
        %v1427 = vpop.permute.xlu0 %1426
        %1432 = vrot.lane.b32.xlu0 %v1406, 24
        %v1433 = vpop.permute.xlu0 %1432
        %1434 = vrot.lane.b32.xlu0 %v1411, 24
        %v1435 = vpop.permute.xlu0 %1434
        %v1438 = vsel %vm577, %v1145, %v1417
        %v1439 = vsel %vm577, %v1150, %v1419
        %v1440 = vsel %vm341, %v1438, %v1425
        %v1441 = vsel %vm341, %v1439, %v1427
        %vm1442 = vcmask 195584
        %v1443 = vsel %vm1442, %v1440, %v1433
        %v1444 = vsel %vm1442, %v1441, %v1435
        %1447 = vrot.lane.b32.xlu0 %v459, 32
        %v1448 = vpop.permute.xlu0 %1447
        %1449 = vrot.lane.b32.xlu0 %v460, 32
        %v1450 = vpop.permute.xlu0 %1449
        %v1453 = vadd.f32 %v1443, %v1448
        %v1454 = vadd.f32 %v1444, %v1450
        %v1455 = vld [vmem:[#allocation7] sm:$0xff]
        %vm1456 = vcmask 261120
        %v1457 = vsel %vm1456, %v1453, 0.0
        %v1458 = vsel %vm1456, %v1454, 0.0
        %v1459 = vadd.f32 %v1457, %v1458
        %v1460 = vrot.slane %v1459, 4
        %v1461 = vadd.f32 %v1459, %v1460
        %v1462 = vrot.slane %v1461, 2
        %v1463 = vadd.f32 %v1461, %v1462
        %v1464 = vrot.slane %v1463, 1
        %v1465 = vadd.f32 %v1463, %v1464
        %v1466 = vrcp.pop 16.0
        %v1467 = vmul.f32 %v1465, %v1466
        %v1468 = vmul.f32 %v1455, %v1467
        %v1469 = vlaneseq
        %v1470 = vshrl.u32 %v1469, 7
        %v1471 = vsub.s32 7, %v1470
        %v1472 = vrot.slane %v1468, %v1471
        %v1473 = vsub.f32 %v1453, %v1472
        %v1474 = vsub.f32 %v1454, %v1472
        %v1475 = vmul.f32 %v1473, %v1473
        %v1476 = vmul.f32 %v1474, %v1474
        %v1477 = vsel %vm1456, %v1475, 0.0
        %v1478 = vsel %vm1456, %v1476, 0.0
        %v1479 = vadd.f32 %v1477, %v1478
        %v1480 = vrot.slane %v1479, 4
        %v1481 = vadd.f32 %v1479, %v1480
        %v1482 = vrot.slane %v1481, 2
        %v1483 = vadd.f32 %v1481, %v1482
        %v1484 = vrot.slane %v1483, 1
        %v1485 = vadd.f32 %v1483, %v1484
        %v1486 = vmul.f32 %v1485, %v1466
        %v1487 = vlaneseq
        %v1488 = vshrl.u32 %v1487, 7
        %v1489 = vsub.s32 5, %v1488
        %v1490 = vrot.slane %v1455, %v1489
        %v1491 = vmul.f32 %v1490, %v1473
        %v1492 = vmul.f32 %v1490, %v1474
        %v1493 = vadd.f32 %v1486, 1e-05
        %v1494 = vrsqrt.pop %v1493
        %v1495 = vmul.f32 %v1491, %v1494
        %v1496 = vmul.f32 %v1492, %v1494
        %v1497 = vlaneseq
        %v1498 = vshrl.u32 %v1497, 7
        %v1499 = vsub.s32 6, %v1498
        %v1500 = vrot.slane %v1455, %v1499
        %v1501 = vadd.f32 %v1495, %v1500
        %v1502 = vadd.f32 %v1496, %v1500
        %v1503 = vld [vmem:[#allocation8] sm:$0xff]
        %v1504 = vld [vmem:[#allocation8 + $0x8] sm:$0xff]
        %v1505 = vld [vmem:[#allocation8 + $0x10] sm:$0xff]
        %v1506 = vld [vmem:[#allocation8 + $0x18] sm:$0xff]
        %v1507 = vld [vmem:[#allocation8 + $0x20] sm:$0xff]
        %v1508 = vld [vmem:[#allocation8 + $0x28] sm:$0xff]
        %v1509 = vld [vmem:[#allocation8 + $0x30] sm:$0xff]
        %v1510 = vld [vmem:[#allocation8 + $0x38] sm:$0xff]
        %v1511 = vld [vmem:[#allocation8 + $0x40] sm:$0xff]
        %v1512 = vld [vmem:[#allocation8 + $0x48] sm:$0xff]
        %v1513 = vld [vmem:[#allocation8 + $0x50] sm:$0xff]
        %v1514 = vld [vmem:[#allocation8 + $0x58] sm:$0xff]
        %v1515 = vld [vmem:[#allocation10] sm:$0xff]
        %v1516 = vld [vmem:[#allocation10 + $0x8] sm:$0x1]
        %v1518 = vsel %vm1456, %v1501, 0
        %v1521 = vsel %vm1456, %v1502, 0
        %1523 = vmatprep.subr.mxu0 %v1504
        %1524 = vmatpush1.msra.mxu0 %v1503
        %1525 = vmatprep.subr.mxu0 %v1507
        %1526 = vmatpush1.msra.mxu0 %v1506
        %1527 = vmatprep.subr.mxu0 %v1510
        %1528 = vmatpush1.msra.mxu0 %v1509
        %1529 = vmatprep.subr.mxu0 %v1513
        %1530 = vmatpush1.msra.mxu0 %v1512
        %1531 = vmatprep.subr.mxu0 0.0
        %1532 = vmatpush1.msra.mxu0 0.0
        %1533 = vmatprep.subr.mxu0 0.0
        %1534 = vmatpush1.msra.mxu0 0.0
        %1535 = vmatprep.subr.mxu0 0.0
        %1536 = vmatpush1.msra.mxu0 0.0
        %1537 = vmatprep.subr.mxu0 0.0
        %1538 = vmatpush1.msra.mxu0 0.0
        %1539 = vmatprep.subr.mxu0 0.0
        %1540 = vmatpush1.msra.mxu0 0.0
        %1541 = vmatprep.subr.mxu0 0.0
        %1542 = vmatpush1.msra.mxu0 0.0
        %1543 = vmatprep.subr.mxu0 0.0
        %1544 = vmatpush1.msra.mxu0 0.0
        %1545 = vmatprep.subr.mxu0 0.0
        %1546 = vmatpush1.msra.mxu0 0.0
        %1547 = vmatprep.subr.mxu0 0.0
        %1548 = vmatpush1.msra.mxu0 0.0
        %1549 = vmatprep.subr.mxu0 0.0
        %1550 = vmatpush1.msra.mxu0 0.0
        %1551 = vmatprep.subr.mxu0 0.0
        %1552 = vmatpush1.msra.mxu0 0.0
        %1553 = vmatprep.subr.mxu0 0.0
        %1554 = vmatpush1.msra.mxu0 0.0
        %1555 = vmatprep.subr.mxu0 0.0
        %1556 = vmatpush1.msra.mxu0 0.0
        %1557 = vmatprep.subr.mxu0 0.0
        %1558 = vmatpush1.msra.mxu0 0.0
        %1559 = vmatprep.subr.mxu0 0.0
        %1560 = vmatpush1.msra.mxu0 0.0
        %1561 = vmatprep.subr.mxu0 0.0
        %1562 = vmatpush1.msra.mxu0 0.0
        %1563 = vmatprep.subr.mxu0 0.0
        %1564 = vmatpush1.msra.mxu0 0.0
        %1565 = vmatprep.subr.mxu0 0.0
        %1566 = vmatpush1.msra.mxu0 0.0
        %1567 = vmatprep.subr.mxu0 0.0
        %1568 = vmatpush1.msra.mxu0 0.0
        %1569 = vmatprep.subr.mxu0 0.0
        %1570 = vmatpush1.msra.mxu0 0.0
        %1571 = vmatprep.subr.mxu0 0.0
        %1572 = vmatpush1.msra.mxu0 0.0
        %1573 = vmatprep.subr.mxu0 0.0
        %1574 = vmatpush1.msra.mxu0 0.0
        %1575 = vmatprep.subr.mxu0 0.0
        %1576 = vmatpush1.msra.mxu0 0.0
        %1577 = vmatprep.subr.mxu0 0.0
        %1578 = vmatpush1.msra.mxu0 0.0
        %1579 = vmatprep.subr.mxu0 0.0
        %1580 = vmatpush1.msra.mxu0 0.0
        %1581 = vmatprep.subr.mxu0 0.0
        %1582 = vmatpush1.msra.mxu0 0.0
        %1583 = vmatprep.subr.mxu0 0.0
        %1584 = vmatpush1.msra.mxu0 0.0
        %1585 = vmatprep.subr.mxu0 0.0
        %1586 = vmatpush1.msra.mxu0 0.0
        %1587 = vmatprep.mubr.f32.mxu0 0.0
        %1588 = vmatmul.mubr.f32.gmra.mrb[0].mxu0 %v1518
        %v1589 = vpop.f32.mrb[0].mxu0
        %v1590 = vadd.f32 0.0, %v1589
        %v1591 = vpop.f32.mrb[0].mxu0
        %v1592 = vadd.f32 0.0, %v1591
        %1593 = vmatprep.mubr.f32.mxu0 0.0
        %1594 = vmatmul.mubr.f32.gmra.mrb[0].mxu0 %v1521
        %v1595 = vpop.f32.mrb[0].mxu0
        %v1596 = vadd.f32 0.0, %v1595
        %v1597 = vpop.f32.mrb[0].mxu0
        %v1598 = vadd.f32 0.0, %v1597
        %1599 = vdwg.mxu0
        %1600 = vmatprep.subr.mxu0 0.0
        %1601 = vmatpush1.msra.mxu0 %v1505
        %1602 = vmatprep.subr.mxu0 0.0
        %1603 = vmatpush1.msra.mxu0 %v1508
        %1604 = vmatprep.subr.mxu0 0.0
        %1605 = vmatpush1.msra.mxu0 %v1511
        %1606 = vmatprep.subr.mxu0 0.0
        %1607 = vmatpush1.msra.mxu0 %v1514
        %1608 = vmatprep.subr.mxu0 0.0
        %1609 = vmatpush1.msra.mxu0 0.0
        %1610 = vmatprep.subr.mxu0 0.0
        %1611 = vmatpush1.msra.mxu0 0.0
        %1612 = vmatprep.subr.mxu0 0.0
        %1613 = vmatpush1.msra.mxu0 0.0
        %1614 = vmatprep.subr.mxu0 0.0
        %1615 = vmatpush1.msra.mxu0 0.0
        %1616 = vmatprep.subr.mxu0 0.0
        %1617 = vmatpush1.msra.mxu0 0.0
        %1618 = vmatprep.subr.mxu0 0.0
        %1619 = vmatpush1.msra.mxu0 0.0
        %1620 = vmatprep.subr.mxu0 0.0
        %1621 = vmatpush1.msra.mxu0 0.0
        %1622 = vmatprep.subr.mxu0 0.0
        %1623 = vmatpush1.msra.mxu0 0.0
        %1624 = vmatprep.subr.mxu0 0.0
        %1625 = vmatpush1.msra.mxu0 0.0
        %1626 = vmatprep.subr.mxu0 0.0
        %1627 = vmatpush1.msra.mxu0 0.0
        %1628 = vmatprep.subr.mxu0 0.0
        %1629 = vmatpush1.msra.mxu0 0.0
        %1630 = vmatprep.subr.mxu0 0.0
        %1631 = vmatpush1.msra.mxu0 0.0
        %1632 = vmatprep.subr.mxu0 0.0
        %1633 = vmatpush1.msra.mxu0 0.0
        %1634 = vmatprep.subr.mxu0 0.0
        %1635 = vmatpush1.msra.mxu0 0.0
        %1636 = vmatprep.subr.mxu0 0.0
        %1637 = vmatpush1.msra.mxu0 0.0
        %1638 = vmatprep.subr.mxu0 0.0
        %1639 = vmatpush1.msra.mxu0 0.0
        %1640 = vmatprep.subr.mxu0 0.0
        %1641 = vmatpush1.msra.mxu0 0.0
        %1642 = vmatprep.subr.mxu0 0.0
        %1643 = vmatpush1.msra.mxu0 0.0
        %1644 = vmatprep.subr.mxu0 0.0
        %1645 = vmatpush1.msra.mxu0 0.0
        %1646 = vmatprep.subr.mxu0 0.0
        %1647 = vmatpush1.msra.mxu0 0.0
        %1648 = vmatprep.subr.mxu0 0.0
        %1649 = vmatpush1.msra.mxu0 0.0
        %1650 = vmatprep.subr.mxu0 0.0
        %1651 = vmatpush1.msra.mxu0 0.0
        %1652 = vmatprep.subr.mxu0 0.0
        %1653 = vmatpush1.msra.mxu0 0.0
        %1654 = vmatprep.subr.mxu0 0.0
        %1655 = vmatpush1.msra.mxu0 0.0
        %1656 = vmatprep.subr.mxu0 0.0
        %1657 = vmatpush1.msra.mxu0 0.0
        %1658 = vmatprep.subr.mxu0 0.0
        %1659 = vmatpush1.msra.mxu0 0.0
        %1660 = vmatprep.subr.mxu0 0.0
        %1661 = vmatpush1.msra.mxu0 0.0
        %1662 = vmatprep.subr.mxu0 0.0
        %1663 = vmatpush1.msra.mxu0 0.0
        %1664 = vmatprep.mubr.f32.mxu0 0.0
        %1665 = vmatmul.mubr.f32.gmra.mrb[0].mxu0 %v1518
        %v1666 = vpop.f32.mrb[0].mxu0
        %v1667 = vadd.f32 0.0, %v1666
        %v1668 = vpop.f32.mrb[0].mxu0
        %1669 = vmatprep.mubr.f32.mxu0 0.0
        %1670 = vmatmul.mubr.f32.gmra.mrb[0].mxu0 %v1521
        %v1671 = vpop.f32.mrb[0].mxu0
        %v1672 = vadd.f32 0.0, %v1671
        %v1673 = vpop.f32.mrb[0].mxu0
        %1674 = vdwg.mxu0
        %v1675 = vlaneseq
        %v1676 = vshrl.u32 %v1675, 7
        %v1677 = vsub.s32 0, %v1676
        %v1678 = vrot.slane %v1515, %v1677
        %v1679 = vadd.f32 %v1590, %v1678
        %v1680 = vadd.f32 %v1596, %v1678
        %v1681 = vlaneseq
        %v1682 = vshrl.u32 %v1681, 7
        %v1683 = vsub.s32 1, %v1682
        %v1684 = vrot.slane %v1515, %v1683
        %1686 = vrot.lane.b32.xlu0 %v1684, 64
        %v1687 = vpop.permute.xlu0 %1686
        %v1689 = vadd.f32 %v1590, %v1687
        %v1690 = vadd.f32 %v1596, %v1687
        %v1691 = vlaneseq
        %v1692 = vshrl.u32 %v1691, 7
        %v1693 = vsub.s32 2, %v1692
        %v1694 = vrot.slane %v1515, %v1693
        %v1695 = vadd.f32 %v1592, %v1694
        %v1696 = vadd.f32 %v1598, %v1694
        %v1697 = vlaneseq
        %v1698 = vshrl.u32 %v1697, 7
        %v1699 = vsub.s32 3, %v1698
        %v1700 = vrot.slane %v1515, %v1699
        %1702 = vrot.lane.b32.xlu0 %v1700, 64
        %v1703 = vpop.permute.xlu0 %1702
        %v1705 = vadd.f32 %v1592, %v1703
        %v1706 = vadd.f32 %v1598, %v1703
        %v1707 = vlaneseq
        %v1708 = vshrl.u32 %v1707, 7
        %v1709 = vsub.s32 0, %v1708
        %v1710 = vrot.slane %v1516, %v1709
        %v1711 = vadd.f32 %v1667, %v1710
        %v1712 = vadd.f32 %v1672, %v1710
        %1715 = vrot.lane.b32.xlu0 %v1679, 120
        %v1716 = vpop.permute.xlu0 %1715
        %1717 = vrot.lane.b32.xlu0 %v1680, 120
        %v1718 = vpop.permute.xlu0 %1717
        %1719 = vrot.lane.b32.xlu0 %v1679, 112
        %v1720 = vpop.permute.xlu0 %1719
        %1721 = vrot.lane.b32.xlu0 %v1680, 112
        %v1722 = vpop.permute.xlu0 %1721
        %1723 = vrot.lane.b32.xlu0 %v1679, 104
        %v1724 = vpop.permute.xlu0 %1723
        %1725 = vrot.lane.b32.xlu0 %v1680, 104
        %v1726 = vpop.permute.xlu0 %1725
        %1727 = vrot.lane.b32.xlu0 %v1679, 96
        %v1728 = vpop.permute.xlu0 %1727
        %1729 = vrot.lane.b32.xlu0 %v1680, 96
        %v1730 = vpop.permute.xlu0 %1729
        %1731 = vrot.lane.b32.xlu0 %v1679, 88
        %v1732 = vpop.permute.xlu0 %1731
        %1733 = vrot.lane.b32.xlu0 %v1680, 88
        %v1734 = vpop.permute.xlu0 %1733
        %1735 = vrot.lane.b32.xlu0 %v1679, 80
        %v1736 = vpop.permute.xlu0 %1735
        %1737 = vrot.lane.b32.xlu0 %v1680, 80
        %v1738 = vpop.permute.xlu0 %1737
        %1739 = vrot.lane.b32.xlu0 %v1679, 72
        %v1740 = vpop.permute.xlu0 %1739
        %1741 = vrot.lane.b32.xlu0 %v1680, 72
        %v1742 = vpop.permute.xlu0 %1741
        %1745 = vrot.lane.b32.xlu0 %v1689, 120
        %v1746 = vpop.permute.xlu0 %1745
        %1747 = vrot.lane.b32.xlu0 %v1690, 120
        %v1748 = vpop.permute.xlu0 %1747
        %1749 = vrot.lane.b32.xlu0 %v1689, 112
        %v1750 = vpop.permute.xlu0 %1749
        %1751 = vrot.lane.b32.xlu0 %v1690, 112
        %v1752 = vpop.permute.xlu0 %1751
        %1753 = vrot.lane.b32.xlu0 %v1689, 104
        %v1754 = vpop.permute.xlu0 %1753
        %1755 = vrot.lane.b32.xlu0 %v1690, 104
        %v1756 = vpop.permute.xlu0 %1755
        %1757 = vrot.lane.b32.xlu0 %v1689, 96
        %v1758 = vpop.permute.xlu0 %1757
        %1759 = vrot.lane.b32.xlu0 %v1690, 96
        %v1760 = vpop.permute.xlu0 %1759
        %1761 = vrot.lane.b32.xlu0 %v1689, 88
        %v1762 = vpop.permute.xlu0 %1761
        %1763 = vrot.lane.b32.xlu0 %v1690, 88
        %v1764 = vpop.permute.xlu0 %1763
        %1765 = vrot.lane.b32.xlu0 %v1689, 80
        %v1766 = vpop.permute.xlu0 %1765
        %1767 = vrot.lane.b32.xlu0 %v1690, 80
        %v1768 = vpop.permute.xlu0 %1767
        %1769 = vrot.lane.b32.xlu0 %v1689, 72
        %v1770 = vpop.permute.xlu0 %1769
        %1771 = vrot.lane.b32.xlu0 %v1690, 72
        %v1772 = vpop.permute.xlu0 %1771
        %1775 = vrot.lane.b32.xlu0 %v1695, 120
        %v1776 = vpop.permute.xlu0 %1775
        %1777 = vrot.lane.b32.xlu0 %v1696, 120
        %v1778 = vpop.permute.xlu0 %1777
        %1781 = vrot.lane.b32.xlu0 %v1695, 112
        %v1782 = vpop.permute.xlu0 %1781
        %1783 = vrot.lane.b32.xlu0 %v1696, 112
        %v1784 = vpop.permute.xlu0 %1783
        %1787 = vrot.lane.b32.xlu0 %v1695, 104
        %v1788 = vpop.permute.xlu0 %1787
        %1789 = vrot.lane.b32.xlu0 %v1696, 104
        %v1790 = vpop.permute.xlu0 %1789
        %1793 = vrot.lane.b32.xlu0 %v1695, 96
        %v1794 = vpop.permute.xlu0 %1793
        %1795 = vrot.lane.b32.xlu0 %v1696, 96
        %v1796 = vpop.permute.xlu0 %1795
        %1799 = vrot.lane.b32.xlu0 %v1695, 88
        %v1800 = vpop.permute.xlu0 %1799
        %1801 = vrot.lane.b32.xlu0 %v1696, 88
        %v1802 = vpop.permute.xlu0 %1801
        %1805 = vrot.lane.b32.xlu0 %v1695, 80
        %v1806 = vpop.permute.xlu0 %1805
        %1807 = vrot.lane.b32.xlu0 %v1696, 80
        %v1808 = vpop.permute.xlu0 %1807
        %1811 = vrot.lane.b32.xlu0 %v1695, 72
        %v1812 = vpop.permute.xlu0 %1811
        %1813 = vrot.lane.b32.xlu0 %v1696, 72
        %v1814 = vpop.permute.xlu0 %1813
        %1818 = vrot.lane.b32.xlu0 %v1515, 120
        %v1819 = vpop.permute.xlu0 %1818
        %1821 = vrot.lane.b32.xlu0 %v1515, 112
        %v1822 = vpop.permute.xlu0 %1821
        %1824 = vrot.lane.b32.xlu0 %v1515, 104
        %v1825 = vpop.permute.xlu0 %1824
        %1827 = vrot.lane.b32.xlu0 %v1515, 96
        %v1828 = vpop.permute.xlu0 %1827
        %1830 = vrot.lane.b32.xlu0 %v1515, 88
        %v1831 = vpop.permute.xlu0 %1830
        %1833 = vrot.lane.b32.xlu0 %v1515, 80
        %v1834 = vpop.permute.xlu0 %1833
        %1836 = vrot.lane.b32.xlu0 %v1515, 72
        %v1837 = vpop.permute.xlu0 %1836
        %1841 = vrot.lane.b32.xlu0 %v1711, 127
        %v1842 = vpop.permute.xlu0 %1841
        %1843 = vrot.lane.b32.xlu0 %v1712, 127
        %v1844 = vpop.permute.xlu0 %1843
        %1845 = vrot.lane.b32.xlu0 %v1711, 126
        %v1846 = vpop.permute.xlu0 %1845
        %1847 = vrot.lane.b32.xlu0 %v1712, 126
        %v1848 = vpop.permute.xlu0 %1847
        %1849 = vrot.lane.b32.xlu0 %v1711, 125
        %v1850 = vpop.permute.xlu0 %1849
        %1851 = vrot.lane.b32.xlu0 %v1712, 125
        %v1852 = vpop.permute.xlu0 %1851
        %1853 = vrot.lane.b32.xlu0 %v1711, 124
        %v1854 = vpop.permute.xlu0 %1853
        %1855 = vrot.lane.b32.xlu0 %v1712, 124
        %v1856 = vpop.permute.xlu0 %1855
        %1857 = vrot.lane.b32.xlu0 %v1711, 123
        %v1858 = vpop.permute.xlu0 %1857
        %1859 = vrot.lane.b32.xlu0 %v1712, 123
        %v1860 = vpop.permute.xlu0 %1859
        %1861 = vrot.lane.b32.xlu0 %v1711, 122
        %v1862 = vpop.permute.xlu0 %1861
        %1863 = vrot.lane.b32.xlu0 %v1712, 122
        %v1864 = vpop.permute.xlu0 %1863
        %1865 = vrot.lane.b32.xlu0 %v1711, 121
        %v1866 = vpop.permute.xlu0 %1865
        %1867 = vrot.lane.b32.xlu0 %v1712, 121
        %v1868 = vpop.permute.xlu0 %1867
        %1869 = vset.pattern.permute.xlu0 0
        %1870 = vperm.xlu0 %1869, %v1711
        %v1871 = vpop.permute.xlu0 %1870
        %1873 = vset.pattern.permute.xlu0 0
        %1874 = vperm.xlu0 %1873, %v1712
        %v1875 = vpop.permute.xlu0 %1874
        %1877 = vset.pattern.permute.xlu0 0
        %1878 = vperm.xlu0 %1877, %v1842
        %v1879 = vpop.permute.xlu0 %1878
        %1881 = vset.pattern.permute.xlu0 0
        %1882 = vperm.xlu0 %1881, %v1844
        %v1883 = vpop.permute.xlu0 %1882
        %1885 = vset.pattern.permute.xlu0 0
        %1886 = vperm.xlu0 %1885, %v1846
        %v1887 = vpop.permute.xlu0 %1886
        %1889 = vset.pattern.permute.xlu0 0
        %1890 = vperm.xlu0 %1889, %v1848
        %v1891 = vpop.permute.xlu0 %1890
        %1893 = vset.pattern.permute.xlu0 0
        %1894 = vperm.xlu0 %1893, %v1850
        %v1895 = vpop.permute.xlu0 %1894
        %1897 = vset.pattern.permute.xlu0 0
        %1898 = vperm.xlu0 %1897, %v1852
        %v1899 = vpop.permute.xlu0 %1898
        %1901 = vset.pattern.permute.xlu0 0
        %1902 = vperm.xlu0 %1901, %v1854
        %v1903 = vpop.permute.xlu0 %1902
        %1905 = vset.pattern.permute.xlu0 0
        %1906 = vperm.xlu0 %1905, %v1856
        %v1907 = vpop.permute.xlu0 %1906
        %1909 = vset.pattern.permute.xlu0 0
        %1910 = vperm.xlu0 %1909, %v1858
        %v1911 = vpop.permute.xlu0 %1910
        %1913 = vset.pattern.permute.xlu0 0
        %1914 = vperm.xlu0 %1913, %v1860
        %v1915 = vpop.permute.xlu0 %1914
        %1917 = vset.pattern.permute.xlu0 0
        %1918 = vperm.xlu0 %1917, %v1862
        %v1919 = vpop.permute.xlu0 %1918
        %1921 = vset.pattern.permute.xlu0 0
        %1922 = vperm.xlu0 %1921, %v1864
        %v1923 = vpop.permute.xlu0 %1922
        %1925 = vset.pattern.permute.xlu0 0
        %1926 = vperm.xlu0 %1925, %v1866
        %v1927 = vpop.permute.xlu0 %1926
        %1929 = vset.pattern.permute.xlu0 0
        %1930 = vperm.xlu0 %1929, %v1868
        %v1931 = vpop.permute.xlu0 %1930
        %v1933 = vmul.f32 %v1871, %v319
        %v1934 = vmul.f32 %v1875, %v320
        %v1935 = vmul.f32 %v1879, %v319
        %v1936 = vmul.f32 %v1883, %v320
        %v1937 = vmul.f32 %v1887, %v319
        %v1938 = vmul.f32 %v1891, %v320
        %v1939 = vmul.f32 %v1895, %v319
        %v1940 = vmul.f32 %v1899, %v320
        %v1941 = vmul.f32 %v1903, %v319
        %v1942 = vmul.f32 %v1907, %v320
        %v1943 = vmul.f32 %v1911, %v319
        %v1944 = vmul.f32 %v1915, %v320
        %v1945 = vmul.f32 %v1919, %v319
        %v1946 = vmul.f32 %v1923, %v320
        %v1947 = vmul.f32 %v1927, %v319
        %v1948 = vmul.f32 %v1931, %v320
        %1949 = vrot.lane.b32.xlu0 %v1689, 64
        %v1950 = vpop.permute.xlu0 %1949
        %1951 = vrot.lane.b32.xlu0 %v1690, 64
        %v1952 = vpop.permute.xlu0 %1951
        %v1953 = vsel %vm577, %v1679, 0
        %v1955 = vsel %vm577, %v1680, 0
        %v1957 = vsel %vm577, %v1950, 0
        %v1959 = vsel %vm577, %v1952, 0
        %1961 = vmatprep.subr.mxu0 0.0
        %1962 = vmatpush1.xpose.msra.mxu0 %v1957
        %1963 = vmatprep.subr.mxu0 0.0
        %1964 = vmatpush1.xpose.msra.mxu0 %v1959
        %1965 = vmatprep.subr.mxu0 0.0
        %1966 = vmatpush1.xpose.msra.mxu0 0.0
        %1967 = vmatprep.subr.mxu0 0.0
        %1968 = vmatpush1.xpose.msra.mxu0 0.0
        %1969 = vmatprep.subr.mxu0 0.0
        %1970 = vmatpush1.xpose.msra.mxu0 0.0
        %1971 = vmatprep.subr.mxu0 0.0
        %1972 = vmatpush1.xpose.msra.mxu0 0.0
        %1973 = vmatprep.subr.mxu0 0.0
        %1974 = vmatpush1.xpose.msra.mxu0 0.0
        %1975 = vmatprep.subr.mxu0 0.0
        %1976 = vmatpush1.xpose.msra.mxu0 0.0
        %1977 = vmatprep.subr.mxu0 0.0
        %1978 = vmatpush1.xpose.msra.mxu0 0.0
        %1979 = vmatprep.subr.mxu0 0.0
        %1980 = vmatpush1.xpose.msra.mxu0 0.0
        %1981 = vmatprep.subr.mxu0 0.0
        %1982 = vmatpush1.xpose.msra.mxu0 0.0
        %1983 = vmatprep.subr.mxu0 0.0
        %1984 = vmatpush1.xpose.msra.mxu0 0.0
        %1985 = vmatprep.subr.mxu0 0.0
        %1986 = vmatpush1.xpose.msra.mxu0 0.0
        %1987 = vmatprep.subr.mxu0 0.0
        %1988 = vmatpush1.xpose.msra.mxu0 0.0
        %1989 = vmatprep.subr.mxu0 0.0
        %1990 = vmatpush1.xpose.msra.mxu0 0.0
        %1991 = vmatprep.subr.mxu0 0.0
        %1992 = vmatpush1.xpose.msra.mxu0 0.0
        %1993 = vmatprep.subr.mxu0 0.0
        %1994 = vmatpush1.xpose.msra.mxu0 0.0
        %1995 = vmatprep.subr.mxu0 0.0
        %1996 = vmatpush1.xpose.msra.mxu0 0.0
        %1997 = vmatprep.subr.mxu0 0.0
        %1998 = vmatpush1.xpose.msra.mxu0 0.0
        %1999 = vmatprep.subr.mxu0 0.0
        %2000 = vmatpush1.xpose.msra.mxu0 0.0
        %2001 = vmatprep.subr.mxu0 0.0
        %2002 = vmatpush1.xpose.msra.mxu0 0.0
        %2003 = vmatprep.subr.mxu0 0.0
        %2004 = vmatpush1.xpose.msra.mxu0 0.0
        %2005 = vmatprep.subr.mxu0 0.0
        %2006 = vmatpush1.xpose.msra.mxu0 0.0
        %2007 = vmatprep.subr.mxu0 0.0
        %2008 = vmatpush1.xpose.msra.mxu0 0.0
        %2009 = vmatprep.subr.mxu0 0.0
        %2010 = vmatpush1.xpose.msra.mxu0 0.0
        %2011 = vmatprep.subr.mxu0 0.0
        %2012 = vmatpush1.xpose.msra.mxu0 0.0
        %2013 = vmatprep.subr.mxu0 0.0
        %2014 = vmatpush1.xpose.msra.mxu0 0.0
        %2015 = vmatprep.subr.mxu0 0.0
        %2016 = vmatpush1.xpose.msra.mxu0 0.0
        %2017 = vmatprep.subr.mxu0 0.0
        %2018 = vmatpush1.xpose.msra.mxu0 0.0
        %2019 = vmatprep.subr.mxu0 0.0
        %2020 = vmatpush1.xpose.msra.mxu0 0.0
        %2021 = vmatprep.subr.mxu0 0.0
        %2022 = vmatpush1.xpose.msra.mxu0 0.0
        %2023 = vmatprep.subr.mxu0 0.0
        %2024 = vmatpush1.xpose.msra.mxu0 0.0
        %2025 = vmatprep.mubr.f32.mxu0 0.0
        %2026 = vmatmul.mubr.f32.gmra.mrb[0].mxu0 %v1953
        %v2027 = vpop.f32.mrb[0].mxu0
        %v2028 = vadd.f32 %v1933, %v2027
        %v2029 = vpop.f32.mrb[0].mxu0
        %2030 = vmatprep.mubr.f32.mxu0 0.0
        %2031 = vmatmul.mubr.f32.gmra.mrb[0].mxu0 %v1955
        %v2032 = vpop.f32.mrb[0].mxu0
        %v2033 = vadd.f32 %v1934, %v2032
        %v2034 = vpop.f32.mrb[0].mxu0
        %2035 = vdwg.mxu0
        %2036 = vrot.lane.b32.xlu0 %v1746, 64
        %v2037 = vpop.permute.xlu0 %2036
        %2038 = vrot.lane.b32.xlu0 %v1748, 64
        %v2039 = vpop.permute.xlu0 %2038
        %v2040 = vsel %vm577, %v1716, 0
        %v2042 = vsel %vm577, %v1718, 0
        %v2044 = vsel %vm577, %v2037, 0
        %v2046 = vsel %vm577, %v2039, 0
        %2048 = vmatprep.subr.mxu0 0.0
        %2049 = vmatpush1.xpose.msra.mxu0 %v2044
        %2050 = vmatprep.subr.mxu0 0.0
        %2051 = vmatpush1.xpose.msra.mxu0 %v2046
        %2052 = vmatprep.subr.mxu0 0.0
        %2053 = vmatpush1.xpose.msra.mxu0 0.0
        %2054 = vmatprep.subr.mxu0 0.0
        %2055 = vmatpush1.xpose.msra.mxu0 0.0
        %2056 = vmatprep.subr.mxu0 0.0
        %2057 = vmatpush1.xpose.msra.mxu0 0.0
        %2058 = vmatprep.subr.mxu0 0.0
        %2059 = vmatpush1.xpose.msra.mxu0 0.0
        %2060 = vmatprep.subr.mxu0 0.0
        %2061 = vmatpush1.xpose.msra.mxu0 0.0
        %2062 = vmatprep.subr.mxu0 0.0
        %2063 = vmatpush1.xpose.msra.mxu0 0.0
        %2064 = vmatprep.subr.mxu0 0.0
        %2065 = vmatpush1.xpose.msra.mxu0 0.0
        %2066 = vmatprep.subr.mxu0 0.0
        %2067 = vmatpush1.xpose.msra.mxu0 0.0
        %2068 = vmatprep.subr.mxu0 0.0
        %2069 = vmatpush1.xpose.msra.mxu0 0.0
        %2070 = vmatprep.subr.mxu0 0.0
        %2071 = vmatpush1.xpose.msra.mxu0 0.0
        %2072 = vmatprep.subr.mxu0 0.0
        %2073 = vmatpush1.xpose.msra.mxu0 0.0
        %2074 = vmatprep.subr.mxu0 0.0
        %2075 = vmatpush1.xpose.msra.mxu0 0.0
        %2076 = vmatprep.subr.mxu0 0.0
        %2077 = vmatpush1.xpose.msra.mxu0 0.0
        %2078 = vmatprep.subr.mxu0 0.0
        %2079 = vmatpush1.xpose.msra.mxu0 0.0
        %2080 = vmatprep.subr.mxu0 0.0
        %2081 = vmatpush1.xpose.msra.mxu0 0.0
        %2082 = vmatprep.subr.mxu0 0.0
        %2083 = vmatpush1.xpose.msra.mxu0 0.0
        %2084 = vmatprep.subr.mxu0 0.0
        %2085 = vmatpush1.xpose.msra.mxu0 0.0
        %2086 = vmatprep.subr.mxu0 0.0
        %2087 = vmatpush1.xpose.msra.mxu0 0.0
        %2088 = vmatprep.subr.mxu0 0.0
        %2089 = vmatpush1.xpose.msra.mxu0 0.0
        %2090 = vmatprep.subr.mxu0 0.0
        %2091 = vmatpush1.xpose.msra.mxu0 0.0
        %2092 = vmatprep.subr.mxu0 0.0
        %2093 = vmatpush1.xpose.msra.mxu0 0.0
        %2094 = vmatprep.subr.mxu0 0.0
        %2095 = vmatpush1.xpose.msra.mxu0 0.0
        %2096 = vmatprep.subr.mxu0 0.0
        %2097 = vmatpush1.xpose.msra.mxu0 0.0
        %2098 = vmatprep.subr.mxu0 0.0
        %2099 = vmatpush1.xpose.msra.mxu0 0.0
        %2100 = vmatprep.subr.mxu0 0.0
        %2101 = vmatpush1.xpose.msra.mxu0 0.0
        %2102 = vmatprep.subr.mxu0 0.0
        %2103 = vmatpush1.xpose.msra.mxu0 0.0
        %2104 = vmatprep.subr.mxu0 0.0
        %2105 = vmatpush1.xpose.msra.mxu0 0.0
        %2106 = vmatprep.subr.mxu0 0.0
        %2107 = vmatpush1.xpose.msra.mxu0 0.0
        %2108 = vmatprep.subr.mxu0 0.0
        %2109 = vmatpush1.xpose.msra.mxu0 0.0
        %2110 = vmatprep.subr.mxu0 0.0
        %2111 = vmatpush1.xpose.msra.mxu0 0.0
        %2112 = vmatprep.mubr.f32.mxu0 0.0
        %2113 = vmatmul.mubr.f32.gmra.mrb[0].mxu0 %v2040
        %v2114 = vpop.f32.mrb[0].mxu0
        %v2115 = vadd.f32 %v1935, %v2114
        %v2116 = vpop.f32.mrb[0].mxu0
        %2117 = vmatprep.mubr.f32.mxu0 0.0
        %2118 = vmatmul.mubr.f32.gmra.mrb[0].mxu0 %v2042
        %v2119 = vpop.f32.mrb[0].mxu0
        %v2120 = vadd.f32 %v1936, %v2119
        %v2121 = vpop.f32.mrb[0].mxu0
        %2122 = vdwg.mxu0
        %2123 = vrot.lane.b32.xlu0 %v1750, 64
        %v2124 = vpop.permute.xlu0 %2123
        %2125 = vrot.lane.b32.xlu0 %v1752, 64
        %v2126 = vpop.permute.xlu0 %2125
        %v2127 = vsel %vm577, %v1720, 0
        %v2129 = vsel %vm577, %v1722, 0
        %v2131 = vsel %vm577, %v2124, 0
        %v2133 = vsel %vm577, %v2126, 0
        %2135 = vmatprep.subr.mxu0 0.0
        %2136 = vmatpush1.xpose.msra.mxu0 %v2131
        %2137 = vmatprep.subr.mxu0 0.0
        %2138 = vmatpush1.xpose.msra.mxu0 %v2133
        %2139 = vmatprep.subr.mxu0 0.0
        %2140 = vmatpush1.xpose.msra.mxu0 0.0
        %2141 = vmatprep.subr.mxu0 0.0
        %2142 = vmatpush1.xpose.msra.mxu0 0.0
        %2143 = vmatprep.subr.mxu0 0.0
        %2144 = vmatpush1.xpose.msra.mxu0 0.0
        %2145 = vmatprep.subr.mxu0 0.0
        %2146 = vmatpush1.xpose.msra.mxu0 0.0
        %2147 = vmatprep.subr.mxu0 0.0
        %2148 = vmatpush1.xpose.msra.mxu0 0.0
        %2149 = vmatprep.subr.mxu0 0.0
        %2150 = vmatpush1.xpose.msra.mxu0 0.0
        %2151 = vmatprep.subr.mxu0 0.0
        %2152 = vmatpush1.xpose.msra.mxu0 0.0
        %2153 = vmatprep.subr.mxu0 0.0
        %2154 = vmatpush1.xpose.msra.mxu0 0.0
        %2155 = vmatprep.subr.mxu0 0.0
        %2156 = vmatpush1.xpose.msra.mxu0 0.0
        %2157 = vmatprep.subr.mxu0 0.0
        %2158 = vmatpush1.xpose.msra.mxu0 0.0
        %2159 = vmatprep.subr.mxu0 0.0
        %2160 = vmatpush1.xpose.msra.mxu0 0.0
        %2161 = vmatprep.subr.mxu0 0.0
        %2162 = vmatpush1.xpose.msra.mxu0 0.0
        %2163 = vmatprep.subr.mxu0 0.0
        %2164 = vmatpush1.xpose.msra.mxu0 0.0
        %2165 = vmatprep.subr.mxu0 0.0
        %2166 = vmatpush1.xpose.msra.mxu0 0.0
        %2167 = vmatprep.subr.mxu0 0.0
        %2168 = vmatpush1.xpose.msra.mxu0 0.0
        %2169 = vmatprep.subr.mxu0 0.0
        %2170 = vmatpush1.xpose.msra.mxu0 0.0
        %2171 = vmatprep.subr.mxu0 0.0
        %2172 = vmatpush1.xpose.msra.mxu0 0.0
        %2173 = vmatprep.subr.mxu0 0.0
        %2174 = vmatpush1.xpose.msra.mxu0 0.0
        %2175 = vmatprep.subr.mxu0 0.0
        %2176 = vmatpush1.xpose.msra.mxu0 0.0
        %2177 = vmatprep.subr.mxu0 0.0
        %2178 = vmatpush1.xpose.msra.mxu0 0.0
        %2179 = vmatprep.subr.mxu0 0.0
        %2180 = vmatpush1.xpose.msra.mxu0 0.0
        %2181 = vmatprep.subr.mxu0 0.0
        %2182 = vmatpush1.xpose.msra.mxu0 0.0
        %2183 = vmatprep.subr.mxu0 0.0
        %2184 = vmatpush1.xpose.msra.mxu0 0.0
        %2185 = vmatprep.subr.mxu0 0.0
        %2186 = vmatpush1.xpose.msra.mxu0 0.0
        %2187 = vmatprep.subr.mxu0 0.0
        %2188 = vmatpush1.xpose.msra.mxu0 0.0
        %2189 = vmatprep.subr.mxu0 0.0
        %2190 = vmatpush1.xpose.msra.mxu0 0.0
        %2191 = vmatprep.subr.mxu0 0.0
        %2192 = vmatpush1.xpose.msra.mxu0 0.0
        %2193 = vmatprep.subr.mxu0 0.0
        %2194 = vmatpush1.xpose.msra.mxu0 0.0
        %2195 = vmatprep.subr.mxu0 0.0
        %2196 = vmatpush1.xpose.msra.mxu0 0.0
        %2197 = vmatprep.subr.mxu0 0.0
        %2198 = vmatpush1.xpose.msra.mxu0 0.0
        %2199 = vmatprep.mubr.f32.mxu0 0.0
        %2200 = vmatmul.mubr.f32.gmra.mrb[0].mxu0 %v2127
        %v2201 = vpop.f32.mrb[0].mxu0
        %v2202 = vadd.f32 %v1937, %v2201
        %v2203 = vpop.f32.mrb[0].mxu0
        %2204 = vmatprep.mubr.f32.mxu0 0.0
        %2205 = vmatmul.mubr.f32.gmra.mrb[0].mxu0 %v2129
        %v2206 = vpop.f32.mrb[0].mxu0
        %v2207 = vadd.f32 %v1938, %v2206
        %v2208 = vpop.f32.mrb[0].mxu0
        %2209 = vdwg.mxu0
        %2210 = vrot.lane.b32.xlu0 %v1754, 64
        %v2211 = vpop.permute.xlu0 %2210
        %2212 = vrot.lane.b32.xlu0 %v1756, 64
        %v2213 = vpop.permute.xlu0 %2212
        %v2214 = vsel %vm577, %v1724, 0
        %v2216 = vsel %vm577, %v1726, 0
        %v2218 = vsel %vm577, %v2211, 0
        %v2220 = vsel %vm577, %v2213, 0
        %2222 = vmatprep.subr.mxu0 0.0
        %2223 = vmatpush1.xpose.msra.mxu0 %v2218
        %2224 = vmatprep.subr.mxu0 0.0
        %2225 = vmatpush1.xpose.msra.mxu0 %v2220
        %2226 = vmatprep.subr.mxu0 0.0
        %2227 = vmatpush1.xpose.msra.mxu0 0.0
        %2228 = vmatprep.subr.mxu0 0.0
        %2229 = vmatpush1.xpose.msra.mxu0 0.0
        %2230 = vmatprep.subr.mxu0 0.0
        %2231 = vmatpush1.xpose.msra.mxu0 0.0
        %2232 = vmatprep.subr.mxu0 0.0
        %2233 = vmatpush1.xpose.msra.mxu0 0.0
        %2234 = vmatprep.subr.mxu0 0.0
        %2235 = vmatpush1.xpose.msra.mxu0 0.0
        %2236 = vmatprep.subr.mxu0 0.0
        %2237 = vmatpush1.xpose.msra.mxu0 0.0
        %2238 = vmatprep.subr.mxu0 0.0
        %2239 = vmatpush1.xpose.msra.mxu0 0.0
        %2240 = vmatprep.subr.mxu0 0.0
        %2241 = vmatpush1.xpose.msra.mxu0 0.0
        %2242 = vmatprep.subr.mxu0 0.0
        %2243 = vmatpush1.xpose.msra.mxu0 0.0
        %2244 = vmatprep.subr.mxu0 0.0
        %2245 = vmatpush1.xpose.msra.mxu0 0.0
        %2246 = vmatprep.subr.mxu0 0.0
        %2247 = vmatpush1.xpose.msra.mxu0 0.0
        %2248 = vmatprep.subr.mxu0 0.0
        %2249 = vmatpush1.xpose.msra.mxu0 0.0
        %2250 = vmatprep.subr.mxu0 0.0
        %2251 = vmatpush1.xpose.msra.mxu0 0.0
        %2252 = vmatprep.subr.mxu0 0.0
        %2253 = vmatpush1.xpose.msra.mxu0 0.0
        %2254 = vmatprep.subr.mxu0 0.0
        %2255 = vmatpush1.xpose.msra.mxu0 0.0
        %2256 = vmatprep.subr.mxu0 0.0
        %2257 = vmatpush1.xpose.msra.mxu0 0.0
        %2258 = vmatprep.subr.mxu0 0.0
        %2259 = vmatpush1.xpose.msra.mxu0 0.0
        %2260 = vmatprep.subr.mxu0 0.0
        %2261 = vmatpush1.xpose.msra.mxu0 0.0
        %2262 = vmatprep.subr.mxu0 0.0
        %2263 = vmatpush1.xpose.msra.mxu0 0.0
        %2264 = vmatprep.subr.mxu0 0.0
        %2265 = vmatpush1.xpose.msra.mxu0 0.0
        %2266 = vmatprep.subr.mxu0 0.0
        %2267 = vmatpush1.xpose.msra.mxu0 0.0
        %2268 = vmatprep.subr.mxu0 0.0
        %2269 = vmatpush1.xpose.msra.mxu0 0.0
        %2270 = vmatprep.subr.mxu0 0.0
        %2271 = vmatpush1.xpose.msra.mxu0 0.0
        %2272 = vmatprep.subr.mxu0 0.0
        %2273 = vmatpush1.xpose.msra.mxu0 0.0
        %2274 = vmatprep.subr.mxu0 0.0
        %2275 = vmatpush1.xpose.msra.mxu0 0.0
        %2276 = vmatprep.subr.mxu0 0.0
        %2277 = vmatpush1.xpose.msra.mxu0 0.0
        %2278 = vmatprep.subr.mxu0 0.0
        %2279 = vmatpush1.xpose.msra.mxu0 0.0
        %2280 = vmatprep.subr.mxu0 0.0
        %2281 = vmatpush1.xpose.msra.mxu0 0.0
        %2282 = vmatprep.subr.mxu0 0.0
        %2283 = vmatpush1.xpose.msra.mxu0 0.0
        %2284 = vmatprep.subr.mxu0 0.0
        %2285 = vmatpush1.xpose.msra.mxu0 0.0
        %2286 = vmatprep.mubr.f32.mxu0 0.0
        %2287 = vmatmul.mubr.f32.gmra.mrb[0].mxu0 %v2214
        %v2288 = vpop.f32.mrb[0].mxu0
        %v2289 = vadd.f32 %v1939, %v2288
        %v2290 = vpop.f32.mrb[0].mxu0
        %2291 = vmatprep.mubr.f32.mxu0 0.0
        %2292 = vmatmul.mubr.f32.gmra.mrb[0].mxu0 %v2216
        %v2293 = vpop.f32.mrb[0].mxu0
        %v2294 = vadd.f32 %v1940, %v2293
        %v2295 = vpop.f32.mrb[0].mxu0
        %2296 = vdwg.mxu0
        %2297 = vrot.lane.b32.xlu0 %v1758, 64
        %v2298 = vpop.permute.xlu0 %2297
        %2299 = vrot.lane.b32.xlu0 %v1760, 64
        %v2300 = vpop.permute.xlu0 %2299
        %v2301 = vsel %vm577, %v1728, 0
        %v2303 = vsel %vm577, %v1730, 0
        %v2305 = vsel %vm577, %v2298, 0
        %v2307 = vsel %vm577, %v2300, 0
        %2309 = vmatprep.subr.mxu0 0.0
        %2310 = vmatpush1.xpose.msra.mxu0 %v2305
        %2311 = vmatprep.subr.mxu0 0.0
        %2312 = vmatpush1.xpose.msra.mxu0 %v2307
        %2313 = vmatprep.subr.mxu0 0.0
        %2314 = vmatpush1.xpose.msra.mxu0 0.0
        %2315 = vmatprep.subr.mxu0 0.0
        %2316 = vmatpush1.xpose.msra.mxu0 0.0
        %2317 = vmatprep.subr.mxu0 0.0
        %2318 = vmatpush1.xpose.msra.mxu0 0.0
        %2319 = vmatprep.subr.mxu0 0.0
        %2320 = vmatpush1.xpose.msra.mxu0 0.0
        %2321 = vmatprep.subr.mxu0 0.0
        %2322 = vmatpush1.xpose.msra.mxu0 0.0
        %2323 = vmatprep.subr.mxu0 0.0
        %2324 = vmatpush1.xpose.msra.mxu0 0.0
        %2325 = vmatprep.subr.mxu0 0.0
        %2326 = vmatpush1.xpose.msra.mxu0 0.0
        %2327 = vmatprep.subr.mxu0 0.0
        %2328 = vmatpush1.xpose.msra.mxu0 0.0
        %2329 = vmatprep.subr.mxu0 0.0
        %2330 = vmatpush1.xpose.msra.mxu0 0.0
        %2331 = vmatprep.subr.mxu0 0.0
        %2332 = vmatpush1.xpose.msra.mxu0 0.0
        %2333 = vmatprep.subr.mxu0 0.0
        %2334 = vmatpush1.xpose.msra.mxu0 0.0
        %2335 = vmatprep.subr.mxu0 0.0
        %2336 = vmatpush1.xpose.msra.mxu0 0.0
        %2337 = vmatprep.subr.mxu0 0.0
        %2338 = vmatpush1.xpose.msra.mxu0 0.0
        %2339 = vmatprep.subr.mxu0 0.0
        %2340 = vmatpush1.xpose.msra.mxu0 0.0
        %2341 = vmatprep.subr.mxu0 0.0
        %2342 = vmatpush1.xpose.msra.mxu0 0.0
        %2343 = vmatprep.subr.mxu0 0.0
        %2344 = vmatpush1.xpose.msra.mxu0 0.0
        %2345 = vmatprep.subr.mxu0 0.0
        %2346 = vmatpush1.xpose.msra.mxu0 0.0
        %2347 = vmatprep.subr.mxu0 0.0
        %2348 = vmatpush1.xpose.msra.mxu0 0.0
        %2349 = vmatprep.subr.mxu0 0.0
        %2350 = vmatpush1.xpose.msra.mxu0 0.0
        %2351 = vmatprep.subr.mxu0 0.0
        %2352 = vmatpush1.xpose.msra.mxu0 0.0
        %2353 = vmatprep.subr.mxu0 0.0
        %2354 = vmatpush1.xpose.msra.mxu0 0.0
        %2355 = vmatprep.subr.mxu0 0.0
        %2356 = vmatpush1.xpose.msra.mxu0 0.0
        %2357 = vmatprep.subr.mxu0 0.0
        %2358 = vmatpush1.xpose.msra.mxu0 0.0
        %2359 = vmatprep.subr.mxu0 0.0
        %2360 = vmatpush1.xpose.msra.mxu0 0.0
        %2361 = vmatprep.subr.mxu0 0.0
        %2362 = vmatpush1.xpose.msra.mxu0 0.0
        %2363 = vmatprep.subr.mxu0 0.0
        %2364 = vmatpush1.xpose.msra.mxu0 0.0
        %2365 = vmatprep.subr.mxu0 0.0
        %2366 = vmatpush1.xpose.msra.mxu0 0.0
        %2367 = vmatprep.subr.mxu0 0.0
        %2368 = vmatpush1.xpose.msra.mxu0 0.0
        %2369 = vmatprep.subr.mxu0 0.0
        %2370 = vmatpush1.xpose.msra.mxu0 0.0
        %2371 = vmatprep.subr.mxu0 0.0
        %2372 = vmatpush1.xpose.msra.mxu0 0.0
        %2373 = vmatprep.mubr.f32.mxu0 0.0
        %2374 = vmatmul.mubr.f32.gmra.mrb[0].mxu0 %v2301
        %v2375 = vpop.f32.mrb[0].mxu0
        %v2376 = vadd.f32 %v1941, %v2375
        %v2377 = vpop.f32.mrb[0].mxu0
        %2378 = vmatprep.mubr.f32.mxu0 0.0
        %2379 = vmatmul.mubr.f32.gmra.mrb[0].mxu0 %v2303
        %v2380 = vpop.f32.mrb[0].mxu0
        %v2381 = vadd.f32 %v1942, %v2380
        %v2382 = vpop.f32.mrb[0].mxu0
        %2383 = vdwg.mxu0
        %2384 = vrot.lane.b32.xlu0 %v1762, 64
        %v2385 = vpop.permute.xlu0 %2384
        %2386 = vrot.lane.b32.xlu0 %v1764, 64
        %v2387 = vpop.permute.xlu0 %2386
        %v2388 = vsel %vm577, %v1732, 0
        %v2390 = vsel %vm577, %v1734, 0
        %v2392 = vsel %vm577, %v2385, 0
        %v2394 = vsel %vm577, %v2387, 0
        %2396 = vmatprep.subr.mxu0 0.0
        %2397 = vmatpush1.xpose.msra.mxu0 %v2392
        %2398 = vmatprep.subr.mxu0 0.0
        %2399 = vmatpush1.xpose.msra.mxu0 %v2394
        %2400 = vmatprep.subr.mxu0 0.0
        %2401 = vmatpush1.xpose.msra.mxu0 0.0
        %2402 = vmatprep.subr.mxu0 0.0
        %2403 = vmatpush1.xpose.msra.mxu0 0.0
        %2404 = vmatprep.subr.mxu0 0.0
        %2405 = vmatpush1.xpose.msra.mxu0 0.0
        %2406 = vmatprep.subr.mxu0 0.0
        %2407 = vmatpush1.xpose.msra.mxu0 0.0
        %2408 = vmatprep.subr.mxu0 0.0
        %2409 = vmatpush1.xpose.msra.mxu0 0.0
        %2410 = vmatprep.subr.mxu0 0.0
        %2411 = vmatpush1.xpose.msra.mxu0 0.0
        %2412 = vmatprep.subr.mxu0 0.0
        %2413 = vmatpush1.xpose.msra.mxu0 0.0
        %2414 = vmatprep.subr.mxu0 0.0
        %2415 = vmatpush1.xpose.msra.mxu0 0.0
        %2416 = vmatprep.subr.mxu0 0.0
        %2417 = vmatpush1.xpose.msra.mxu0 0.0
        %2418 = vmatprep.subr.mxu0 0.0
        %2419 = vmatpush1.xpose.msra.mxu0 0.0
        %2420 = vmatprep.subr.mxu0 0.0
        %2421 = vmatpush1.xpose.msra.mxu0 0.0
        %2422 = vmatprep.subr.mxu0 0.0
        %2423 = vmatpush1.xpose.msra.mxu0 0.0
        %2424 = vmatprep.subr.mxu0 0.0
        %2425 = vmatpush1.xpose.msra.mxu0 0.0
        %2426 = vmatprep.subr.mxu0 0.0
        %2427 = vmatpush1.xpose.msra.mxu0 0.0
        %2428 = vmatprep.subr.mxu0 0.0
        %2429 = vmatpush1.xpose.msra.mxu0 0.0
        %2430 = vmatprep.subr.mxu0 0.0
        %2431 = vmatpush1.xpose.msra.mxu0 0.0
        %2432 = vmatprep.subr.mxu0 0.0
        %2433 = vmatpush1.xpose.msra.mxu0 0.0
        %2434 = vmatprep.subr.mxu0 0.0
        %2435 = vmatpush1.xpose.msra.mxu0 0.0
        %2436 = vmatprep.subr.mxu0 0.0
        %2437 = vmatpush1.xpose.msra.mxu0 0.0
        %2438 = vmatprep.subr.mxu0 0.0
        %2439 = vmatpush1.xpose.msra.mxu0 0.0
        %2440 = vmatprep.subr.mxu0 0.0
        %2441 = vmatpush1.xpose.msra.mxu0 0.0
        %2442 = vmatprep.subr.mxu0 0.0
        %2443 = vmatpush1.xpose.msra.mxu0 0.0
        %2444 = vmatprep.subr.mxu0 0.0
        %2445 = vmatpush1.xpose.msra.mxu0 0.0
        %2446 = vmatprep.subr.mxu0 0.0
        %2447 = vmatpush1.xpose.msra.mxu0 0.0
        %2448 = vmatprep.subr.mxu0 0.0
        %2449 = vmatpush1.xpose.msra.mxu0 0.0
        %2450 = vmatprep.subr.mxu0 0.0
        %2451 = vmatpush1.xpose.msra.mxu0 0.0
        %2452 = vmatprep.subr.mxu0 0.0
        %2453 = vmatpush1.xpose.msra.mxu0 0.0
        %2454 = vmatprep.subr.mxu0 0.0
        %2455 = vmatpush1.xpose.msra.mxu0 0.0
        %2456 = vmatprep.subr.mxu0 0.0
        %2457 = vmatpush1.xpose.msra.mxu0 0.0
        %2458 = vmatprep.subr.mxu0 0.0
        %2459 = vmatpush1.xpose.msra.mxu0 0.0
        %2460 = vmatprep.mubr.f32.mxu0 0.0
        %2461 = vmatmul.mubr.f32.gmra.mrb[0].mxu0 %v2388
        %v2462 = vpop.f32.mrb[0].mxu0
        %v2463 = vadd.f32 %v1943, %v2462
        %v2464 = vpop.f32.mrb[0].mxu0
        %2465 = vmatprep.mubr.f32.mxu0 0.0
        %2466 = vmatmul.mubr.f32.gmra.mrb[0].mxu0 %v2390
        %v2467 = vpop.f32.mrb[0].mxu0
        %v2468 = vadd.f32 %v1944, %v2467
        %v2469 = vpop.f32.mrb[0].mxu0
        %2470 = vdwg.mxu0
        %2471 = vrot.lane.b32.xlu0 %v1766, 64
        %v2472 = vpop.permute.xlu0 %2471
        %2473 = vrot.lane.b32.xlu0 %v1768, 64
        %v2474 = vpop.permute.xlu0 %2473
        %v2475 = vsel %vm577, %v1736, 0
        %v2477 = vsel %vm577, %v1738, 0
        %v2479 = vsel %vm577, %v2472, 0
        %v2481 = vsel %vm577, %v2474, 0
        %2483 = vmatprep.subr.mxu0 0.0
        %2484 = vmatpush1.xpose.msra.mxu0 %v2479
        %2485 = vmatprep.subr.mxu0 0.0
        %2486 = vmatpush1.xpose.msra.mxu0 %v2481
        %2487 = vmatprep.subr.mxu0 0.0
        %2488 = vmatpush1.xpose.msra.mxu0 0.0
        %2489 = vmatprep.subr.mxu0 0.0
        %2490 = vmatpush1.xpose.msra.mxu0 0.0
        %2491 = vmatprep.subr.mxu0 0.0
        %2492 = vmatpush1.xpose.msra.mxu0 0.0
        %2493 = vmatprep.subr.mxu0 0.0
        %2494 = vmatpush1.xpose.msra.mxu0 0.0
        %2495 = vmatprep.subr.mxu0 0.0
        %2496 = vmatpush1.xpose.msra.mxu0 0.0
        %2497 = vmatprep.subr.mxu0 0.0
        %2498 = vmatpush1.xpose.msra.mxu0 0.0
        %2499 = vmatprep.subr.mxu0 0.0
        %2500 = vmatpush1.xpose.msra.mxu0 0.0
        %2501 = vmatprep.subr.mxu0 0.0
        %2502 = vmatpush1.xpose.msra.mxu0 0.0
        %2503 = vmatprep.subr.mxu0 0.0
        %2504 = vmatpush1.xpose.msra.mxu0 0.0
        %2505 = vmatprep.subr.mxu0 0.0
        %2506 = vmatpush1.xpose.msra.mxu0 0.0
        %2507 = vmatprep.subr.mxu0 0.0
        %2508 = vmatpush1.xpose.msra.mxu0 0.0
        %2509 = vmatprep.subr.mxu0 0.0
        %2510 = vmatpush1.xpose.msra.mxu0 0.0
        %2511 = vmatprep.subr.mxu0 0.0
        %2512 = vmatpush1.xpose.msra.mxu0 0.0
        %2513 = vmatprep.subr.mxu0 0.0
        %2514 = vmatpush1.xpose.msra.mxu0 0.0
        %2515 = vmatprep.subr.mxu0 0.0
        %2516 = vmatpush1.xpose.msra.mxu0 0.0
        %2517 = vmatprep.subr.mxu0 0.0
        %2518 = vmatpush1.xpose.msra.mxu0 0.0
        %2519 = vmatprep.subr.mxu0 0.0
        %2520 = vmatpush1.xpose.msra.mxu0 0.0
        %2521 = vmatprep.subr.mxu0 0.0
        %2522 = vmatpush1.xpose.msra.mxu0 0.0
        %2523 = vmatprep.subr.mxu0 0.0
        %2524 = vmatpush1.xpose.msra.mxu0 0.0
        %2525 = vmatprep.subr.mxu0 0.0
        %2526 = vmatpush1.xpose.msra.mxu0 0.0
        %2527 = vmatprep.subr.mxu0 0.0
        %2528 = vmatpush1.xpose.msra.mxu0 0.0
        %2529 = vmatprep.subr.mxu0 0.0
        %2530 = vmatpush1.xpose.msra.mxu0 0.0
        %2531 = vmatprep.subr.mxu0 0.0
        %2532 = vmatpush1.xpose.msra.mxu0 0.0
        %2533 = vmatprep.subr.mxu0 0.0
        %2534 = vmatpush1.xpose.msra.mxu0 0.0
        %2535 = vmatprep.subr.mxu0 0.0
        %2536 = vmatpush1.xpose.msra.mxu0 0.0
        %2537 = vmatprep.subr.mxu0 0.0
        %2538 = vmatpush1.xpose.msra.mxu0 0.0
        %2539 = vmatprep.subr.mxu0 0.0
        %2540 = vmatpush1.xpose.msra.mxu0 0.0
        %2541 = vmatprep.subr.mxu0 0.0
        %2542 = vmatpush1.xpose.msra.mxu0 0.0
        %2543 = vmatprep.subr.mxu0 0.0
        %2544 = vmatpush1.xpose.msra.mxu0 0.0
        %2545 = vmatprep.subr.mxu0 0.0
        %2546 = vmatpush1.xpose.msra.mxu0 0.0
        %2547 = vmatprep.mubr.f32.mxu0 0.0
        %2548 = vmatmul.mubr.f32.gmra.mrb[0].mxu0 %v2475
        %v2549 = vpop.f32.mrb[0].mxu0
        %v2550 = vadd.f32 %v1945, %v2549
        %v2551 = vpop.f32.mrb[0].mxu0
        %2552 = vmatprep.mubr.f32.mxu0 0.0
        %2553 = vmatmul.mubr.f32.gmra.mrb[0].mxu0 %v2477
        %v2554 = vpop.f32.mrb[0].mxu0
        %v2555 = vadd.f32 %v1946, %v2554
        %v2556 = vpop.f32.mrb[0].mxu0
        %2557 = vdwg.mxu0
        %2558 = vrot.lane.b32.xlu0 %v1770, 64
        %v2559 = vpop.permute.xlu0 %2558
        %2560 = vrot.lane.b32.xlu0 %v1772, 64
        %v2561 = vpop.permute.xlu0 %2560
        %v2562 = vsel %vm577, %v1740, 0
        %v2564 = vsel %vm577, %v1742, 0
        %v2566 = vsel %vm577, %v2559, 0
        %v2568 = vsel %vm577, %v2561, 0
        %2570 = vmatprep.subr.mxu0 0.0
        %2571 = vmatpush1.xpose.msra.mxu0 %v2566
        %2572 = vmatprep.subr.mxu0 0.0
        %2573 = vmatpush1.xpose.msra.mxu0 %v2568
        %2574 = vmatprep.subr.mxu0 0.0
        %2575 = vmatpush1.xpose.msra.mxu0 0.0
        %2576 = vmatprep.subr.mxu0 0.0
        %2577 = vmatpush1.xpose.msra.mxu0 0.0
        %2578 = vmatprep.subr.mxu0 0.0
        %2579 = vmatpush1.xpose.msra.mxu0 0.0
        %2580 = vmatprep.subr.mxu0 0.0
        %2581 = vmatpush1.xpose.msra.mxu0 0.0
        %2582 = vmatprep.subr.mxu0 0.0
        %2583 = vmatpush1.xpose.msra.mxu0 0.0
        %2584 = vmatprep.subr.mxu0 0.0
        %2585 = vmatpush1.xpose.msra.mxu0 0.0
        %2586 = vmatprep.subr.mxu0 0.0
        %2587 = vmatpush1.xpose.msra.mxu0 0.0
        %2588 = vmatprep.subr.mxu0 0.0
        %2589 = vmatpush1.xpose.msra.mxu0 0.0
        %2590 = vmatprep.subr.mxu0 0.0
        %2591 = vmatpush1.xpose.msra.mxu0 0.0
        %2592 = vmatprep.subr.mxu0 0.0
        %2593 = vmatpush1.xpose.msra.mxu0 0.0
        %2594 = vmatprep.subr.mxu0 0.0
        %2595 = vmatpush1.xpose.msra.mxu0 0.0
        %2596 = vmatprep.subr.mxu0 0.0
        %2597 = vmatpush1.xpose.msra.mxu0 0.0
        %2598 = vmatprep.subr.mxu0 0.0
        %2599 = vmatpush1.xpose.msra.mxu0 0.0
        %2600 = vmatprep.subr.mxu0 0.0
        %2601 = vmatpush1.xpose.msra.mxu0 0.0
        %2602 = vmatprep.subr.mxu0 0.0
        %2603 = vmatpush1.xpose.msra.mxu0 0.0
        %2604 = vmatprep.subr.mxu0 0.0
        %2605 = vmatpush1.xpose.msra.mxu0 0.0
        %2606 = vmatprep.subr.mxu0 0.0
        %2607 = vmatpush1.xpose.msra.mxu0 0.0
        %2608 = vmatprep.subr.mxu0 0.0
        %2609 = vmatpush1.xpose.msra.mxu0 0.0
        %2610 = vmatprep.subr.mxu0 0.0
        %2611 = vmatpush1.xpose.msra.mxu0 0.0
        %2612 = vmatprep.subr.mxu0 0.0
        %2613 = vmatpush1.xpose.msra.mxu0 0.0
        %2614 = vmatprep.subr.mxu0 0.0
        %2615 = vmatpush1.xpose.msra.mxu0 0.0
        %2616 = vmatprep.subr.mxu0 0.0
        %2617 = vmatpush1.xpose.msra.mxu0 0.0
        %2618 = vmatprep.subr.mxu0 0.0
        %2619 = vmatpush1.xpose.msra.mxu0 0.0
        %2620 = vmatprep.subr.mxu0 0.0
        %2621 = vmatpush1.xpose.msra.mxu0 0.0
        %2622 = vmatprep.subr.mxu0 0.0
        %2623 = vmatpush1.xpose.msra.mxu0 0.0
        %2624 = vmatprep.subr.mxu0 0.0
        %2625 = vmatpush1.xpose.msra.mxu0 0.0
        %2626 = vmatprep.subr.mxu0 0.0
        %2627 = vmatpush1.xpose.msra.mxu0 0.0
        %2628 = vmatprep.subr.mxu0 0.0
        %2629 = vmatpush1.xpose.msra.mxu0 0.0
        %2630 = vmatprep.subr.mxu0 0.0
        %2631 = vmatpush1.xpose.msra.mxu0 0.0
        %2632 = vmatprep.subr.mxu0 0.0
        %2633 = vmatpush1.xpose.msra.mxu0 0.0
        %2634 = vmatprep.mubr.f32.mxu0 0.0
        %2635 = vmatmul.mubr.f32.gmra.mrb[0].mxu0 %v2562
        %v2636 = vpop.f32.mrb[0].mxu0
        %v2637 = vadd.f32 %v1947, %v2636
        %v2638 = vpop.f32.mrb[0].mxu0
        %2639 = vmatprep.mubr.f32.mxu0 0.0
        %2640 = vmatmul.mubr.f32.gmra.mrb[0].mxu0 %v2564
        %v2641 = vpop.f32.mrb[0].mxu0
        %v2642 = vadd.f32 %v1948, %v2641
        %v2643 = vpop.f32.mrb[0].mxu0
        %2644 = vdwg.mxu0
        %v2645 = vsel %vm341, %v2028, -inf
        %2646 = vmax.xlane.f32.xlu0 %v2645
        %v2647 = vpop.xlane.xlu0 %2646
        %v2648 = vsel %vm341, %v2033, -inf
        %2649 = vmax.xlane.f32.xlu0 %v2648
        %v2650 = vpop.xlane.xlu0 %2649
        %v2651 = vsel %vm341, %v2115, -inf
        %2652 = vmax.xlane.f32.xlu0 %v2651
        %v2653 = vpop.xlane.xlu0 %2652
        %v2654 = vsel %vm341, %v2120, -inf
        %2655 = vmax.xlane.f32.xlu0 %v2654
        %v2656 = vpop.xlane.xlu0 %2655
        %v2657 = vsel %vm341, %v2202, -inf
        %2658 = vmax.xlane.f32.xlu0 %v2657
        %v2659 = vpop.xlane.xlu0 %2658
        %v2660 = vsel %vm341, %v2207, -inf
        %2661 = vmax.xlane.f32.xlu0 %v2660
        %v2662 = vpop.xlane.xlu0 %2661
        %v2663 = vsel %vm341, %v2289, -inf
        %2664 = vmax.xlane.f32.xlu0 %v2663
        %v2665 = vpop.xlane.xlu0 %2664
        %v2666 = vsel %vm341, %v2294, -inf
        %2667 = vmax.xlane.f32.xlu0 %v2666
        %v2668 = vpop.xlane.xlu0 %2667
        %v2669 = vsel %vm341, %v2376, -inf
        %2670 = vmax.xlane.f32.xlu0 %v2669
        %v2671 = vpop.xlane.xlu0 %2670
        %v2672 = vsel %vm341, %v2381, -inf
        %2673 = vmax.xlane.f32.xlu0 %v2672
        %v2674 = vpop.xlane.xlu0 %2673
        %v2675 = vsel %vm341, %v2463, -inf
        %2676 = vmax.xlane.f32.xlu0 %v2675
        %v2677 = vpop.xlane.xlu0 %2676
        %v2678 = vsel %vm341, %v2468, -inf
        %2679 = vmax.xlane.f32.xlu0 %v2678
        %v2680 = vpop.xlane.xlu0 %2679
        %v2681 = vsel %vm341, %v2550, -inf
        %2682 = vmax.xlane.f32.xlu0 %v2681
        %v2683 = vpop.xlane.xlu0 %2682
        %v2684 = vsel %vm341, %v2555, -inf
        %2685 = vmax.xlane.f32.xlu0 %v2684
        %v2686 = vpop.xlane.xlu0 %2685
        %v2687 = vsel %vm341, %v2637, -inf
        %2688 = vmax.xlane.f32.xlu0 %v2687
        %v2689 = vpop.xlane.xlu0 %2688
        %v2690 = vsel %vm341, %v2642, -inf
        %2691 = vmax.xlane.f32.xlu0 %v2690
        %v2692 = vpop.xlane.xlu0 %2691
        %v2693 = vsub.f32 %v2028, %v2647
        %v2694 = vsub.f32 %v2033, %v2650
        %v2695 = vsub.f32 %v2115, %v2653
        %v2696 = vsub.f32 %v2120, %v2656
        %v2697 = vsub.f32 %v2202, %v2659
        %v2698 = vsub.f32 %v2207, %v2662
        %v2699 = vsub.f32 %v2289, %v2665
        %v2700 = vsub.f32 %v2294, %v2668
        %v2701 = vsub.f32 %v2376, %v2671
        %v2702 = vsub.f32 %v2381, %v2674
        %v2703 = vsub.f32 %v2463, %v2677
        %v2704 = vsub.f32 %v2468, %v2680
        %v2705 = vsub.f32 %v2550, %v2683
        %v2706 = vsub.f32 %v2555, %v2686
        %v2707 = vsub.f32 %v2637, %v2689
        %v2708 = vsub.f32 %v2642, %v2692
        %v2709 = vmul.f32 %v2693, 1.442695
        %v2710 = vpow.pop %v2709
        %v2711 = vmul.f32 %v2694, 1.442695
        %v2712 = vpow.pop %v2711
        %v2713 = vmul.f32 %v2695, 1.442695
        %v2714 = vpow.pop %v2713
        %v2715 = vmul.f32 %v2696, 1.442695
        %v2716 = vpow.pop %v2715
        %v2717 = vmul.f32 %v2697, 1.442695
        %v2718 = vpow.pop %v2717
        %v2719 = vmul.f32 %v2698, 1.442695
        %v2720 = vpow.pop %v2719
        %v2721 = vmul.f32 %v2699, 1.442695
        %v2722 = vpow.pop %v2721
        %v2723 = vmul.f32 %v2700, 1.442695
        %v2724 = vpow.pop %v2723
        %v2725 = vmul.f32 %v2701, 1.442695
        %v2726 = vpow.pop %v2725
        %v2727 = vmul.f32 %v2702, 1.442695
        %v2728 = vpow.pop %v2727
        %v2729 = vmul.f32 %v2703, 1.442695
        %v2730 = vpow.pop %v2729
        %v2731 = vmul.f32 %v2704, 1.442695
        %v2732 = vpow.pop %v2731
        %v2733 = vmul.f32 %v2705, 1.442695
        %v2734 = vpow.pop %v2733
        %v2735 = vmul.f32 %v2706, 1.442695
        %v2736 = vpow.pop %v2735
        %v2737 = vmul.f32 %v2707, 1.442695
        %v2738 = vpow.pop %v2737
        %v2739 = vmul.f32 %v2708, 1.442695
        %v2740 = vpow.pop %v2739
        %v2741 = vsel %vm341, %v2710, 0.0
        %2742 = vadd.xlane.f32.xlu0 %v2741
        %v2743 = vpop.xlane.xlu0 %2742
        %v2744 = vsel %vm341, %v2712, 0.0
        %2745 = vadd.xlane.f32.xlu0 %v2744
        %v2746 = vpop.xlane.xlu0 %2745
        %v2747 = vsel %vm341, %v2714, 0.0
        %2748 = vadd.xlane.f32.xlu0 %v2747
        %v2749 = vpop.xlane.xlu0 %2748
        %v2750 = vsel %vm341, %v2716, 0.0
        %2751 = vadd.xlane.f32.xlu0 %v2750
        %v2752 = vpop.xlane.xlu0 %2751
        %v2753 = vsel %vm341, %v2718, 0.0
        %2754 = vadd.xlane.f32.xlu0 %v2753
        %v2755 = vpop.xlane.xlu0 %2754
        %v2756 = vsel %vm341, %v2720, 0.0
        %2757 = vadd.xlane.f32.xlu0 %v2756
        %v2758 = vpop.xlane.xlu0 %2757
        %v2759 = vsel %vm341, %v2722, 0.0
        %2760 = vadd.xlane.f32.xlu0 %v2759
        %v2761 = vpop.xlane.xlu0 %2760
        %v2762 = vsel %vm341, %v2724, 0.0
        %2763 = vadd.xlane.f32.xlu0 %v2762
        %v2764 = vpop.xlane.xlu0 %2763
        %v2765 = vsel %vm341, %v2726, 0.0
        %2766 = vadd.xlane.f32.xlu0 %v2765
        %v2767 = vpop.xlane.xlu0 %2766
        %v2768 = vsel %vm341, %v2728, 0.0
        %2769 = vadd.xlane.f32.xlu0 %v2768
        %v2770 = vpop.xlane.xlu0 %2769
        %v2771 = vsel %vm341, %v2730, 0.0
        %2772 = vadd.xlane.f32.xlu0 %v2771
        %v2773 = vpop.xlane.xlu0 %2772
        %v2774 = vsel %vm341, %v2732, 0.0
        %2775 = vadd.xlane.f32.xlu0 %v2774
        %v2776 = vpop.xlane.xlu0 %2775
        %v2777 = vsel %vm341, %v2734, 0.0
        %2778 = vadd.xlane.f32.xlu0 %v2777
        %v2779 = vpop.xlane.xlu0 %2778
        %v2780 = vsel %vm341, %v2736, 0.0
        %2781 = vadd.xlane.f32.xlu0 %v2780
        %v2782 = vpop.xlane.xlu0 %2781
        %v2783 = vsel %vm341, %v2738, 0.0
        %2784 = vadd.xlane.f32.xlu0 %v2783
        %v2785 = vpop.xlane.xlu0 %2784
        %v2786 = vsel %vm341, %v2740, 0.0
        %2787 = vadd.xlane.f32.xlu0 %v2786
        %v2788 = vpop.xlane.xlu0 %2787
        %v2789 = vrcp.pop %v2743
        %v2790 = vrcp.pop %v2746
        %v2791 = vrcp.pop %v2749
        %v2792 = vrcp.pop %v2752
        %v2793 = vrcp.pop %v2755
        %v2794 = vrcp.pop %v2758
        %v2795 = vrcp.pop %v2761
        %v2796 = vrcp.pop %v2764
        %v2797 = vrcp.pop %v2767
        %v2798 = vrcp.pop %v2770
        %v2799 = vrcp.pop %v2773
        %v2800 = vrcp.pop %v2776
        %v2801 = vrcp.pop %v2779
        %v2802 = vrcp.pop %v2782
        %v2803 = vrcp.pop %v2785
        %v2804 = vrcp.pop %v2788
        %v2805 = vmul.f32 %v2710, %v2789
        %v2806 = vmul.f32 %v2712, %v2790
        %v2807 = vmul.f32 %v2714, %v2791
        %v2808 = vmul.f32 %v2716, %v2792
        %v2809 = vmul.f32 %v2718, %v2793
        %v2810 = vmul.f32 %v2720, %v2794
        %v2811 = vmul.f32 %v2722, %v2795
        %v2812 = vmul.f32 %v2724, %v2796
        %v2813 = vmul.f32 %v2726, %v2797
        %v2814 = vmul.f32 %v2728, %v2798
        %v2815 = vmul.f32 %v2730, %v2799
        %v2816 = vmul.f32 %v2732, %v2800
        %v2817 = vmul.f32 %v2734, %v2801
        %v2818 = vmul.f32 %v2736, %v2802
        %v2819 = vmul.f32 %v2738, %v2803
        %v2820 = vmul.f32 %v2740, %v2804
        %v2821 = vmul.f32 %v2805, %v319
        %v2822 = vmul.f32 %v2806, %v320
        %v2823 = vmul.f32 %v2807, %v319
        %v2824 = vmul.f32 %v2808, %v320
        %v2825 = vmul.f32 %v2809, %v319
        %v2826 = vmul.f32 %v2810, %v320
        %v2827 = vmul.f32 %v2811, %v319
        %v2828 = vmul.f32 %v2812, %v320
        %v2829 = vmul.f32 %v2813, %v319
        %v2830 = vmul.f32 %v2814, %v320
        %v2831 = vmul.f32 %v2815, %v319
        %v2832 = vmul.f32 %v2816, %v320
        %v2833 = vmul.f32 %v2817, %v319
        %v2834 = vmul.f32 %v2818, %v320
        %v2835 = vmul.f32 %v2819, %v319
        %v2836 = vmul.f32 %v2820, %v320
        %v2837 = vsel %vm341, %v2821, 0.0
        %2838 = vadd.xlane.f32.xlu0 %v2837
        %v2839 = vpop.xlane.xlu0 %2838
        %v2840 = vsel %vm341, %v2822, 0.0
        %2841 = vadd.xlane.f32.xlu0 %v2840
        %v2842 = vpop.xlane.xlu0 %2841
        %v2843 = vsel %vm341, %v2823, 0.0
        %2844 = vadd.xlane.f32.xlu0 %v2843
        %v2845 = vpop.xlane.xlu0 %2844
        %v2846 = vsel %vm341, %v2824, 0.0
        %2847 = vadd.xlane.f32.xlu0 %v2846
        %v2848 = vpop.xlane.xlu0 %2847
        %v2849 = vsel %vm341, %v2825, 0.0
        %2850 = vadd.xlane.f32.xlu0 %v2849
        %v2851 = vpop.xlane.xlu0 %2850
        %v2852 = vsel %vm341, %v2826, 0.0
        %2853 = vadd.xlane.f32.xlu0 %v2852
        %v2854 = vpop.xlane.xlu0 %2853
        %v2855 = vsel %vm341, %v2827, 0.0
        %2856 = vadd.xlane.f32.xlu0 %v2855
        %v2857 = vpop.xlane.xlu0 %2856
        %v2858 = vsel %vm341, %v2828, 0.0
        %2859 = vadd.xlane.f32.xlu0 %v2858
        %v2860 = vpop.xlane.xlu0 %2859
        %v2861 = vsel %vm341, %v2829, 0.0
        %2862 = vadd.xlane.f32.xlu0 %v2861
        %v2863 = vpop.xlane.xlu0 %2862
        %v2864 = vsel %vm341, %v2830, 0.0
        %2865 = vadd.xlane.f32.xlu0 %v2864
        %v2866 = vpop.xlane.xlu0 %2865
        %v2867 = vsel %vm341, %v2831, 0.0
        %2868 = vadd.xlane.f32.xlu0 %v2867
        %v2869 = vpop.xlane.xlu0 %2868
        %v2870 = vsel %vm341, %v2832, 0.0
        %2871 = vadd.xlane.f32.xlu0 %v2870
        %v2872 = vpop.xlane.xlu0 %2871
        %v2873 = vsel %vm341, %v2833, 0.0
        %2874 = vadd.xlane.f32.xlu0 %v2873
        %v2875 = vpop.xlane.xlu0 %2874
        %v2876 = vsel %vm341, %v2834, 0.0
        %2877 = vadd.xlane.f32.xlu0 %v2876
        %v2878 = vpop.xlane.xlu0 %2877
        %v2879 = vsel %vm341, %v2835, 0.0
        %2880 = vadd.xlane.f32.xlu0 %v2879
        %v2881 = vpop.xlane.xlu0 %2880
        %v2882 = vsel %vm341, %v2836, 0.0
        %2883 = vadd.xlane.f32.xlu0 %v2882
        %v2884 = vpop.xlane.xlu0 %2883
        %v2885 = vlaneseq
        %v2886 = vshrl.u32 %v2885, 7
        %v2887 = vsub.s32 4, %v2886
        %v2888 = vrot.slane %v1515, %v2887
        %v2889 = vlaneseq
        %v2890 = vshrl.u32 %v2889, 7
        %v2891 = vsub.s32 4, %v2890
        %v2892 = vrot.slane %v1819, %v2891
        %v2893 = vlaneseq
        %v2894 = vshrl.u32 %v2893, 7
        %v2895 = vsub.s32 4, %v2894
        %v2896 = vrot.slane %v1822, %v2895
        %v2897 = vlaneseq
        %v2898 = vshrl.u32 %v2897, 7
        %v2899 = vsub.s32 4, %v2898
        %v2900 = vrot.slane %v1825, %v2899
        %v2901 = vlaneseq
        %v2902 = vshrl.u32 %v2901, 7
        %v2903 = vsub.s32 4, %v2902
        %v2904 = vrot.slane %v1828, %v2903
        %v2905 = vlaneseq
        %v2906 = vshrl.u32 %v2905, 7
        %v2907 = vsub.s32 4, %v2906
        %v2908 = vrot.slane %v1831, %v2907
        %v2909 = vlaneseq
        %v2910 = vshrl.u32 %v2909, 7
        %v2911 = vsub.s32 4, %v2910
        %v2912 = vrot.slane %v1834, %v2911
        %v2913 = vlaneseq
        %v2914 = vshrl.u32 %v2913, 7
        %v2915 = vsub.s32 4, %v2914
        %v2916 = vrot.slane %v1837, %v2915
        %v2917 = vmul.f32 %v2839, %v2888
        %v2918 = vmul.f32 %v2842, %v2888
        %v2919 = vmul.f32 %v2845, %v2892
        %v2920 = vmul.f32 %v2848, %v2892
        %v2921 = vmul.f32 %v2851, %v2896
        %v2922 = vmul.f32 %v2854, %v2896
        %v2923 = vmul.f32 %v2857, %v2900
        %v2924 = vmul.f32 %v2860, %v2900
        %v2925 = vmul.f32 %v2863, %v2904
        %v2926 = vmul.f32 %v2866, %v2904
        %v2927 = vmul.f32 %v2869, %v2908
        %v2928 = vmul.f32 %v2872, %v2908
        %v2929 = vmul.f32 %v2875, %v2912
        %v2930 = vmul.f32 %v2878, %v2912
        %v2931 = vmul.f32 %v2881, %v2916
        %v2932 = vmul.f32 %v2884, %v2916
        %v2934 = vsel %vm341, %v2805, 0
        %v2937 = vsel %vm341, %v2806, 0
        %2939 = vmatprep.subr.mxu0 0.0
        %2940 = vmatpush1.msra.mxu0 %v1695
        %2941 = vmatprep.subr.mxu0 0.0
        %2942 = vmatpush1.msra.mxu0 %v1696
        %2943 = vmatprep.subr.mxu0 0.0
        %2944 = vmatpush1.msra.mxu0 0.0
        %2945 = vmatprep.subr.mxu0 0.0
        %2946 = vmatpush1.msra.mxu0 0.0
        %2947 = vmatprep.subr.mxu0 0.0
        %2948 = vmatpush1.msra.mxu0 0.0
        %2949 = vmatprep.subr.mxu0 0.0
        %2950 = vmatpush1.msra.mxu0 0.0
        %2951 = vmatprep.subr.mxu0 0.0
        %2952 = vmatpush1.msra.mxu0 0.0
        %2953 = vmatprep.subr.mxu0 0.0
        %2954 = vmatpush1.msra.mxu0 0.0
        %2955 = vmatprep.subr.mxu0 0.0
        %2956 = vmatpush1.msra.mxu0 0.0
        %2957 = vmatprep.subr.mxu0 0.0
        %2958 = vmatpush1.msra.mxu0 0.0
        %2959 = vmatprep.subr.mxu0 0.0
        %2960 = vmatpush1.msra.mxu0 0.0
        %2961 = vmatprep.subr.mxu0 0.0
        %2962 = vmatpush1.msra.mxu0 0.0
        %2963 = vmatprep.subr.mxu0 0.0
        %2964 = vmatpush1.msra.mxu0 0.0
        %2965 = vmatprep.subr.mxu0 0.0
        %2966 = vmatpush1.msra.mxu0 0.0
        %2967 = vmatprep.subr.mxu0 0.0
        %2968 = vmatpush1.msra.mxu0 0.0
        %2969 = vmatprep.subr.mxu0 0.0
        %2970 = vmatpush1.msra.mxu0 0.0
        %2971 = vmatprep.subr.mxu0 0.0
        %2972 = vmatpush1.msra.mxu0 0.0
        %2973 = vmatprep.subr.mxu0 0.0
        %2974 = vmatpush1.msra.mxu0 0.0
        %2975 = vmatprep.subr.mxu0 0.0
        %2976 = vmatpush1.msra.mxu0 0.0
        %2977 = vmatprep.subr.mxu0 0.0
        %2978 = vmatpush1.msra.mxu0 0.0
        %2979 = vmatprep.subr.mxu0 0.0
        %2980 = vmatpush1.msra.mxu0 0.0
        %2981 = vmatprep.subr.mxu0 0.0
        %2982 = vmatpush1.msra.mxu0 0.0
        %2983 = vmatprep.subr.mxu0 0.0
        %2984 = vmatpush1.msra.mxu0 0.0
        %2985 = vmatprep.subr.mxu0 0.0
        %2986 = vmatpush1.msra.mxu0 0.0
        %2987 = vmatprep.subr.mxu0 0.0
        %2988 = vmatpush1.msra.mxu0 0.0
        %2989 = vmatprep.subr.mxu0 0.0
        %2990 = vmatpush1.msra.mxu0 0.0
        %2991 = vmatprep.subr.mxu0 0.0
        %2992 = vmatpush1.msra.mxu0 0.0
        %2993 = vmatprep.subr.mxu0 0.0
        %2994 = vmatpush1.msra.mxu0 0.0
        %2995 = vmatprep.subr.mxu0 0.0
        %2996 = vmatpush1.msra.mxu0 0.0
        %2997 = vmatprep.subr.mxu0 0.0
        %2998 = vmatpush1.msra.mxu0 0.0
        %2999 = vmatprep.subr.mxu0 0.0
        %3000 = vmatpush1.msra.mxu0 0.0
        %3001 = vmatprep.subr.mxu0 0.0
        %3002 = vmatpush1.msra.mxu0 0.0
        %3003 = vmatprep.mubr.f32.mxu0 0.0
        %3004 = vmatmul.mubr.f32.gmra.mrb[0].mxu0 %v2934
        %v3005 = vpop.f32.mrb[0].mxu0
        %v3006 = vadd.f32 %v2917, %v3005
        %v3007 = vpop.f32.mrb[0].mxu0
        %3008 = vmatprep.mubr.f32.mxu0 0.0
        %3009 = vmatmul.mubr.f32.gmra.mrb[0].mxu0 %v2937
        %v3010 = vpop.f32.mrb[0].mxu0
        %v3011 = vadd.f32 %v2918, %v3010
        %v3012 = vpop.f32.mrb[0].mxu0
        %3013 = vdwg.mxu0
        %v3015 = vsel %vm341, %v2807, 0
        %v3018 = vsel %vm341, %v2808, 0
        %3020 = vmatprep.subr.mxu0 0.0
        %3021 = vmatpush1.msra.mxu0 %v1776
        %3022 = vmatprep.subr.mxu0 0.0
        %3023 = vmatpush1.msra.mxu0 %v1778
        %3024 = vmatprep.subr.mxu0 0.0
        %3025 = vmatpush1.msra.mxu0 0.0
        %3026 = vmatprep.subr.mxu0 0.0
        %3027 = vmatpush1.msra.mxu0 0.0
        %3028 = vmatprep.subr.mxu0 0.0
        %3029 = vmatpush1.msra.mxu0 0.0
        %3030 = vmatprep.subr.mxu0 0.0
        %3031 = vmatpush1.msra.mxu0 0.0
        %3032 = vmatprep.subr.mxu0 0.0
        %3033 = vmatpush1.msra.mxu0 0.0
        %3034 = vmatprep.subr.mxu0 0.0
        %3035 = vmatpush1.msra.mxu0 0.0
        %3036 = vmatprep.subr.mxu0 0.0
        %3037 = vmatpush1.msra.mxu0 0.0
        %3038 = vmatprep.subr.mxu0 0.0
        %3039 = vmatpush1.msra.mxu0 0.0
        %3040 = vmatprep.subr.mxu0 0.0
        %3041 = vmatpush1.msra.mxu0 0.0
        %3042 = vmatprep.subr.mxu0 0.0
        %3043 = vmatpush1.msra.mxu0 0.0
        %3044 = vmatprep.subr.mxu0 0.0
        %3045 = vmatpush1.msra.mxu0 0.0
        %3046 = vmatprep.subr.mxu0 0.0
        %3047 = vmatpush1.msra.mxu0 0.0
        %3048 = vmatprep.subr.mxu0 0.0
        %3049 = vmatpush1.msra.mxu0 0.0
        %3050 = vmatprep.subr.mxu0 0.0
        %3051 = vmatpush1.msra.mxu0 0.0
        %3052 = vmatprep.subr.mxu0 0.0
        %3053 = vmatpush1.msra.mxu0 0.0
        %3054 = vmatprep.subr.mxu0 0.0
        %3055 = vmatpush1.msra.mxu0 0.0
        %3056 = vmatprep.subr.mxu0 0.0
        %3057 = vmatpush1.msra.mxu0 0.0
        %3058 = vmatprep.subr.mxu0 0.0
        %3059 = vmatpush1.msra.mxu0 0.0
        %3060 = vmatprep.subr.mxu0 0.0
        %3061 = vmatpush1.msra.mxu0 0.0
        %3062 = vmatprep.subr.mxu0 0.0
        %3063 = vmatpush1.msra.mxu0 0.0
        %3064 = vmatprep.subr.mxu0 0.0
        %3065 = vmatpush1.msra.mxu0 0.0
        %3066 = vmatprep.subr.mxu0 0.0
        %3067 = vmatpush1.msra.mxu0 0.0
        %3068 = vmatprep.subr.mxu0 0.0
        %3069 = vmatpush1.msra.mxu0 0.0
        %3070 = vmatprep.subr.mxu0 0.0
        %3071 = vmatpush1.msra.mxu0 0.0
        %3072 = vmatprep.subr.mxu0 0.0
        %3073 = vmatpush1.msra.mxu0 0.0
        %3074 = vmatprep.subr.mxu0 0.0
        %3075 = vmatpush1.msra.mxu0 0.0
        %3076 = vmatprep.subr.mxu0 0.0
        %3077 = vmatpush1.msra.mxu0 0.0
        %3078 = vmatprep.subr.mxu0 0.0
        %3079 = vmatpush1.msra.mxu0 0.0
        %3080 = vmatprep.subr.mxu0 0.0
        %3081 = vmatpush1.msra.mxu0 0.0
        %3082 = vmatprep.subr.mxu0 0.0
        %3083 = vmatpush1.msra.mxu0 0.0
        %3084 = vmatprep.mubr.f32.mxu0 0.0
        %3085 = vmatmul.mubr.f32.gmra.mrb[0].mxu0 %v3015
        %v3086 = vpop.f32.mrb[0].mxu0
        %v3087 = vadd.f32 %v2919, %v3086
        %v3088 = vpop.f32.mrb[0].mxu0
        %3089 = vmatprep.mubr.f32.mxu0 0.0
        %3090 = vmatmul.mubr.f32.gmra.mrb[0].mxu0 %v3018
        %v3091 = vpop.f32.mrb[0].mxu0
        %v3092 = vadd.f32 %v2920, %v3091
        %v3093 = vpop.f32.mrb[0].mxu0
        %3094 = vdwg.mxu0
        %v3096 = vsel %vm341, %v2809, 0
        %v3099 = vsel %vm341, %v2810, 0
        %3101 = vmatprep.subr.mxu0 0.0
        %3102 = vmatpush1.msra.mxu0 %v1782
        %3103 = vmatprep.subr.mxu0 0.0
        %3104 = vmatpush1.msra.mxu0 %v1784
        %3105 = vmatprep.subr.mxu0 0.0
        %3106 = vmatpush1.msra.mxu0 0.0
        %3107 = vmatprep.subr.mxu0 0.0
        %3108 = vmatpush1.msra.mxu0 0.0
        %3109 = vmatprep.subr.mxu0 0.0
        %3110 = vmatpush1.msra.mxu0 0.0
        %3111 = vmatprep.subr.mxu0 0.0
        %3112 = vmatpush1.msra.mxu0 0.0
        %3113 = vmatprep.subr.mxu0 0.0
        %3114 = vmatpush1.msra.mxu0 0.0
        %3115 = vmatprep.subr.mxu0 0.0
        %3116 = vmatpush1.msra.mxu0 0.0
        %3117 = vmatprep.subr.mxu0 0.0
        %3118 = vmatpush1.msra.mxu0 0.0
        %3119 = vmatprep.subr.mxu0 0.0
        %3120 = vmatpush1.msra.mxu0 0.0
        %3121 = vmatprep.subr.mxu0 0.0
        %3122 = vmatpush1.msra.mxu0 0.0
        %3123 = vmatprep.subr.mxu0 0.0
        %3124 = vmatpush1.msra.mxu0 0.0
        %3125 = vmatprep.subr.mxu0 0.0
        %3126 = vmatpush1.msra.mxu0 0.0
        %3127 = vmatprep.subr.mxu0 0.0
        %3128 = vmatpush1.msra.mxu0 0.0
        %3129 = vmatprep.subr.mxu0 0.0
        %3130 = vmatpush1.msra.mxu0 0.0
        %3131 = vmatprep.subr.mxu0 0.0
        %3132 = vmatpush1.msra.mxu0 0.0
        %3133 = vmatprep.subr.mxu0 0.0
        %3134 = vmatpush1.msra.mxu0 0.0
        %3135 = vmatprep.subr.mxu0 0.0
        %3136 = vmatpush1.msra.mxu0 0.0
        %3137 = vmatprep.subr.mxu0 0.0
        %3138 = vmatpush1.msra.mxu0 0.0
        %3139 = vmatprep.subr.mxu0 0.0
        %3140 = vmatpush1.msra.mxu0 0.0
        %3141 = vmatprep.subr.mxu0 0.0
        %3142 = vmatpush1.msra.mxu0 0.0
        %3143 = vmatprep.subr.mxu0 0.0
        %3144 = vmatpush1.msra.mxu0 0.0
        %3145 = vmatprep.subr.mxu0 0.0
        %3146 = vmatpush1.msra.mxu0 0.0
        %3147 = vmatprep.subr.mxu0 0.0
        %3148 = vmatpush1.msra.mxu0 0.0
        %3149 = vmatprep.subr.mxu0 0.0
        %3150 = vmatpush1.msra.mxu0 0.0
        %3151 = vmatprep.subr.mxu0 0.0
        %3152 = vmatpush1.msra.mxu0 0.0
        %3153 = vmatprep.subr.mxu0 0.0
        %3154 = vmatpush1.msra.mxu0 0.0
        %3155 = vmatprep.subr.mxu0 0.0
        %3156 = vmatpush1.msra.mxu0 0.0
        %3157 = vmatprep.subr.mxu0 0.0
        %3158 = vmatpush1.msra.mxu0 0.0
        %3159 = vmatprep.subr.mxu0 0.0
        %3160 = vmatpush1.msra.mxu0 0.0
        %3161 = vmatprep.subr.mxu0 0.0
        %3162 = vmatpush1.msra.mxu0 0.0
        %3163 = vmatprep.subr.mxu0 0.0
        %3164 = vmatpush1.msra.mxu0 0.0
        %3165 = vmatprep.mubr.f32.mxu0 0.0
        %3166 = vmatmul.mubr.f32.gmra.mrb[0].mxu0 %v3096
        %v3167 = vpop.f32.mrb[0].mxu0
        %v3168 = vadd.f32 %v2921, %v3167
        %v3169 = vpop.f32.mrb[0].mxu0
        %3170 = vmatprep.mubr.f32.mxu0 0.0
        %3171 = vmatmul.mubr.f32.gmra.mrb[0].mxu0 %v3099
        %v3172 = vpop.f32.mrb[0].mxu0
        %v3173 = vadd.f32 %v2922, %v3172
        %v3174 = vpop.f32.mrb[0].mxu0
        %3175 = vdwg.mxu0
        %v3177 = vsel %vm341, %v2811, 0
        %v3180 = vsel %vm341, %v2812, 0
        %3182 = vmatprep.subr.mxu0 0.0
        %3183 = vmatpush1.msra.mxu0 %v1788
        %3184 = vmatprep.subr.mxu0 0.0
        %3185 = vmatpush1.msra.mxu0 %v1790
        %3186 = vmatprep.subr.mxu0 0.0
        %3187 = vmatpush1.msra.mxu0 0.0
        %3188 = vmatprep.subr.mxu0 0.0
        %3189 = vmatpush1.msra.mxu0 0.0
        %3190 = vmatprep.subr.mxu0 0.0
        %3191 = vmatpush1.msra.mxu0 0.0
        %3192 = vmatprep.subr.mxu0 0.0
        %3193 = vmatpush1.msra.mxu0 0.0
        %3194 = vmatprep.subr.mxu0 0.0
        %3195 = vmatpush1.msra.mxu0 0.0
        %3196 = vmatprep.subr.mxu0 0.0
        %3197 = vmatpush1.msra.mxu0 0.0
        %3198 = vmatprep.subr.mxu0 0.0
        %3199 = vmatpush1.msra.mxu0 0.0
        %3200 = vmatprep.subr.mxu0 0.0
        %3201 = vmatpush1.msra.mxu0 0.0
        %3202 = vmatprep.subr.mxu0 0.0
        %3203 = vmatpush1.msra.mxu0 0.0
        %3204 = vmatprep.subr.mxu0 0.0
        %3205 = vmatpush1.msra.mxu0 0.0
        %3206 = vmatprep.subr.mxu0 0.0
        %3207 = vmatpush1.msra.mxu0 0.0
        %3208 = vmatprep.subr.mxu0 0.0
        %3209 = vmatpush1.msra.mxu0 0.0
        %3210 = vmatprep.subr.mxu0 0.0
        %3211 = vmatpush1.msra.mxu0 0.0
        %3212 = vmatprep.subr.mxu0 0.0
        %3213 = vmatpush1.msra.mxu0 0.0
        %3214 = vmatprep.subr.mxu0 0.0
        %3215 = vmatpush1.msra.mxu0 0.0
        %3216 = vmatprep.subr.mxu0 0.0
        %3217 = vmatpush1.msra.mxu0 0.0
        %3218 = vmatprep.subr.mxu0 0.0
        %3219 = vmatpush1.msra.mxu0 0.0
        %3220 = vmatprep.subr.mxu0 0.0
        %3221 = vmatpush1.msra.mxu0 0.0
        %3222 = vmatprep.subr.mxu0 0.0
        %3223 = vmatpush1.msra.mxu0 0.0
        %3224 = vmatprep.subr.mxu0 0.0
        %3225 = vmatpush1.msra.mxu0 0.0
        %3226 = vmatprep.subr.mxu0 0.0
        %3227 = vmatpush1.msra.mxu0 0.0
        %3228 = vmatprep.subr.mxu0 0.0
        %3229 = vmatpush1.msra.mxu0 0.0
        %3230 = vmatprep.subr.mxu0 0.0
        %3231 = vmatpush1.msra.mxu0 0.0
        %3232 = vmatprep.subr.mxu0 0.0
        %3233 = vmatpush1.msra.mxu0 0.0
        %3234 = vmatprep.subr.mxu0 0.0
        %3235 = vmatpush1.msra.mxu0 0.0
        %3236 = vmatprep.subr.mxu0 0.0
        %3237 = vmatpush1.msra.mxu0 0.0
        %3238 = vmatprep.subr.mxu0 0.0
        %3239 = vmatpush1.msra.mxu0 0.0
        %3240 = vmatprep.subr.mxu0 0.0
        %3241 = vmatpush1.msra.mxu0 0.0
        %3242 = vmatprep.subr.mxu0 0.0
        %3243 = vmatpush1.msra.mxu0 0.0
        %3244 = vmatprep.subr.mxu0 0.0
        %3245 = vmatpush1.msra.mxu0 0.0
        %3246 = vmatprep.mubr.f32.mxu0 0.0
        %3247 = vmatmul.mubr.f32.gmra.mrb[0].mxu0 %v3177
        %v3248 = vpop.f32.mrb[0].mxu0
        %v3249 = vadd.f32 %v2923, %v3248
        %v3250 = vpop.f32.mrb[0].mxu0
        %3251 = vmatprep.mubr.f32.mxu0 0.0
        %3252 = vmatmul.mubr.f32.gmra.mrb[0].mxu0 %v3180
        %v3253 = vpop.f32.mrb[0].mxu0
        %v3254 = vadd.f32 %v2924, %v3253
        %v3255 = vpop.f32.mrb[0].mxu0
        %3256 = vdwg.mxu0
        %v3258 = vsel %vm341, %v2813, 0
        %v3261 = vsel %vm341, %v2814, 0
        %3263 = vmatprep.subr.mxu0 0.0
        %3264 = vmatpush1.msra.mxu0 %v1794
        %3265 = vmatprep.subr.mxu0 0.0
        %3266 = vmatpush1.msra.mxu0 %v1796
        %3267 = vmatprep.subr.mxu0 0.0
        %3268 = vmatpush1.msra.mxu0 0.0
        %3269 = vmatprep.subr.mxu0 0.0
        %3270 = vmatpush1.msra.mxu0 0.0
        %3271 = vmatprep.subr.mxu0 0.0
        %3272 = vmatpush1.msra.mxu0 0.0
        %3273 = vmatprep.subr.mxu0 0.0
        %3274 = vmatpush1.msra.mxu0 0.0
        %3275 = vmatprep.subr.mxu0 0.0
        %3276 = vmatpush1.msra.mxu0 0.0
        %3277 = vmatprep.subr.mxu0 0.0
        %3278 = vmatpush1.msra.mxu0 0.0
        %3279 = vmatprep.subr.mxu0 0.0
        %3280 = vmatpush1.msra.mxu0 0.0
        %3281 = vmatprep.subr.mxu0 0.0
        %3282 = vmatpush1.msra.mxu0 0.0
        %3283 = vmatprep.subr.mxu0 0.0
        %3284 = vmatpush1.msra.mxu0 0.0
        %3285 = vmatprep.subr.mxu0 0.0
        %3286 = vmatpush1.msra.mxu0 0.0
        %3287 = vmatprep.subr.mxu0 0.0
        %3288 = vmatpush1.msra.mxu0 0.0
        %3289 = vmatprep.subr.mxu0 0.0
        %3290 = vmatpush1.msra.mxu0 0.0
        %3291 = vmatprep.subr.mxu0 0.0
        %3292 = vmatpush1.msra.mxu0 0.0
        %3293 = vmatprep.subr.mxu0 0.0
        %3294 = vmatpush1.msra.mxu0 0.0
        %3295 = vmatprep.subr.mxu0 0.0
        %3296 = vmatpush1.msra.mxu0 0.0
        %3297 = vmatprep.subr.mxu0 0.0
        %3298 = vmatpush1.msra.mxu0 0.0
        %3299 = vmatprep.subr.mxu0 0.0
        %3300 = vmatpush1.msra.mxu0 0.0
        %3301 = vmatprep.subr.mxu0 0.0
        %3302 = vmatpush1.msra.mxu0 0.0
        %3303 = vmatprep.subr.mxu0 0.0
        %3304 = vmatpush1.msra.mxu0 0.0
        %3305 = vmatprep.subr.mxu0 0.0
        %3306 = vmatpush1.msra.mxu0 0.0
        %3307 = vmatprep.subr.mxu0 0.0
        %3308 = vmatpush1.msra.mxu0 0.0
        %3309 = vmatprep.subr.mxu0 0.0
        %3310 = vmatpush1.msra.mxu0 0.0
        %3311 = vmatprep.subr.mxu0 0.0
        %3312 = vmatpush1.msra.mxu0 0.0
        %3313 = vmatprep.subr.mxu0 0.0
        %3314 = vmatpush1.msra.mxu0 0.0
        %3315 = vmatprep.subr.mxu0 0.0
        %3316 = vmatpush1.msra.mxu0 0.0
        %3317 = vmatprep.subr.mxu0 0.0
        %3318 = vmatpush1.msra.mxu0 0.0
        %3319 = vmatprep.subr.mxu0 0.0
        %3320 = vmatpush1.msra.mxu0 0.0
        %3321 = vmatprep.subr.mxu0 0.0
        %3322 = vmatpush1.msra.mxu0 0.0
        %3323 = vmatprep.subr.mxu0 0.0
        %3324 = vmatpush1.msra.mxu0 0.0
        %3325 = vmatprep.subr.mxu0 0.0
        %3326 = vmatpush1.msra.mxu0 0.0
        %3327 = vmatprep.mubr.f32.mxu0 0.0
        %3328 = vmatmul.mubr.f32.gmra.mrb[0].mxu0 %v3258
        %v3329 = vpop.f32.mrb[0].mxu0
        %v3330 = vadd.f32 %v2925, %v3329
        %v3331 = vpop.f32.mrb[0].mxu0
        %3332 = vmatprep.mubr.f32.mxu0 0.0
        %3333 = vmatmul.mubr.f32.gmra.mrb[0].mxu0 %v3261
        %v3334 = vpop.f32.mrb[0].mxu0
        %v3335 = vadd.f32 %v2926, %v3334
        %v3336 = vpop.f32.mrb[0].mxu0
        %3337 = vdwg.mxu0
        %v3339 = vsel %vm341, %v2815, 0
        %v3342 = vsel %vm341, %v2816, 0
        %3344 = vmatprep.subr.mxu0 0.0
        %3345 = vmatpush1.msra.mxu0 %v1800
        %3346 = vmatprep.subr.mxu0 0.0
        %3347 = vmatpush1.msra.mxu0 %v1802
        %3348 = vmatprep.subr.mxu0 0.0
        %3349 = vmatpush1.msra.mxu0 0.0
        %3350 = vmatprep.subr.mxu0 0.0
        %3351 = vmatpush1.msra.mxu0 0.0
        %3352 = vmatprep.subr.mxu0 0.0
        %3353 = vmatpush1.msra.mxu0 0.0
        %3354 = vmatprep.subr.mxu0 0.0
        %3355 = vmatpush1.msra.mxu0 0.0
        %3356 = vmatprep.subr.mxu0 0.0
        %3357 = vmatpush1.msra.mxu0 0.0
        %3358 = vmatprep.subr.mxu0 0.0
        %3359 = vmatpush1.msra.mxu0 0.0
        %3360 = vmatprep.subr.mxu0 0.0
        %3361 = vmatpush1.msra.mxu0 0.0
        %3362 = vmatprep.subr.mxu0 0.0
        %3363 = vmatpush1.msra.mxu0 0.0
        %3364 = vmatprep.subr.mxu0 0.0
        %3365 = vmatpush1.msra.mxu0 0.0
        %3366 = vmatprep.subr.mxu0 0.0
        %3367 = vmatpush1.msra.mxu0 0.0
        %3368 = vmatprep.subr.mxu0 0.0
        %3369 = vmatpush1.msra.mxu0 0.0
        %3370 = vmatprep.subr.mxu0 0.0
        %3371 = vmatpush1.msra.mxu0 0.0
        %3372 = vmatprep.subr.mxu0 0.0
        %3373 = vmatpush1.msra.mxu0 0.0
        %3374 = vmatprep.subr.mxu0 0.0
        %3375 = vmatpush1.msra.mxu0 0.0
        %3376 = vmatprep.subr.mxu0 0.0
        %3377 = vmatpush1.msra.mxu0 0.0
        %3378 = vmatprep.subr.mxu0 0.0
        %3379 = vmatpush1.msra.mxu0 0.0
        %3380 = vmatprep.subr.mxu0 0.0
        %3381 = vmatpush1.msra.mxu0 0.0
        %3382 = vmatprep.subr.mxu0 0.0
        %3383 = vmatpush1.msra.mxu0 0.0
        %3384 = vmatprep.subr.mxu0 0.0
        %3385 = vmatpush1.msra.mxu0 0.0
        %3386 = vmatprep.subr.mxu0 0.0
        %3387 = vmatpush1.msra.mxu0 0.0
        %3388 = vmatprep.subr.mxu0 0.0
        %3389 = vmatpush1.msra.mxu0 0.0
        %3390 = vmatprep.subr.mxu0 0.0
        %3391 = vmatpush1.msra.mxu0 0.0
        %3392 = vmatprep.subr.mxu0 0.0
        %3393 = vmatpush1.msra.mxu0 0.0
        %3394 = vmatprep.subr.mxu0 0.0
        %3395 = vmatpush1.msra.mxu0 0.0
        %3396 = vmatprep.subr.mxu0 0.0
        %3397 = vmatpush1.msra.mxu0 0.0
        %3398 = vmatprep.subr.mxu0 0.0
        %3399 = vmatpush1.msra.mxu0 0.0
        %3400 = vmatprep.subr.mxu0 0.0
        %3401 = vmatpush1.msra.mxu0 0.0
        %3402 = vmatprep.subr.mxu0 0.0
        %3403 = vmatpush1.msra.mxu0 0.0
        %3404 = vmatprep.subr.mxu0 0.0
        %3405 = vmatpush1.msra.mxu0 0.0
        %3406 = vmatprep.subr.mxu0 0.0
        %3407 = vmatpush1.msra.mxu0 0.0
        %3408 = vmatprep.mubr.f32.mxu0 0.0
        %3409 = vmatmul.mubr.f32.gmra.mrb[0].mxu0 %v3339
        %v3410 = vpop.f32.mrb[0].mxu0
        %v3411 = vadd.f32 %v2927, %v3410
        %v3412 = vpop.f32.mrb[0].mxu0
        %3413 = vmatprep.mubr.f32.mxu0 0.0
        %3414 = vmatmul.mubr.f32.gmra.mrb[0].mxu0 %v3342
        %v3415 = vpop.f32.mrb[0].mxu0
        %v3416 = vadd.f32 %v2928, %v3415
        %v3417 = vpop.f32.mrb[0].mxu0
        %3418 = vdwg.mxu0
        %v3420 = vsel %vm341, %v2817, 0
        %v3423 = vsel %vm341, %v2818, 0
        %3425 = vmatprep.subr.mxu0 0.0
        %3426 = vmatpush1.msra.mxu0 %v1806
        %3427 = vmatprep.subr.mxu0 0.0
        %3428 = vmatpush1.msra.mxu0 %v1808
        %3429 = vmatprep.subr.mxu0 0.0
        %3430 = vmatpush1.msra.mxu0 0.0
        %3431 = vmatprep.subr.mxu0 0.0
        %3432 = vmatpush1.msra.mxu0 0.0
        %3433 = vmatprep.subr.mxu0 0.0
        %3434 = vmatpush1.msra.mxu0 0.0
        %3435 = vmatprep.subr.mxu0 0.0
        %3436 = vmatpush1.msra.mxu0 0.0
        %3437 = vmatprep.subr.mxu0 0.0
        %3438 = vmatpush1.msra.mxu0 0.0
        %3439 = vmatprep.subr.mxu0 0.0
        %3440 = vmatpush1.msra.mxu0 0.0
        %3441 = vmatprep.subr.mxu0 0.0
        %3442 = vmatpush1.msra.mxu0 0.0
        %3443 = vmatprep.subr.mxu0 0.0
        %3444 = vmatpush1.msra.mxu0 0.0
        %3445 = vmatprep.subr.mxu0 0.0
        %3446 = vmatpush1.msra.mxu0 0.0
        %3447 = vmatprep.subr.mxu0 0.0
        %3448 = vmatpush1.msra.mxu0 0.0
        %3449 = vmatprep.subr.mxu0 0.0
        %3450 = vmatpush1.msra.mxu0 0.0
        %3451 = vmatprep.subr.mxu0 0.0
        %3452 = vmatpush1.msra.mxu0 0.0
        %3453 = vmatprep.subr.mxu0 0.0
        %3454 = vmatpush1.msra.mxu0 0.0
        %3455 = vmatprep.subr.mxu0 0.0
        %3456 = vmatpush1.msra.mxu0 0.0
        %3457 = vmatprep.subr.mxu0 0.0
        %3458 = vmatpush1.msra.mxu0 0.0
        %3459 = vmatprep.subr.mxu0 0.0
        %3460 = vmatpush1.msra.mxu0 0.0
        %3461 = vmatprep.subr.mxu0 0.0
        %3462 = vmatpush1.msra.mxu0 0.0
        %3463 = vmatprep.subr.mxu0 0.0
        %3464 = vmatpush1.msra.mxu0 0.0
        %3465 = vmatprep.subr.mxu0 0.0
        %3466 = vmatpush1.msra.mxu0 0.0
        %3467 = vmatprep.subr.mxu0 0.0
        %3468 = vmatpush1.msra.mxu0 0.0
        %3469 = vmatprep.subr.mxu0 0.0
        %3470 = vmatpush1.msra.mxu0 0.0
        %3471 = vmatprep.subr.mxu0 0.0
        %3472 = vmatpush1.msra.mxu0 0.0
        %3473 = vmatprep.subr.mxu0 0.0
        %3474 = vmatpush1.msra.mxu0 0.0
        %3475 = vmatprep.subr.mxu0 0.0
        %3476 = vmatpush1.msra.mxu0 0.0
        %3477 = vmatprep.subr.mxu0 0.0
        %3478 = vmatpush1.msra.mxu0 0.0
        %3479 = vmatprep.subr.mxu0 0.0
        %3480 = vmatpush1.msra.mxu0 0.0
        %3481 = vmatprep.subr.mxu0 0.0
        %3482 = vmatpush1.msra.mxu0 0.0
        %3483 = vmatprep.subr.mxu0 0.0
        %3484 = vmatpush1.msra.mxu0 0.0
        %3485 = vmatprep.subr.mxu0 0.0
        %3486 = vmatpush1.msra.mxu0 0.0
        %3487 = vmatprep.subr.mxu0 0.0
        %3488 = vmatpush1.msra.mxu0 0.0
        %3489 = vmatprep.mubr.f32.mxu0 0.0
        %3490 = vmatmul.mubr.f32.gmra.mrb[0].mxu0 %v3420
        %v3491 = vpop.f32.mrb[0].mxu0
        %v3492 = vadd.f32 %v2929, %v3491
        %v3493 = vpop.f32.mrb[0].mxu0
        %3494 = vmatprep.mubr.f32.mxu0 0.0
        %3495 = vmatmul.mubr.f32.gmra.mrb[0].mxu0 %v3423
        %v3496 = vpop.f32.mrb[0].mxu0
        %v3497 = vadd.f32 %v2930, %v3496
        %v3498 = vpop.f32.mrb[0].mxu0
        %3499 = vdwg.mxu0
        %v3501 = vsel %vm341, %v2819, 0
        %v3504 = vsel %vm341, %v2820, 0
        %3506 = vmatprep.subr.mxu0 0.0
        %3507 = vmatpush1.msra.mxu0 %v1812
        %3508 = vmatprep.subr.mxu0 0.0
        %3509 = vmatpush1.msra.mxu0 %v1814
        %3510 = vmatprep.subr.mxu0 0.0
        %3511 = vmatpush1.msra.mxu0 0.0
        %3512 = vmatprep.subr.mxu0 0.0
        %3513 = vmatpush1.msra.mxu0 0.0
        %3514 = vmatprep.subr.mxu0 0.0
        %3515 = vmatpush1.msra.mxu0 0.0
        %3516 = vmatprep.subr.mxu0 0.0
        %3517 = vmatpush1.msra.mxu0 0.0
        %3518 = vmatprep.subr.mxu0 0.0
        %3519 = vmatpush1.msra.mxu0 0.0
        %3520 = vmatprep.subr.mxu0 0.0
        %3521 = vmatpush1.msra.mxu0 0.0
        %3522 = vmatprep.subr.mxu0 0.0
        %3523 = vmatpush1.msra.mxu0 0.0
        %3524 = vmatprep.subr.mxu0 0.0
        %3525 = vmatpush1.msra.mxu0 0.0
        %3526 = vmatprep.subr.mxu0 0.0
        %3527 = vmatpush1.msra.mxu0 0.0
        %3528 = vmatprep.subr.mxu0 0.0
        %3529 = vmatpush1.msra.mxu0 0.0
        %3530 = vmatprep.subr.mxu0 0.0
        %3531 = vmatpush1.msra.mxu0 0.0
        %3532 = vmatprep.subr.mxu0 0.0
        %3533 = vmatpush1.msra.mxu0 0.0
        %3534 = vmatprep.subr.mxu0 0.0
        %3535 = vmatpush1.msra.mxu0 0.0
        %3536 = vmatprep.subr.mxu0 0.0
        %3537 = vmatpush1.msra.mxu0 0.0
        %3538 = vmatprep.subr.mxu0 0.0
        %3539 = vmatpush1.msra.mxu0 0.0
        %3540 = vmatprep.subr.mxu0 0.0
        %3541 = vmatpush1.msra.mxu0 0.0
        %3542 = vmatprep.subr.mxu0 0.0
        %3543 = vmatpush1.msra.mxu0 0.0
        %3544 = vmatprep.subr.mxu0 0.0
        %3545 = vmatpush1.msra.mxu0 0.0
        %3546 = vmatprep.subr.mxu0 0.0
        %3547 = vmatpush1.msra.mxu0 0.0
        %3548 = vmatprep.subr.mxu0 0.0
        %3549 = vmatpush1.msra.mxu0 0.0
        %3550 = vmatprep.subr.mxu0 0.0
        %3551 = vmatpush1.msra.mxu0 0.0
        %3552 = vmatprep.subr.mxu0 0.0
        %3553 = vmatpush1.msra.mxu0 0.0
        %3554 = vmatprep.subr.mxu0 0.0
        %3555 = vmatpush1.msra.mxu0 0.0
        %3556 = vmatprep.subr.mxu0 0.0
        %3557 = vmatpush1.msra.mxu0 0.0
        %3558 = vmatprep.subr.mxu0 0.0
        %3559 = vmatpush1.msra.mxu0 0.0
        %3560 = vmatprep.subr.mxu0 0.0
        %3561 = vmatpush1.msra.mxu0 0.0
        %3562 = vmatprep.subr.mxu0 0.0
        %3563 = vmatpush1.msra.mxu0 0.0
        %3564 = vmatprep.subr.mxu0 0.0
        %3565 = vmatpush1.msra.mxu0 0.0
        %3566 = vmatprep.subr.mxu0 0.0
        %3567 = vmatpush1.msra.mxu0 0.0
        %3568 = vmatprep.subr.mxu0 0.0
        %3569 = vmatpush1.msra.mxu0 0.0
        %3570 = vmatprep.mubr.f32.mxu0 0.0
        %3571 = vmatmul.mubr.f32.gmra.mrb[0].mxu0 %v3501
        %v3572 = vpop.f32.mrb[0].mxu0
        %v3573 = vadd.f32 %v2931, %v3572
        %v3574 = vpop.f32.mrb[0].mxu0
        %3575 = vmatprep.mubr.f32.mxu0 0.0
        %3576 = vmatmul.mubr.f32.gmra.mrb[0].mxu0 %v3504
        %v3577 = vpop.f32.mrb[0].mxu0
        %v3578 = vadd.f32 %v2932, %v3577
        %v3579 = vpop.f32.mrb[0].mxu0
        %3580 = vdwg.mxu0
        %3583 = vrot.lane.b32.xlu0 %v3087, 8
        %v3584 = vpop.permute.xlu0 %3583
        %3585 = vrot.lane.b32.xlu0 %v3092, 8
        %v3586 = vpop.permute.xlu0 %3585
        %3591 = vrot.lane.b32.xlu0 %v3168, 16
        %v3592 = vpop.permute.xlu0 %3591
        %3593 = vrot.lane.b32.xlu0 %v3173, 16
        %v3594 = vpop.permute.xlu0 %3593
        %3599 = vrot.lane.b32.xlu0 %v3249, 24
        %v3600 = vpop.permute.xlu0 %3599
        %3601 = vrot.lane.b32.xlu0 %v3254, 24
        %v3602 = vpop.permute.xlu0 %3601
        %3607 = vrot.lane.b32.xlu0 %v3330, 32
        %v3608 = vpop.permute.xlu0 %3607
        %3609 = vrot.lane.b32.xlu0 %v3335, 32
        %v3610 = vpop.permute.xlu0 %3609
        %3615 = vrot.lane.b32.xlu0 %v3411, 40
        %v3616 = vpop.permute.xlu0 %3615
        %3617 = vrot.lane.b32.xlu0 %v3416, 40
        %v3618 = vpop.permute.xlu0 %3617
        %3623 = vrot.lane.b32.xlu0 %v3492, 48
        %v3624 = vpop.permute.xlu0 %3623
        %3625 = vrot.lane.b32.xlu0 %v3497, 48
        %v3626 = vpop.permute.xlu0 %3625
        %3631 = vrot.lane.b32.xlu0 %v3573, 56
        %v3632 = vpop.permute.xlu0 %3631
        %3633 = vrot.lane.b32.xlu0 %v3578, 56
        %v3634 = vpop.permute.xlu0 %3633
        %v3637 = vsel %vm577, %v3006, %v3584
        %v3638 = vsel %vm577, %v3011, %v3586
        %v3639 = vsel %vm341, %v3637, %v3592
        %v3640 = vsel %vm341, %v3638, %v3594
        %v3641 = vsel %vm1442, %v3639, %v3600
        %v3642 = vsel %vm1442, %v3640, %v3602
        %v3643 = vsel %vm1456, %v3641, %v3608
        %v3644 = vsel %vm1456, %v3642, %v3610
        %vm3645 = vcmask 326656
        %v3646 = vsel %vm3645, %v3643, %v3616
        %v3647 = vsel %vm3645, %v3644, %v3618
        %vm3648 = vcmask 392192
        %v3649 = vsel %vm3648, %v3646, %v3624
        %v3650 = vsel %vm3648, %v3647, %v3626
        %vm3651 = vcmask 457728
        %v3652 = vsel %vm3651, %v3649, %v3632
        %v3653 = vsel %vm3651, %v3650, %v3634
        %3656 = vrot.lane.b32.xlu0 %v1705, 64
        %v3657 = vpop.permute.xlu0 %3656
        %3658 = vrot.lane.b32.xlu0 %v1706, 64
        %v3659 = vpop.permute.xlu0 %3658
        %v3662 = vadd.f32 %v3652, %v3657
        %v3663 = vadd.f32 %v3653, %v3659
        %v3664 = vld [vmem:[#allocation10] sm:$0xff]
        %vm3665 = vcmask 523264
        %v3666 = vsel %vm3665, %v3662, 0.0
        %v3667 = vsel %vm3665, %v3663, 0.0
        %v3668 = vadd.f32 %v3666, %v3667
        %v3669 = vrot.slane %v3668, 4
        %v3670 = vadd.f32 %v3668, %v3669
        %v3671 = vrot.slane %v3670, 2
        %v3672 = vadd.f32 %v3670, %v3671
        %v3673 = vrot.slane %v3672, 1
        %v3674 = vadd.f32 %v3672, %v3673
        %v3675 = vmul.f32 %v3674, %v1466
        %v3676 = vmul.f32 %v3664, %v3675
        %v3677 = vlaneseq
        %v3678 = vshrl.u32 %v3677, 7
        %v3679 = vsub.s32 7, %v3678
        %v3680 = vrot.slane %v3676, %v3679
        %v3681 = vsub.f32 %v3662, %v3680
        %v3682 = vsub.f32 %v3663, %v3680
        %v3683 = vmul.f32 %v3681, %v3681
        %v3684 = vmul.f32 %v3682, %v3682
        %v3685 = vsel %vm3665, %v3683, 0.0
        %v3686 = vsel %vm3665, %v3684, 0.0
        %v3687 = vadd.f32 %v3685, %v3686
        %v3688 = vrot.slane %v3687, 4
        %v3689 = vadd.f32 %v3687, %v3688
        %v3690 = vrot.slane %v3689, 2
        %v3691 = vadd.f32 %v3689, %v3690
        %v3692 = vrot.slane %v3691, 1
        %v3693 = vadd.f32 %v3691, %v3692
        %v3694 = vmul.f32 %v3693, %v1466
        %v3695 = vlaneseq
        %v3696 = vshrl.u32 %v3695, 7
        %v3697 = vsub.s32 5, %v3696
        %v3698 = vrot.slane %v3664, %v3697
        %v3699 = vmul.f32 %v3698, %v3681
        %v3700 = vmul.f32 %v3698, %v3682
        %v3701 = vadd.f32 %v3694, 1e-05
        %v3702 = vrsqrt.pop %v3701
        %v3703 = vmul.f32 %v3699, %v3702
        %v3704 = vmul.f32 %v3700, %v3702
        %v3705 = vlaneseq
        %v3706 = vshrl.u32 %v3705, 7
        %v3707 = vsub.s32 6, %v3706
        %v3708 = vrot.slane %v3664, %v3707
        %v3709 = vadd.f32 %v3703, %v3708
        %v3710 = vadd.f32 %v3704, %v3708
        %v3711 = vmul.f32 %v3709, %v3709
        %v3712 = vmul.f32 %v3710, %v3710
        %v3713 = vsel %vm3665, %v3711, 0.0
        %3714 = vadd.xlane.f32.xlu0 %v3713
        %v3715 = vpop.xlane.xlu0 %3714
        %v3716 = vsel %vm3665, %v3712, 0.0
        %3717 = vadd.xlane.f32.xlu0 %v3716
        %v3718 = vpop.xlane.xlu0 %3717
        %v3719 = vadd.f32 %v3715, 1e-12
        %v3720 = vadd.f32 %v3718, 1e-12
        %v3721 = vrsqrt.pop %v3719
        %v3722 = vrsqrt.pop %v3720
        %v3723 = vmul.f32 %v3709, %v3721
        %v3724 = vmul.f32 %v3710, %v3722
        %3725 = vst.msk [vmem:[%s300] sm:$0xff] %vm3665, %v3723
        %3726 = vst.msk [vmem:[%s300 + $0x8] sm:$0xff] %vm3665, %v3724
        %s3727 = sand.u32 %s142, 1
        %s3728 = scalar_lea.sflag [#allocation4], %s3727
        %s3729 = sand.u32 %s142, 1
        %s3730 = smul.addr %s3729, 16
        %s3731 = scalar_lea.vmem [#allocation11], %s3730
        // Predicated region
        $region61: #{tpu_custom_call.1} parent=39 // pred_check
          %p3732 = pneg %p152
        $region62: #{tpu_custom_call.1} parent=39 // pred_check_branch
          %3734 = sbr.rel (%p3732) target = $region64
        $region63: #{tpu_custom_call.1} parent=39 // pred_region
          %s3736 = ssub.s32 256, 256
          %3737 = vsyncadd %s3728, %s3736
          %s3738 = smul.addr %s24, 2
          %s3739 = smul.addr %s3738, 128
          %s3740 = scalar_lea.hbm %s5, %s3739
          %s3741 = sshll.u32 %s3731, 4
          %s3742 = int_to_ptr.vmem [resolvable:$true] %s3741
          %3747 = dma.vmem_to_hbm [thread:$0]  %s3742, 256, %s3740, %s3728, 128, 128, 8
        $region64: #{tpu_custom_call.1} parent=39 // pred_fallthru
          _
      $region40: #{tpu_custom_call.1} parent=5 // pred_fallthru
        _
      %p3748 = scmp.le.s32.totalorder 2, %s19
      // Predicated region
      $region65: #{tpu_custom_call.1} parent=5 // pred_check
        %p3749 = pneg %p3748
      $region66: #{tpu_custom_call.1} parent=5 // pred_check_branch
        %3751 = sbr.rel (%p3749) target = $region68
      $region67: #{tpu_custom_call.1} parent=5 // pred_region
        %s3752 = ssub.s32 %s19, 2
        // Predicated region
        $region69: #{tpu_custom_call.1} parent=67 // pred_check
          %p3753 = pneg %p158
        $region70: #{tpu_custom_call.1} parent=67 // pred_check_branch
          %3755 = sbr.rel (%p3753) target = $region72
        $region71: #{tpu_custom_call.1} parent=67 // pred_region
          %s3756 = sand.u32 %s143, 1
          %s3757 = scalar_lea.sflag [#allocation4], %s3756
          %s3758 = sand.u32 %s143, 1
          %s3759 = smul.addr %s3758, 16
          %s3760 = scalar_lea.vmem [#allocation11], %s3759
          %3761 = dma.done %s3757, 256
        $region72: #{tpu_custom_call.1} parent=67 // pred_fallthru
          _
      $region68: #{tpu_custom_call.1} parent=5 // pred_fallthru
        _
    $region6: #{tpu_custom_call.1} parent=1 // loop_footer
      %s23 = sadd.s32 1, %s19
    $region7: #{tpu_custom_call.1} parent=1 // loop_footer_branch
      %18 = sbr.rel target = $region3
    $region8: #{tpu_custom_call.1} parent=1 // loop_exit
      _
    %3762 = vsyncpa [#allocation3], 1
    %s3763 = scalar_lea.sflag [#allocation3], 1
    %3764 = vsyncpa %s3763, 1
    %3765 = vsyncpa [#allocation6], 1
    %3766 = vsyncpa [#allocation9], 1
    %3767 = vsyncpa [#allocation4], 1
    %s3768 = scalar_lea.sflag [#allocation4], 1
    %3769 = vsyncpa %s3768, 1

</llo_original>
